<compile_context>
chip_gen: v7x
topology: tpu7x:2x2x1
jax: 0.10.0
libtpu: 0.0.40
codegen_flags: <defaults>
</compile_context>

<pallas_src>
import functools

import jax
import jax.numpy as jnp
from jax.experimental import pallas as pl
from jax.experimental.pallas import tpu as pltpu

BN_EPS = 1e-5
LRELU_SLOPE = 0.2
KSIZE = 4
VMEM_LIMIT = 48 * 1024 * 1024          # <= v7x physical 64 MiB; fine on v5e/v6e
TILE_VMEM_BUDGET = 8 * 1024 * 1024     # target double-buffered tile footprint
MAX_ROW_TILE = 2048


def _round_up(x, m):
    return ((x + m - 1) // m) * m


def _cdiv(a, b):
    return -(-a // b)


def _row_tiling(rp, kfeat_p, cop):
    """Tiling over the packed row dim: multiples of 16 (bf16 sublanes),
    adaptive to a VMEM budget, and >= 2 tiles when possible (v7x megacore)."""
    per_row = 2 * 2 * (kfeat_p + cop)            # double-buffered bf16 in + out
    max_tr = max(16, min(MAX_ROW_TILE, (TILE_VMEM_BUDGET // per_row) // 16 * 16))
    rp16 = _round_up(rp, 16)
    tr = min(max_tr, rp16)
    if rp16 >= 32:                               # keep both v7x TensorCores busy
        tr = min(tr, _round_up(_cdiv(rp, 2), 16))
    nt = _cdiv(rp, tr)
    return tr, nt, nt * tr


# ----------------------------------------------------------------------------
# Pallas kernels
# ----------------------------------------------------------------------------
def _conv_bias_act_kernel(p_ref, w_ref, b_ref, o_ref, *, activation):
    # p_ref: (TR, Kfeat_p) bf16, w_ref: (Kfeat_p, Cop) bf16, b_ref: (1, Cop) f32
    x = jnp.dot(p_ref[...], w_ref[...], preferred_element_type=jnp.float32)
    x = x + b_ref[...]
    if activation == "lrelu":
        x = jnp.where(x >= 0, x, LRELU_SLOPE * x)
    else:  # "sigmoid"
        x = jax.nn.sigmoid(x)
    o_ref[...] = x.astype(o_ref.dtype)


def _conv_stats_kernel(p_ref, w_ref, conv_ref, stats_ref):
    # Conv GEMM (f32 accumulate, bf16 store) + per-tile f32 sum / sum-of-squares
    # for cross-tile BatchNorm statistics.
    x = jnp.dot(p_ref[...], w_ref[...], preferred_element_type=jnp.float32)
    conv_ref[...] = x.astype(conv_ref.dtype)
    s = jnp.sum(x, axis=0, keepdims=True)        # (1, Cop)
    sq = jnp.sum(x * x, axis=0, keepdims=True)   # (1, Cop)
    stats_ref[0] = jnp.concatenate([s, sq], axis=0)   # (2, Cop)


# ----------------------------------------------------------------------------
# Glue: NHWC im2col (pure slicing / concat, no compute; XLA fuses the previous
# layer's BN scale/shift + LeakyReLU into this)
# ----------------------------------------------------------------------------
def _im2col_nhwc(x, k, stride, pad):
    # x: (N, H, W, C) -> (N*Ho*Wo, k*k*C), feature order (kh, kw, ci).
    n, h, w, c = x.shape
    xp = jnp.pad(x, ((0, 0), (pad, pad), (pad, pad), (0, 0)))
    hp, wp = h + 2 * pad, w + 2 * pad
    ho = (hp - k) // stride + 1
    wo = (wp - k) // stride + 1
    cols = []
    for kh in range(k):
        for kw in range(k):
            cols.append(xp[:, kh:kh + stride * ho:stride,
                            kw:kw + stride * wo:stride, :])
    patches = jnp.concatenate(cols, axis=-1)          # (N, Ho, Wo, k*k*C)
    return patches.reshape(n * ho * wo, k * k * c), ho, wo


# ----------------------------------------------------------------------------
# One conv block (conv + [BN] + activation), NHWC in / NHWC out
# ----------------------------------------------------------------------------
def _conv_layer_nhwc(h, layer):
    n = h.shape[0]
    co = layer["co"]
    k = layer["pack"]
    kfeat_p, cop = layer["w_mat"].shape

    patches, ho, wo = _im2col_nhwc(h, KSIZE, layer["stride"], layer["pad"])
    r = n * ho * wo
    rp = _cdiv(r, k)
    tr, nt, rp_pad = _row_tiling(rp, kfeat_p, cop)

    # Zero row padding contributes 0 to the GEMM output (no bias in the BN
    # path), so it does not perturb the BN sum / sumsq statistics.
    patches = jnp.pad(patches.astype(jnp.bfloat16), ((0, rp_pad * k - r), (0, 0)))
    # Channel packing: group k consecutive patch rows per GEMM row; the
    # block-diagonal weight routes group g to output columns [g*co, (g+1)*co).
    patches = patches.reshape(rp_pad, kfeat_p)

    cparams = pltpu.CompilerParams(
        dimension_semantics=("parallel",),
        vmem_limit_bytes=VMEM_LIMIT)

    p_spec = pl.BlockSpec((tr, kfeat_p), lambda i: (i, 0))
    w_spec = pl.BlockSpec((kfeat_p, cop), lambda i: (0, 0))
    vec_spec = pl.BlockSpec((1, cop), lambda i: (0, 0))
    o_spec = pl.BlockSpec((tr, cop), lambda i: (i, 0))

    if layer["use_bn"]:
        conv, stats = pl.pallas_call(
            _conv_stats_kernel,
            grid=(nt,),
            in_specs=[p_spec, w_spec],
            out_specs=(o_spec, pl.BlockSpec((1, 2, cop), lambda i: (i, 0, 0))),
            out_shape=(jax.ShapeDtypeStruct((rp_pad, cop), jnp.bfloat16),
                       jax.ShapeDtypeStruct((nt, 2, cop), jnp.float32)),
            compiler_params=cparams,
        )(patches, layer["w_mat"])

        # Fold global batch statistics (f32) into one scale/shift per channel.
        tot = jnp.sum(stats, axis=0)                       # (2, Cop)
        if k > 1:
            tot = tot.reshape(2, k, co).sum(axis=1)        # (2, co)
        else:
            tot = tot[:, :co]
        mean = tot[0] / r
        var = jnp.maximum(tot[1] / r - mean * mean, 0.0)   # biased var (PyTorch BN)
        scale = layer["gamma"] * jax.lax.rsqrt(var + BN_EPS)
        shift = layer["beta"] - mean * scale
    else:
        conv = pl.pallas_call(
            functools.partial(_conv_bias_act_kernel, activation=layer["act"]),
            grid=(nt,),
            in_specs=[p_spec, w_spec, vec_spec],
            out_specs=o_spec,
            out_shape=jax.ShapeDtypeStruct((rp_pad, cop), jnp.bfloat16),
            compiler_params=cparams,
        )(patches, layer["w_mat"], layer["bias"])
        scale = shift = None

    # Unpack channel groups, drop row / channel padding, back to NHWC.
    if k > 1:
        out = conv.reshape(rp_pad * k, co)[:r]
    else:
        out = conv[:r, :co]
    out = out.reshape(n, ho, wo, co)

    if layer["use_bn"]:
        # Folded BatchNorm + LeakyReLU in plain JAX: XLA fuses this with the
        # next layer's pad/slice/concat im2col (no extra HBM round trip).
        y = out.astype(jnp.float32) * scale + shift
        out = jnp.where(y >= 0, y, LRELU_SLOPE * y).astype(jnp.bfloat16)
    return out


# ----------------------------------------------------------------------------
# Parameter init (PyTorch-like uniform(-1/sqrt(fan_in), +1/sqrt(fan_in)));
# weights are reshaped / block-diag packed / lane-padded once here.
# ----------------------------------------------------------------------------
def init_discriminator_params(key, channels_img, features_d):
    specs = [
        # (c_in,            c_out,           use_bn, pad, activation)
        (channels_img,      features_d,      False,  1,   "lrelu"),
        (features_d,        features_d * 2,  True,   1,   "lrelu"),
        (features_d * 2,    features_d * 4,  True,   1,   "lrelu"),
        (features_d * 4,    features_d * 8,  True,   1,   "lrelu"),
        (features_d * 8,    1,               False,  0,   "sigmoid"),
    ]
    layers = []
    for c_in, c_out, use_bn, padding, act in specs:
        key, kw_, kb_ = jax.random.split(key, 3)
        fan_in = c_in * KSIZE * KSIZE
        bound = 1.0 / float(fan_in) ** 0.5
        w = jax.random.uniform(kw_, (c_out, c_in, KSIZE, KSIZE),
                               jnp.float32, -bound, bound)
        b = jax.random.uniform(kb_, (c_out,), jnp.float32, -bound, bound)

        kfeat = c_in * KSIZE * KSIZE
        # (Co, Ci, KH, KW) -> (KH, KW, Ci, Co) -> (KH*KW*Ci, Co)
        w_mat = jnp.transpose(w, (2, 3, 1, 0)).reshape(kfeat, c_out)

        # Channel packing factor: fold k = 128 // c_out output rows into the
        # lane dim (dense 128-lane HBM tiles, no junk-lane traffic).
        if 1 < c_out < 128 and 128 % c_out == 0:
            k = 128 // c_out
            w_mat = jnp.kron(jnp.eye(k, dtype=jnp.float32), w_mat)  # block-diag
            cop = 128
        else:
            k = 1
            cop = _round_up(c_out, 128)
            w_mat = jnp.pad(w_mat, ((0, 0), (0, cop - c_out)))
        w_mat = w_mat.astype(jnp.bfloat16)

        if use_bn:
            # Conv bias is exactly cancelled by the BN mean subtraction.
            bias = jnp.zeros((1, cop), jnp.float32)
        else:
            bias = jnp.tile(b, k) if k > 1 else jnp.pad(b, (0, cop - c_out))
            bias = bias.reshape(1, cop)

        layers.append(dict(w_mat=w_mat, bias=bias,
                           gamma=jnp.ones((c_out,), jnp.float32),
                           beta=jnp.zeros((c_out,), jnp.float32),
                           use_bn=use_bn, co=c_out, pack=k,
                           pad=padding, act=act, stride=2))
    return layers


def discriminator_forward(x_nchw, params):
    h = jnp.transpose(x_nchw, (0, 2, 3, 1)).astype(jnp.bfloat16)  # one transpose
    for layer in params:
        h = _conv_layer_nhwc(h, layer)
    return jnp.transpose(h, (0, 3, 1, 2)).astype(jnp.float32)     # (N, 1, 1, 1)


if __name__ == "__main__":
    key = jax.random.PRNGKey(0)
    kx, kp = jax.random.split(key)

    # DCGAN discriminator needs 64x64 input for the final 4x4/stride-2/pad-0
    # conv to produce a 1x1 map.  Keep channels/features small.
    batch, channels_img, features_d = 2, 3, 8
    x = jax.random.normal(kx, (batch, channels_img, 64, 64), jnp.float32)

    params = init_discriminator_params(kp, channels_img, features_d)
    fwd = jax.jit(lambda xx: discriminator_forward(xx, params))
    out = jax.block_until_ready(fwd(x))

    assert out.shape == (batch, 1, 1, 1), out.shape
    assert bool(jnp.all(jnp.isfinite(out)))
    assert bool(jnp.all((out >= 0.0) & (out <= 1.0)))
    print("KERNEL_OK")
</pallas_src>

<mosaic_0001>
module attributes {stable_mosaic.version = 11 : i64} {
  func.func @_conv_bias_act_kernel(%arg0: i32, %arg1: memref<64x768xbf16, #tpu.memory_space<vmem>>, %arg2: memref<768x128xbf16, #tpu.memory_space<vmem>>, %arg3: memref<1x128xf32, #tpu.memory_space<vmem>>, %arg4: memref<64x128xbf16, #tpu.memory_space<vmem>>) attributes {dimension_semantics = [#tpu.dimension_semantics<parallel>], iteration_bounds = array<i64: 2>, scalar_prefetch = 0 : i64, scratch_operands = 0 : i64, tpu.core_type = #tpu.core_type<tc>, window_params = [{transform_indices = @transform_0, window_bounds = array<i64: 64, 768>}, {pipeline_mode = #tpu.pipeline_mode<synchronous>, transform_indices = @transform_1, window_bounds = array<i64: 768, 128>}, {pipeline_mode = #tpu.pipeline_mode<synchronous>, transform_indices = @transform_2, window_bounds = array<i64: 1, 128>}, {transform_indices = @transform_3, window_bounds = array<i64: 64, 128>}]} {
    %c0 = arith.constant 0 : index
    %c0_0 = arith.constant 0 : index
    %0 = vector.load %arg1[%c0, %c0_0] : memref<64x768xbf16, #tpu.memory_space<vmem>>, vector<64x768xbf16>
    %c0_1 = arith.constant 0 : index
    %c0_2 = arith.constant 0 : index
    %1 = vector.load %arg2[%c0_1, %c0_2] : memref<768x128xbf16, #tpu.memory_space<vmem>>, vector<768x128xbf16>
    %cst = arith.constant dense<0.000000e+00> : vector<64x128xf32>
    %2 = tpu.matmul %0, %1, %cst {dimension_numbers = #tpu.dot_dimension_numbers<[1], [0], [0], [1], [0, 0, 1, 1], [], []>} : vector<64x768xbf16>, vector<768x128xbf16>, vector<64x128xf32> -> vector<64x128xf32>
    %c0_3 = arith.constant 0 : index
    %c0_4 = arith.constant 0 : index
    %3 = vector.load %arg3[%c0_3, %c0_4] : memref<1x128xf32, #tpu.memory_space<vmem>>, vector<1x128xf32>
    %4 = vector.broadcast %3 : vector<1x128xf32> to vector<64x128xf32>
    %5 = arith.addf %2, %4 : vector<64x128xf32>
    %cst_5 = arith.constant 0.000000e+00 : f32
    %6 = vector.broadcast %cst_5 : f32 to vector<64x128xf32>
    %7 = arith.cmpf oge, %5, %6 : vector<64x128xf32>
    %cst_6 = arith.constant 2.000000e-01 : f32
    %8 = vector.broadcast %cst_6 : f32 to vector<64x128xf32>
    %9 = arith.mulf %8, %5 : vector<64x128xf32>
    %10 = arith.select %7, %5, %9 : vector<64x128xi1>, vector<64x128xf32>
    %11 = arith.truncf %10 : vector<64x128xf32> to vector<64x128xbf16>
    %c0_7 = arith.constant 0 : index
    %c0_8 = arith.constant 0 : index
    %12 = vector.load %arg4[%c0_7, %c0_8] : memref<64x128xbf16, #tpu.memory_space<vmem>>, vector<64x128xbf16>
    tpu.vector_store %arg4[%c0_7, %c0_8], %11 {strides = array<i32>} : memref<64x128xbf16, #tpu.memory_space<vmem>>, vector<64x128xbf16>,
    return
  }
  func.func @transform_0(%arg0: i32) -> (i32, i32) {
    %c0_i32 = arith.constant 0 : i32
    %c0_i32_0 = arith.constant 0 : i32
    return %arg0, %c0_i32 : i32, i32
  }
  func.func @transform_1(%arg0: i32) -> (i32, i32) {
    %c0_i32 = arith.constant 0 : i32
    %c0_i32_0 = arith.constant 0 : i32
    %c0_i32_1 = arith.constant 0 : i32
    return %c0_i32, %c0_i32_0 : i32, i32
  }
  func.func @transform_2(%arg0: i32) -> (i32, i32) {
    %c0_i32 = arith.constant 0 : i32
    %c0_i32_0 = arith.constant 0 : i32
    %c0_i32_1 = arith.constant 0 : i32
    return %c0_i32, %c0_i32_0 : i32, i32
  }
  func.func @transform_3(%arg0: i32) -> (i32, i32) {
    %c0_i32 = arith.constant 0 : i32
    %c0_i32_0 = arith.constant 0 : i32
    return %arg0, %c0_i32 : i32, i32
  }
}

module attributes {stable_mosaic.version = 11 : i64} {
  func.func @_conv_stats_kernel(%arg0: i32, %arg1: memref<32x1024xbf16, #tpu.memory_space<vmem>>, %arg2: memref<1024x128xbf16, #tpu.memory_space<vmem>>, %arg3: memref<32x128xbf16, #tpu.memory_space<vmem>>, %arg4: memref<1x2x128xf32, #tpu.memory_space<vmem>>) attributes {dimension_semantics = [#tpu.dimension_semantics<parallel>], iteration_bounds = array<i64: 2>, scalar_prefetch = 0 : i64, scratch_operands = 0 : i64, tpu.core_type = #tpu.core_type<tc>, window_params = [{transform_indices = @transform_0, window_bounds = array<i64: 32, 1024>}, {pipeline_mode = #tpu.pipeline_mode<synchronous>, transform_indices = @transform_1, window_bounds = array<i64: 1024, 128>}, {transform_indices = @transform_2, window_bounds = array<i64: 32, 128>}, {transform_indices = @transform_3, window_bounds = array<i64: 1, 2, 128>}]} {
    %c0 = arith.constant 0 : index
    %c0_0 = arith.constant 0 : index
    %0 = vector.load %arg1[%c0, %c0_0] : memref<32x1024xbf16, #tpu.memory_space<vmem>>, vector<32x1024xbf16>
    %c0_1 = arith.constant 0 : index
    %c0_2 = arith.constant 0 : index
    %1 = vector.load %arg2[%c0_1, %c0_2] : memref<1024x128xbf16, #tpu.memory_space<vmem>>, vector<1024x128xbf16>
    %cst = arith.constant dense<0.000000e+00> : vector<32x128xf32>
    %2 = tpu.matmul %0, %1, %cst {dimension_numbers = #tpu.dot_dimension_numbers<[1], [0], [0], [1], [0, 0, 1, 1], [], []>} : vector<32x1024xbf16>, vector<1024x128xbf16>, vector<32x128xf32> -> vector<32x128xf32>
    %3 = arith.truncf %2 : vector<32x128xf32> to vector<32x128xbf16>
    %c0_3 = arith.constant 0 : index
    %c0_4 = arith.constant 0 : index
    %4 = vector.load %arg3[%c0_3, %c0_4] : memref<32x128xbf16, #tpu.memory_space<vmem>>, vector<32x128xbf16>
    tpu.vector_store %arg3[%c0_3, %c0_4], %3 {strides = array<i32>} : memref<32x128xbf16, #tpu.memory_space<vmem>>, vector<32x128xbf16>,
    %cst_5 = arith.constant dense<0.000000e+00> : vector<128xf32>
    %5 = vector.multi_reduction <add>, %2, %cst_5 [0] : vector<32x128xf32> to vector<128xf32>
    %6 = vector.shape_cast %5 : vector<128xf32> to vector<1x128xf32>
    %7 = arith.mulf %2, %2 : vector<32x128xf32>
    %cst_6 = arith.constant dense<0.000000e+00> : vector<128xf32>
    %8 = vector.multi_reduction <add>, %7, %cst_6 [0] : vector<32x128xf32> to vector<128xf32>
    %9 = vector.shape_cast %8 : vector<128xf32> to vector<1x128xf32>
    %10 = tpu.concatenate %6, %9 in 0 : vector<1x128xf32>, vector<1x128xf32> -> vector<2x128xf32>
    %c0_7 = arith.constant 0 : index
    %c0_8 = arith.constant 0 : index
    %c0_9 = arith.constant 0 : index
    %11 = vector.load %arg4[%c0_7, %c0_8, %c0_9] : memref<1x2x128xf32, #tpu.memory_space<vmem>>, vector<1x2x128xf32>
    %12 = vector.shape_cast %11 : vector<1x2x128xf32> to vector<2x128xf32>
    %13 = vector.shape_cast %10 : vector<2x128xf32> to vector<1x2x128xf32>
    tpu.vector_store %arg4[%c0_7, %c0_8, %c0_9], %13 {strides = array<i32>} : memref<1x2x128xf32, #tpu.memory_space<vmem>>, vector<1x2x128xf32>,
    return
  }
  func.func @transform_0(%arg0: i32) -> (i32, i32) {
    %c0_i32 = arith.constant 0 : i32
    %c0_i32_0 = arith.constant 0 : i32
    return %arg0, %c0_i32 : i32, i32
  }
  func.func @transform_1(%arg0: i32) -> (i32, i32) {
    %c0_i32 = arith.constant 0 : i32
    %c0_i32_0 = arith.constant 0 : i32
    %c0_i32_1 = arith.constant 0 : i32
    return %c0_i32, %c0_i32_0 : i32, i32
  }
  func.func @transform_2(%arg0: i32) -> (i32, i32) {
    %c0_i32 = arith.constant 0 : i32
    %c0_i32_0 = arith.constant 0 : i32
    return %arg0, %c0_i32 : i32, i32
  }
  func.func @transform_3(%arg0: i32) -> (i32, i32, i32) {
    %c0_i32 = arith.constant 0 : i32
    %c0_i32_0 = arith.constant 0 : i32
    %c0_i32_1 = arith.constant 0 : i32
    return %arg0, %c0_i32, %c0_i32_0 : i32, i32, i32
  }
}

module attributes {stable_mosaic.version = 11 : i64} {
  func.func @_conv_stats_kernel(%arg0: i32, %arg1: memref<16x1024xbf16, #tpu.memory_space<vmem>>, %arg2: memref<1024x128xbf16, #tpu.memory_space<vmem>>, %arg3: memref<16x128xbf16, #tpu.memory_space<vmem>>, %arg4: memref<1x2x128xf32, #tpu.memory_space<vmem>>) attributes {dimension_semantics = [#tpu.dimension_semantics<parallel>], iteration_bounds = array<i64: 2>, scalar_prefetch = 0 : i64, scratch_operands = 0 : i64, tpu.core_type = #tpu.core_type<tc>, window_params = [{transform_indices = @transform_0, window_bounds = array<i64: 16, 1024>}, {pipeline_mode = #tpu.pipeline_mode<synchronous>, transform_indices = @transform_1, window_bounds = array<i64: 1024, 128>}, {transform_indices = @transform_2, window_bounds = array<i64: 16, 128>}, {transform_indices = @transform_3, window_bounds = array<i64: 1, 2, 128>}]} {
    %c0 = arith.constant 0 : index
    %c0_0 = arith.constant 0 : index
    %0 = vector.load %arg1[%c0, %c0_0] : memref<16x1024xbf16, #tpu.memory_space<vmem>>, vector<16x1024xbf16>
    %c0_1 = arith.constant 0 : index
    %c0_2 = arith.constant 0 : index
    %1 = vector.load %arg2[%c0_1, %c0_2] : memref<1024x128xbf16, #tpu.memory_space<vmem>>, vector<1024x128xbf16>
    %cst = arith.constant dense<0.000000e+00> : vector<16x128xf32>
    %2 = tpu.matmul %0, %1, %cst {dimension_numbers = #tpu.dot_dimension_numbers<[1], [0], [0], [1], [0, 0, 1, 1], [], []>} : vector<16x1024xbf16>, vector<1024x128xbf16>, vector<16x128xf32> -> vector<16x128xf32>
    %3 = arith.truncf %2 : vector<16x128xf32> to vector<16x128xbf16>
    %c0_3 = arith.constant 0 : index
    %c0_4 = arith.constant 0 : index
    %4 = vector.load %arg3[%c0_3, %c0_4] : memref<16x128xbf16, #tpu.memory_space<vmem>>, vector<16x128xbf16>
    tpu.vector_store %arg3[%c0_3, %c0_4], %3 {strides = array<i32>} : memref<16x128xbf16, #tpu.memory_space<vmem>>, vector<16x128xbf16>,
    %cst_5 = arith.constant dense<0.000000e+00> : vector<128xf32>
    %5 = vector.multi_reduction <add>, %2, %cst_5 [0] : vector<16x128xf32> to vector<128xf32>
    %6 = vector.shape_cast %5 : vector<128xf32> to vector<1x128xf32>
    %7 = arith.mulf %2, %2 : vector<16x128xf32>
    %cst_6 = arith.constant dense<0.000000e+00> : vector<128xf32>
    %8 = vector.multi_reduction <add>, %7, %cst_6 [0] : vector<16x128xf32> to vector<128xf32>
    %9 = vector.shape_cast %8 : vector<128xf32> to vector<1x128xf32>
    %10 = tpu.concatenate %6, %9 in 0 : vector<1x128xf32>, vector<1x128xf32> -> vector<2x128xf32>
    %c0_7 = arith.constant 0 : index
    %c0_8 = arith.constant 0 : index
    %c0_9 = arith.constant 0 : index
    %11 = vector.load %arg4[%c0_7, %c0_8, %c0_9] : memref<1x2x128xf32, #tpu.memory_space<vmem>>, vector<1x2x128xf32>
    %12 = vector.shape_cast %11 : vector<1x2x128xf32> to vector<2x128xf32>
    %13 = vector.shape_cast %10 : vector<2x128xf32> to vector<1x2x128xf32>
    tpu.vector_store %arg4[%c0_7, %c0_8, %c0_9], %13 {strides = array<i32>} : memref<1x2x128xf32, #tpu.memory_space<vmem>>, vector<1x2x128xf32>,
    return
  }
  func.func @transform_0(%arg0: i32) -> (i32, i32) {
    %c0_i32 = arith.constant 0 : i32
    %c0_i32_0 = arith.constant 0 : i32
    return %arg0, %c0_i32 : i32, i32
  }
  func.func @transform_1(%arg0: i32) -> (i32, i32) {
    %c0_i32 = arith.constant 0 : i32
    %c0_i32_0 = arith.constant 0 : i32
    %c0_i32_1 = arith.constant 0 : i32
    return %c0_i32, %c0_i32_0 : i32, i32
  }
  func.func @transform_2(%arg0: i32) -> (i32, i32) {
    %c0_i32 = arith.constant 0 : i32
    %c0_i32_0 = arith.constant 0 : i32
    return %arg0, %c0_i32 : i32, i32
  }
  func.func @transform_3(%arg0: i32) -> (i32, i32, i32) {
    %c0_i32 = arith.constant 0 : i32
    %c0_i32_0 = arith.constant 0 : i32
    %c0_i32_1 = arith.constant 0 : i32
    return %arg0, %c0_i32, %c0_i32_0 : i32, i32, i32
  }
}

module attributes {stable_mosaic.version = 11 : i64} {
  func.func @_conv_stats_kernel(%arg0: i32, %arg1: memref<16x1024xbf16, #tpu.memory_space<vmem>>, %arg2: memref<1024x128xbf16, #tpu.memory_space<vmem>>, %arg3: memref<16x128xbf16, #tpu.memory_space<vmem>>, %arg4: memref<1x2x128xf32, #tpu.memory_space<vmem>>) attributes {dimension_semantics = [#tpu.dimension_semantics<parallel>], iteration_bounds = array<i64: 1>, scalar_prefetch = 0 : i64, scratch_operands = 0 : i64, tpu.core_type = #tpu.core_type<tc>, window_params = [{transform_indices = @transform_0, window_bounds = array<i64: 16, 1024>}, {pipeline_mode = #tpu.pipeline_mode<synchronous>, transform_indices = @transform_1, window_bounds = array<i64: 1024, 128>}, {transform_indices = @transform_2, window_bounds = array<i64: 16, 128>}, {transform_indices = @transform_3, window_bounds = array<i64: 1, 2, 128>}]} {
    %c0 = arith.constant 0 : index
    %c0_0 = arith.constant 0 : index
    %0 = vector.load %arg1[%c0, %c0_0] : memref<16x1024xbf16, #tpu.memory_space<vmem>>, vector<16x1024xbf16>
    %c0_1 = arith.constant 0 : index
    %c0_2 = arith.constant 0 : index
    %1 = vector.load %arg2[%c0_1, %c0_2] : memref<1024x128xbf16, #tpu.memory_space<vmem>>, vector<1024x128xbf16>
    %cst = arith.constant dense<0.000000e+00> : vector<16x128xf32>
    %2 = tpu.matmul %0, %1, %cst {dimension_numbers = #tpu.dot_dimension_numbers<[1], [0], [0], [1], [0, 0, 1, 1], [], []>} : vector<16x1024xbf16>, vector<1024x128xbf16>, vector<16x128xf32> -> vector<16x128xf32>
    %3 = arith.truncf %2 : vector<16x128xf32> to vector<16x128xbf16>
    %c0_3 = arith.constant 0 : index
    %c0_4 = arith.constant 0 : index
    %4 = vector.load %arg3[%c0_3, %c0_4] : memref<16x128xbf16, #tpu.memory_space<vmem>>, vector<16x128xbf16>
    tpu.vector_store %arg3[%c0_3, %c0_4], %3 {strides = array<i32>} : memref<16x128xbf16, #tpu.memory_space<vmem>>, vector<16x128xbf16>,
    %cst_5 = arith.constant dense<0.000000e+00> : vector<128xf32>
    %5 = vector.multi_reduction <add>, %2, %cst_5 [0] : vector<16x128xf32> to vector<128xf32>
    %6 = vector.shape_cast %5 : vector<128xf32> to vector<1x128xf32>
    %7 = arith.mulf %2, %2 : vector<16x128xf32>
    %cst_6 = arith.constant dense<0.000000e+00> : vector<128xf32>
    %8 = vector.multi_reduction <add>, %7, %cst_6 [0] : vector<16x128xf32> to vector<128xf32>
    %9 = vector.shape_cast %8 : vector<128xf32> to vector<1x128xf32>
    %10 = tpu.concatenate %6, %9 in 0 : vector<1x128xf32>, vector<1x128xf32> -> vector<2x128xf32>
    %c0_7 = arith.constant 0 : index
    %c0_8 = arith.constant 0 : index
    %c0_9 = arith.constant 0 : index
    %11 = vector.load %arg4[%c0_7, %c0_8, %c0_9] : memref<1x2x128xf32, #tpu.memory_space<vmem>>, vector<1x2x128xf32>
    %12 = vector.shape_cast %11 : vector<1x2x128xf32> to vector<2x128xf32>
    %13 = vector.shape_cast %10 : vector<2x128xf32> to vector<1x2x128xf32>
    tpu.vector_store %arg4[%c0_7, %c0_8, %c0_9], %13 {strides = array<i32>} : memref<1x2x128xf32, #tpu.memory_space<vmem>>, vector<1x2x128xf32>,
    return
  }
  func.func @transform_0(%arg0: i32) -> (i32, i32) {
    %c0_i32 = arith.constant 0 : i32
    %c0_i32_0 = arith.constant 0 : i32
    return %arg0, %c0_i32 : i32, i32
  }
  func.func @transform_1(%arg0: i32) -> (i32, i32) {
    %c0_i32 = arith.constant 0 : i32
    %c0_i32_0 = arith.constant 0 : i32
    %c0_i32_1 = arith.constant 0 : i32
    return %c0_i32, %c0_i32_0 : i32, i32
  }
  func.func @transform_2(%arg0: i32) -> (i32, i32) {
    %c0_i32 = arith.constant 0 : i32
    %c0_i32_0 = arith.constant 0 : i32
    return %arg0, %c0_i32 : i32, i32
  }
  func.func @transform_3(%arg0: i32) -> (i32, i32, i32) {
    %c0_i32 = arith.constant 0 : i32
    %c0_i32_0 = arith.constant 0 : i32
    %c0_i32_1 = arith.constant 0 : i32
    return %arg0, %c0_i32, %c0_i32_0 : i32, i32, i32
  }
}

module attributes {stable_mosaic.version = 11 : i64} {
  func.func @_conv_bias_act_kernel(%arg0: i32, %arg1: memref<16x1024xbf16, #tpu.memory_space<vmem>>, %arg2: memref<1024x128xbf16, #tpu.memory_space<vmem>>, %arg3: memref<1x128xf32, #tpu.memory_space<vmem>>, %arg4: memref<16x128xbf16, #tpu.memory_space<vmem>>) attributes {dimension_semantics = [#tpu.dimension_semantics<parallel>], iteration_bounds = array<i64: 1>, scalar_prefetch = 0 : i64, scratch_operands = 0 : i64, tpu.core_type = #tpu.core_type<tc>, window_params = [{transform_indices = @transform_0, window_bounds = array<i64: 16, 1024>}, {pipeline_mode = #tpu.pipeline_mode<synchronous>, transform_indices = @transform_1, window_bounds = array<i64: 1024, 128>}, {pipeline_mode = #tpu.pipeline_mode<synchronous>, transform_indices = @transform_2, window_bounds = array<i64: 1, 128>}, {transform_indices = @transform_3, window_bounds = array<i64: 16, 128>}]} {
    %c0 = arith.constant 0 : index
    %c0_0 = arith.constant 0 : index
    %0 = vector.load %arg1[%c0, %c0_0] : memref<16x1024xbf16, #tpu.memory_space<vmem>>, vector<16x1024xbf16>
    %c0_1 = arith.constant 0 : index
    %c0_2 = arith.constant 0 : index
    %1 = vector.load %arg2[%c0_1, %c0_2] : memref<1024x128xbf16, #tpu.memory_space<vmem>>, vector<1024x128xbf16>
    %cst = arith.constant dense<0.000000e+00> : vector<16x128xf32>
    %2 = tpu.matmul %0, %1, %cst {dimension_numbers = #tpu.dot_dimension_numbers<[1], [0], [0], [1], [0, 0, 1, 1], [], []>} : vector<16x1024xbf16>, vector<1024x128xbf16>, vector<16x128xf32> -> vector<16x128xf32>
    %c0_3 = arith.constant 0 : index
    %c0_4 = arith.constant 0 : index
    %3 = vector.load %arg3[%c0_3, %c0_4] : memref<1x128xf32, #tpu.memory_space<vmem>>, vector<1x128xf32>
    %4 = vector.broadcast %3 : vector<1x128xf32> to vector<16x128xf32>
    %5 = arith.addf %2, %4 : vector<16x128xf32>
    %6 = arith.negf %5 : vector<16x128xf32>
    %7 = math.exp %6 : vector<16x128xf32>
    %cst_5 = arith.constant 1.000000e+00 : f32
    %8 = vector.broadcast %cst_5 : f32 to vector<16x128xf32>
    %9 = arith.addf %8, %7 : vector<16x128xf32>
    %10 = arith.divf %8, %9 : vector<16x128xf32>
    %11 = arith.truncf %10 : vector<16x128xf32> to vector<16x128xbf16>
    %c0_6 = arith.constant 0 : index
    %c0_7 = arith.constant 0 : index
    %12 = vector.load %arg4[%c0_6, %c0_7] : memref<16x128xbf16, #tpu.memory_space<vmem>>, vector<16x128xbf16>
    tpu.vector_store %arg4[%c0_6, %c0_7], %11 {strides = array<i32>} : memref<16x128xbf16, #tpu.memory_space<vmem>>, vector<16x128xbf16>,
    return
  }
  func.func @transform_0(%arg0: i32) -> (i32, i32) {
    %c0_i32 = arith.constant 0 : i32
    %c0_i32_0 = arith.constant 0 : i32
    return %arg0, %c0_i32 : i32, i32
  }
  func.func @transform_1(%arg0: i32) -> (i32, i32) {
    %c0_i32 = arith.constant 0 : i32
    %c0_i32_0 = arith.constant 0 : i32
    %c0_i32_1 = arith.constant 0 : i32
    return %c0_i32, %c0_i32_0 : i32, i32
  }
  func.func @transform_2(%arg0: i32) -> (i32, i32) {
    %c0_i32 = arith.constant 0 : i32
    %c0_i32_0 = arith.constant 0 : i32
    %c0_i32_1 = arith.constant 0 : i32
    return %c0_i32, %c0_i32_0 : i32, i32
  }
  func.func @transform_3(%arg0: i32) -> (i32, i32) {
    %c0_i32 = arith.constant 0 : i32
    %c0_i32_0 = arith.constant 0 : i32
    return %arg0, %c0_i32 : i32, i32
  }
}

</mosaic_0001>

<llo_original>
// kernel: _lambda_.5
$region0: #{_lambda_.5}
  #allocation0 [shape = 'u32[]', space=smem, size = 0x4, offset = 0x4, fixed_abs, tag = 'smem constant byte address 0x4 - core index']
  #allocation1 [shape = 'u32[144,128]{1,0:T(1,128)}', space=vmem, size = 0x12000, scoped, tag = 'internal scratch']
  %s0 = inlined_call_operand.vmem [shape: bf16[128,768], index: 0, kind: input, shape index: {}]
  %s1 = inlined_call_operand.vmem [shape: bf16[768,128], index: 1, kind: input, shape index: {}]
  %s2 = inlined_call_operand.vmem [shape: f32[1,128], index: 2, kind: input, shape index: {}]
  %s3 = inlined_call_operand.vmem [shape: bf16[128,128], index: 3, kind: output, shape index: {}]
  %s4 = sld [smem:[#allocation0]]
  $region45: #{_lambda_.5} parent=0
    _
  %s6 = ssub.s32 1, %s4
  %s7 = scalar_select 0, %s6, %s4
  loop: start=0, step=1, limit=4
  $region2: #{_lambda_.5} parent=0 // loop_pre_header
    _
  $region3: #{_lambda_.5} parent=0 // loop_header
    %s9 = sphi 0, %s13
    %p10 = scmp.ge.s32.totalorder %s9, 4
    %s19 = sphi 0, %s21
    %s22 = sphi 0, %s19
    %s23 = sphi 0, %s22
    %s39 = sphi 0, %s23
    %s43 = sphi 0, %s43
    %s45 = sphi 0, %s43
    %s46 = sphi 0, %s45
    %s60 = sphi 0, %s46
    %s64 = sphi 0, %s64
    %s66 = sphi 0, %s64
    %s67 = sphi 0, %s66
    %s81 = sphi 0, %s67
    %s87 = sphi 0, %s89
    %s90 = sphi 0, %s87
    %s91 = sphi 0, %s90
    %s107 = sphi 0, %s91
  $region4: #{_lambda_.5} parent=0 // loop_header_branch
    %12 = sbr.rel (%p10) target = $region8
  $region5: #{_lambda_.5} parent=0 // loop_body
    %s14 = ssub.s32 %s9, 1
    %s15 = ssub.s32 %s9, 2
    %s16 = sadd.s32 %s9, 1
    %s17 = ssub.s32 %s9, %s16
    %p18 = scmp.eq.s32.totalorder %s17, 0
    %s20 = sadd.s32 %s19, 1
    %s21 = scalar_select %p18, %s19, %s20
    %p24 = pneg %p18
    %p25 = scmp.eq.s32.totalorder %s9, 1
    %p26 = por %p24, %p25
    %p27 = scmp.ne.s32.totalorder %s19, %s22
    %p28 = scmp.eq.s32.totalorder %s9, 0
    %p29 = por %p27, %p28
    %p30 = scmp.ne.s32.totalorder %s19, %s22
    %p31 = scmp.eq.s32.totalorder %s14, 1
    %p32 = por %p30, %p31
    %p33 = scmp.ne.s32.totalorder %s22, %s23
    %p34 = scmp.eq.s32.totalorder %s14, 0
    %p35 = por %p33, %p34
    %p36 = scmp.ne.s32.totalorder %s22, %s23
    %p37 = scmp.eq.s32.totalorder %s15, 1
    %p38 = por %p36, %p37
    %p40 = scmp.ne.s32.totalorder %s23, %s39
    %p41 = scmp.eq.s32.totalorder %s15, 0
    %p42 = por %p40, %p41
    %s44 = sadd.s32 %s43, 1
    %p47 = scmp.eq.s32.totalorder %s9, 1
    %p48 = scmp.ne.s32.totalorder %s43, %s45
    %p49 = scmp.eq.s32.totalorder %s9, 0
    %p50 = por %p48, %p49
    %p51 = scmp.ne.s32.totalorder %s43, %s45
    %p52 = scmp.eq.s32.totalorder %s14, 1
    %p53 = por %p51, %p52
    %p54 = scmp.ne.s32.totalorder %s45, %s46
    %p55 = scmp.eq.s32.totalorder %s14, 0
    %p56 = por %p54, %p55
    %p57 = scmp.ne.s32.totalorder %s45, %s46
    %p58 = scmp.eq.s32.totalorder %s15, 1
    %p59 = por %p57, %p58
    %p61 = scmp.ne.s32.totalorder %s46, %s60
    %p62 = scmp.eq.s32.totalorder %s15, 0
    %p63 = por %p61, %p62
    %s65 = sadd.s32 %s64, 1
    %p68 = scmp.eq.s32.totalorder %s9, 1
    %p69 = scmp.ne.s32.totalorder %s64, %s66
    %p70 = scmp.eq.s32.totalorder %s9, 0
    %p71 = por %p69, %p70
    %p72 = scmp.ne.s32.totalorder %s64, %s66
    %p73 = scmp.eq.s32.totalorder %s14, 1
    %p74 = por %p72, %p73
    %p75 = scmp.ne.s32.totalorder %s66, %s67
    %p76 = scmp.eq.s32.totalorder %s14, 0
    %p77 = por %p75, %p76
    %p78 = scmp.ne.s32.totalorder %s66, %s67
    %p79 = scmp.eq.s32.totalorder %s15, 1
    %p80 = por %p78, %p79
    %p82 = scmp.ne.s32.totalorder %s67, %s81
    %p83 = scmp.eq.s32.totalorder %s15, 0
    %p84 = por %p82, %p83
    %s85 = ssub.s32 %s9, %s16
    %p86 = scmp.eq.s32.totalorder %s85, 0
    %s88 = sadd.s32 %s87, 1
    %s89 = scalar_select %p86, %s87, %s88
    %p92 = pneg %p86
    %p93 = scmp.eq.s32.totalorder %s9, 1
    %p94 = por %p92, %p93
    %p95 = scmp.ne.s32.totalorder %s87, %s90
    %p96 = scmp.eq.s32.totalorder %s9, 0
    %p97 = por %p95, %p96
    %p98 = scmp.ne.s32.totalorder %s87, %s90
    %p99 = scmp.eq.s32.totalorder %s14, 1
    %p100 = por %p98, %p99
    %p101 = scmp.ne.s32.totalorder %s90, %s91
    %p102 = scmp.eq.s32.totalorder %s14, 0
    %p103 = por %p101, %p102
    %p104 = scmp.ne.s32.totalorder %s90, %s91
    %p105 = scmp.eq.s32.totalorder %s15, 1
    %p106 = por %p104, %p105
    %p108 = scmp.ne.s32.totalorder %s91, %s107
    %p109 = scmp.eq.s32.totalorder %s15, 0
    %p110 = por %p108, %p109
    %p111 = scmp.le.s32.totalorder 1, %s9
    %p112 = scmp.lt.s32.totalorder %s9, 3
    %p113 = pnand %p111, %p112
    %p114 = pneg %p113
    // Predicated region
    $region9: #{_lambda_.5} parent=5 // pred_check
      _
    $region10: #{_lambda_.5} parent=5 // pred_check_branch
      %116 = sbr.rel (%p113) target = $region12
    $region11: #{_lambda_.5} parent=5 // pred_region
      %s117 = ssub.s32 %s9, 1
      // Predicated region
      $region13: #{_lambda_.5} parent=11 // pred_check
        %p118 = pneg %p56
      $region14: #{_lambda_.5} parent=11 // pred_check_branch
        %120 = sbr.rel (%p118) target = $region16
      $region15: #{_lambda_.5} parent=11 // pred_region
        _
      $region16: #{_lambda_.5} parent=11 // pred_fallthru
        _
      // Predicated region
      $region17: #{_lambda_.5} parent=11 // pred_check
        %p121 = pneg %p77
      $region18: #{_lambda_.5} parent=11 // pred_check_branch
        %123 = sbr.rel (%p121) target = $region20
      $region19: #{_lambda_.5} parent=11 // pred_region
        _
      $region20: #{_lambda_.5} parent=11 // pred_fallthru
        _
    $region12: #{_lambda_.5} parent=5 // pred_fallthru
      _
    %p124 = scmp.lt.s32.totalorder %s9, 2
    // Predicated region
    $region21: #{_lambda_.5} parent=5 // pred_check
      %p125 = pneg %p124
    $region22: #{_lambda_.5} parent=5 // pred_check_branch
      %127 = sbr.rel (%p125) target = $region24
    $region23: #{_lambda_.5} parent=5 // pred_region
      // Predicated region
      $region25: #{_lambda_.5} parent=23 // pred_check
        %p128 = pneg %p29
      $region26: #{_lambda_.5} parent=23 // pred_check_branch
        %130 = sbr.rel (%p128) target = $region28
      $region27: #{_lambda_.5} parent=23 // pred_region
        %s131 = smul.u32 8, %s9
        %p132 = scmp.lt.s32.totalorder %s131, 15
        %s133 = scalar_select %p132, %s131, 15
        %s134 = smul.addr %s133, 6
        %s135 = smul.addr %s134, 4
        %s136 = scalar_lea.vmem %s0, %s135
        %s137 = smul.u32 8, %s9
      $region28: #{_lambda_.5} parent=23 // pred_fallthru
        _
    $region24: #{_lambda_.5} parent=5 // pred_fallthru
      _
    %p138 = scmp.le.s32.totalorder 1, %s9
    %p139 = scmp.lt.s32.totalorder %s9, 3
    %p140 = pnand %p138, %p139
    %p141 = pneg %p140
    // Predicated region
    $region29: #{_lambda_.5} parent=5 // pred_check
      _
    $region30: #{_lambda_.5} parent=5 // pred_check_branch
      %143 = sbr.rel (%p140) target = $region32
    $region31: #{_lambda_.5} parent=5 // pred_region
      %s144 = ssub.s32 %s9, 1
      %s145 = smul.u32 8, %s14
      %p146 = scmp.lt.s32.totalorder %s145, 15
      %s147 = scalar_select %p146, %s145, 15
      %s148 = smul.addr %s147, 6
      %s149 = smul.addr %s148, 4
      %s150 = scalar_lea.vmem %s0, %s149
      %p151 = pneg %p35
      %p152 = pneg %p32
      %p153 = pneg %p56
      %p154 = pneg %p53
      %p155 = pneg %p77
      %p156 = pneg %p74
      %p157 = pneg %p103
      %p158 = pneg %p100
      %s159 = smul.u32 8, %s14
      %p160 = scmp.lt.s32.totalorder %s159, 15
      %s161 = scalar_select %p160, %s159, 15
      %s162 = smul.addr %s161, 4
      %s163 = scalar_lea.vmem %s3, %s162
      %s164 = smul.u32 8, %s14
      %p165 = scmp.lt.s32.totalorder %s164, 15
      %s166 = scalar_select %p165, %s164, 15
      %s167 = smul.addr %s166, 6
      %s168 = smul.addr %s167, 4
      %s169 = scalar_lea.vmem %s0, %s168
      %s170 = smul.u32 8, %s14
      %s171 = smul.u32 8, %s14
      %p172 = scmp.lt.s32.totalorder %s171, 15
      %s173 = scalar_select %p172, %s171, 15
      %s174 = smul.addr %s173, 4
      %s175 = scalar_lea.vmem %s3, %s174
      %s176 = smul.u32 8, %s14
      %v178 = vld [vmem:[%s169] sm:$0xff]
      %v179 = vld [vmem:[%s169 + $0x8] sm:$0xff]
      %v180 = vld [vmem:[%s169 + $0x10] sm:$0xff]
      %v181 = vld [vmem:[%s169 + $0x18] sm:$0xff]
      %v182 = vld [vmem:[%s169 + $0x20] sm:$0xff]
      %v183 = vld [vmem:[%s169 + $0x28] sm:$0xff]
      %v184 = vld [vmem:[%s169 + $0x30] sm:$0xff]
      %v185 = vld [vmem:[%s169 + $0x38] sm:$0xff]
      %v186 = vld [vmem:[%s169 + $0x40] sm:$0xff]
      %v187 = vld [vmem:[%s169 + $0x48] sm:$0xff]
      %v188 = vld [vmem:[%s169 + $0x50] sm:$0xff]
      %v189 = vld [vmem:[%s169 + $0x58] sm:$0xff]
      %v190 = vld [vmem:[%s169 + $0x60] sm:$0xff]
      %v191 = vld [vmem:[%s169 + $0x68] sm:$0xff]
      %v192 = vld [vmem:[%s169 + $0x70] sm:$0xff]
      %v193 = vld [vmem:[%s169 + $0x78] sm:$0xff]
      %v194 = vld [vmem:[%s169 + $0x80] sm:$0xff]
      %v195 = vld [vmem:[%s169 + $0x88] sm:$0xff]
      %v196 = vld [vmem:[%s169 + $0x90] sm:$0xff]
      %v197 = vld [vmem:[%s169 + $0x98] sm:$0xff]
      %v198 = vld [vmem:[%s169 + $0xa0] sm:$0xff]
      %v199 = vld [vmem:[%s169 + $0xa8] sm:$0xff]
      %v200 = vld [vmem:[%s169 + $0xb0] sm:$0xff]
      %v201 = vld [vmem:[%s169 + $0xb8] sm:$0xff]
      %v202 = vld [vmem:[%s1] sm:$0xf]
      %v203 = vld [vmem:[%s1 + $0x4] sm:$0xf]
      %v204 = vld [vmem:[%s1 + $0x8] sm:$0xf]
      %v205 = vld [vmem:[%s1 + $0xc] sm:$0xf]
      %v206 = vld [vmem:[%s1 + $0x10] sm:$0xf]
      %v207 = vld [vmem:[%s1 + $0x14] sm:$0xf]
      %v208 = vld [vmem:[%s1 + $0x18] sm:$0xf]
      %v209 = vld [vmem:[%s1 + $0x1c] sm:$0xf]
      %v210 = vld [vmem:[%s1 + $0x20] sm:$0xf]
      %v211 = vld [vmem:[%s1 + $0x24] sm:$0xf]
      %v212 = vld [vmem:[%s1 + $0x28] sm:$0xf]
      %v213 = vld [vmem:[%s1 + $0x2c] sm:$0xf]
      %v214 = vld [vmem:[%s1 + $0x30] sm:$0xf]
      %v215 = vld [vmem:[%s1 + $0x34] sm:$0xf]
      %v216 = vld [vmem:[%s1 + $0x38] sm:$0xf]
      %v217 = vld [vmem:[%s1 + $0x3c] sm:$0xf]
      %v218 = vld [vmem:[%s1 + $0x40] sm:$0xf]
      %v219 = vld [vmem:[%s1 + $0x44] sm:$0xf]
      %v220 = vld [vmem:[%s1 + $0x48] sm:$0xf]
      %v221 = vld [vmem:[%s1 + $0x4c] sm:$0xf]
      %v222 = vld [vmem:[%s1 + $0x50] sm:$0xf]
      %v223 = vld [vmem:[%s1 + $0x54] sm:$0xf]
      %v224 = vld [vmem:[%s1 + $0x58] sm:$0xf]
      %v225 = vld [vmem:[%s1 + $0x5c] sm:$0xf]
      %v226 = vld [vmem:[%s1 + $0x60] sm:$0xf]
      %v227 = vld [vmem:[%s1 + $0x64] sm:$0xf]
      %v228 = vld [vmem:[%s1 + $0x68] sm:$0xf]
      %v229 = vld [vmem:[%s1 + $0x6c] sm:$0xf]
      %v230 = vld [vmem:[%s1 + $0x70] sm:$0xf]
      %v231 = vld [vmem:[%s1 + $0x74] sm:$0xf]
      %v232 = vld [vmem:[%s1 + $0x78] sm:$0xf]
      %v233 = vld [vmem:[%s1 + $0x7c] sm:$0xf]
      %v234 = vld [vmem:[%s1 + $0x80] sm:$0xf]
      %v235 = vld [vmem:[%s1 + $0x84] sm:$0xf]
      %v236 = vld [vmem:[%s1 + $0x88] sm:$0xf]
      %v237 = vld [vmem:[%s1 + $0x8c] sm:$0xf]
      %v238 = vld [vmem:[%s1 + $0x90] sm:$0xf]
      %v239 = vld [vmem:[%s1 + $0x94] sm:$0xf]
      %v240 = vld [vmem:[%s1 + $0x98] sm:$0xf]
      %v241 = vld [vmem:[%s1 + $0x9c] sm:$0xf]
      %v242 = vld [vmem:[%s1 + $0xa0] sm:$0xf]
      %v243 = vld [vmem:[%s1 + $0xa4] sm:$0xf]
      %v244 = vld [vmem:[%s1 + $0xa8] sm:$0xf]
      %v245 = vld [vmem:[%s1 + $0xac] sm:$0xf]
      %v246 = vld [vmem:[%s1 + $0xb0] sm:$0xf]
      %v247 = vld [vmem:[%s1 + $0xb4] sm:$0xf]
      %v248 = vld [vmem:[%s1 + $0xb8] sm:$0xf]
      %v249 = vld [vmem:[%s1 + $0xbc] sm:$0xf]
      %v250 = vld [vmem:[%s1 + $0xc0] sm:$0xf]
      %v251 = vld [vmem:[%s1 + $0xc4] sm:$0xf]
      %v252 = vld [vmem:[%s1 + $0xc8] sm:$0xf]
      %v253 = vld [vmem:[%s1 + $0xcc] sm:$0xf]
      %v254 = vld [vmem:[%s1 + $0xd0] sm:$0xf]
      %v255 = vld [vmem:[%s1 + $0xd4] sm:$0xf]
      %v256 = vld [vmem:[%s1 + $0xd8] sm:$0xf]
      %v257 = vld [vmem:[%s1 + $0xdc] sm:$0xf]
      %v258 = vld [vmem:[%s1 + $0xe0] sm:$0xf]
      %v259 = vld [vmem:[%s1 + $0xe4] sm:$0xf]
      %v260 = vld [vmem:[%s1 + $0xe8] sm:$0xf]
      %v261 = vld [vmem:[%s1 + $0xec] sm:$0xf]
      %v262 = vld [vmem:[%s1 + $0xf0] sm:$0xf]
      %v263 = vld [vmem:[%s1 + $0xf4] sm:$0xf]
      %v264 = vld [vmem:[%s1 + $0xf8] sm:$0xf]
      %v265 = vld [vmem:[%s1 + $0xfc] sm:$0xf]
      %v266 = vld [vmem:[%s1 + $0x100] sm:$0xf]
      %v267 = vld [vmem:[%s1 + $0x104] sm:$0xf]
      %v268 = vld [vmem:[%s1 + $0x108] sm:$0xf]
      %v269 = vld [vmem:[%s1 + $0x10c] sm:$0xf]
      %v270 = vld [vmem:[%s1 + $0x110] sm:$0xf]
      %v271 = vld [vmem:[%s1 + $0x114] sm:$0xf]
      %v272 = vld [vmem:[%s1 + $0x118] sm:$0xf]
      %v273 = vld [vmem:[%s1 + $0x11c] sm:$0xf]
      %v274 = vld [vmem:[%s1 + $0x120] sm:$0xf]
      %v275 = vld [vmem:[%s1 + $0x124] sm:$0xf]
      %v276 = vld [vmem:[%s1 + $0x128] sm:$0xf]
      %v277 = vld [vmem:[%s1 + $0x12c] sm:$0xf]
      %v278 = vld [vmem:[%s1 + $0x130] sm:$0xf]
      %v279 = vld [vmem:[%s1 + $0x134] sm:$0xf]
      %v280 = vld [vmem:[%s1 + $0x138] sm:$0xf]
      %v281 = vld [vmem:[%s1 + $0x13c] sm:$0xf]
      %v282 = vld [vmem:[%s1 + $0x140] sm:$0xf]
      %v283 = vld [vmem:[%s1 + $0x144] sm:$0xf]
      %v284 = vld [vmem:[%s1 + $0x148] sm:$0xf]
      %v285 = vld [vmem:[%s1 + $0x14c] sm:$0xf]
      %v286 = vld [vmem:[%s1 + $0x150] sm:$0xf]
      %v287 = vld [vmem:[%s1 + $0x154] sm:$0xf]
      %v288 = vld [vmem:[%s1 + $0x158] sm:$0xf]
      %v289 = vld [vmem:[%s1 + $0x15c] sm:$0xf]
      %v290 = vld [vmem:[%s1 + $0x160] sm:$0xf]
      %v291 = vld [vmem:[%s1 + $0x164] sm:$0xf]
      %v292 = vld [vmem:[%s1 + $0x168] sm:$0xf]
      %v293 = vld [vmem:[%s1 + $0x16c] sm:$0xf]
      %v294 = vld [vmem:[%s1 + $0x170] sm:$0xf]
      %v295 = vld [vmem:[%s1 + $0x174] sm:$0xf]
      %v296 = vld [vmem:[%s1 + $0x178] sm:$0xf]
      %v297 = vld [vmem:[%s1 + $0x17c] sm:$0xf]
      %v298 = vld [vmem:[%s2] sm:$0x1]
      %v300 = vlaneseq
      %v301 = vshrl.u32 %v300, 7
      %v302 = vsub.s32 0, %v301
      %v303 = vrot.slane %v298, %v302
      %v329 = vunpack.c.l.b16 %v178
      %v330 = vunpack.c.h.b16 %v178
      %v331 = vunpack.c.l.b16 %v179
      %v332 = vunpack.c.h.b16 %v179
      %v333 = vunpack.c.l.b16 %v180
      %v334 = vunpack.c.h.b16 %v180
      %v335 = vunpack.c.l.b16 %v181
      %v336 = vunpack.c.h.b16 %v181
      %v337 = vunpack.c.l.b16 %v182
      %v338 = vunpack.c.h.b16 %v182
      %v339 = vunpack.c.l.b16 %v183
      %v340 = vunpack.c.h.b16 %v183
      %v341 = vunpack.c.l.b16 %v184
      %v342 = vunpack.c.h.b16 %v184
      %v343 = vunpack.c.l.b16 %v185
      %v344 = vunpack.c.h.b16 %v185
      %v345 = vunpack.c.l.b16 %v186
      %v346 = vunpack.c.h.b16 %v186
      %v347 = vunpack.c.l.b16 %v187
      %v348 = vunpack.c.h.b16 %v187
      %v349 = vunpack.c.l.b16 %v188
      %v350 = vunpack.c.h.b16 %v188
      %v351 = vunpack.c.l.b16 %v189
      %v352 = vunpack.c.h.b16 %v189
      %v353 = vunpack.c.l.b16 %v190
      %v354 = vunpack.c.h.b16 %v190
      %v355 = vunpack.c.l.b16 %v191
      %v356 = vunpack.c.h.b16 %v191
      %v357 = vunpack.c.l.b16 %v192
      %v358 = vunpack.c.h.b16 %v192
      %v359 = vunpack.c.l.b16 %v193
      %v360 = vunpack.c.h.b16 %v193
      %v361 = vunpack.c.l.b16 %v194
      %v362 = vunpack.c.h.b16 %v194
      %v363 = vunpack.c.l.b16 %v195
      %v364 = vunpack.c.h.b16 %v195
      %v365 = vunpack.c.l.b16 %v196
      %v366 = vunpack.c.h.b16 %v196
      %v367 = vunpack.c.l.b16 %v197
      %v368 = vunpack.c.h.b16 %v197
      %v369 = vunpack.c.l.b16 %v198
      %v370 = vunpack.c.h.b16 %v198
      %v371 = vunpack.c.l.b16 %v199
      %v372 = vunpack.c.h.b16 %v199
      %v373 = vunpack.c.l.b16 %v200
      %v374 = vunpack.c.h.b16 %v200
      %v375 = vunpack.c.l.b16 %v201
      %v376 = vunpack.c.h.b16 %v201
      %v377 = vpack.c.b16 %v335, %v329
      %v378 = vpack.c.b16 %v336, %v330
      %v379 = vpack.c.b16 %v337, %v331
      %v380 = vpack.c.b16 %v338, %v332
      %v381 = vpack.c.b16 %v339, %v333
      %v382 = vpack.c.b16 %v340, %v334
      %v383 = vpack.c.b16 %v347, %v341
      %v384 = vpack.c.b16 %v348, %v342
      %v385 = vpack.c.b16 %v349, %v343
      %v386 = vpack.c.b16 %v350, %v344
      %v387 = vpack.c.b16 %v351, %v345
      %v388 = vpack.c.b16 %v352, %v346
      %v389 = vpack.c.b16 %v359, %v353
      %v390 = vpack.c.b16 %v360, %v354
      %v391 = vpack.c.b16 %v361, %v355
      %v392 = vpack.c.b16 %v362, %v356
      %v393 = vpack.c.b16 %v363, %v357
      %v394 = vpack.c.b16 %v364, %v358
      %v395 = vpack.c.b16 %v371, %v365
      %v396 = vpack.c.b16 %v372, %v366
      %v397 = vpack.c.b16 %v373, %v367
      %v398 = vpack.c.b16 %v374, %v368
      %v399 = vpack.c.b16 %v375, %v369
      %v400 = vpack.c.b16 %v376, %v370
      %v521 = vunpack.c.l.b16 %v202
      %v522 = vunpack.c.l.b16 %v203
      %v523 = vunpack.c.l.b16 %v204
      %v524 = vunpack.c.l.b16 %v205
      %v525 = vunpack.c.l.b16 %v206
      %v526 = vunpack.c.l.b16 %v207
      %v527 = vunpack.c.l.b16 %v208
      %v528 = vunpack.c.l.b16 %v209
      %v529 = vunpack.c.l.b16 %v210
      %v530 = vunpack.c.l.b16 %v211
      %v531 = vunpack.c.l.b16 %v212
      %v532 = vunpack.c.l.b16 %v213
      %v533 = vunpack.c.l.b16 %v214
      %v534 = vunpack.c.l.b16 %v215
      %v535 = vunpack.c.l.b16 %v216
      %v536 = vunpack.c.l.b16 %v217
      %v537 = vunpack.c.l.b16 %v218
      %v538 = vunpack.c.l.b16 %v219
      %v539 = vunpack.c.l.b16 %v220
      %v540 = vunpack.c.l.b16 %v221
      %v541 = vunpack.c.l.b16 %v222
      %v542 = vunpack.c.l.b16 %v223
      %v543 = vunpack.c.l.b16 %v224
      %v544 = vunpack.c.l.b16 %v225
      %v545 = vunpack.c.l.b16 %v226
      %v546 = vunpack.c.l.b16 %v227
      %v547 = vunpack.c.l.b16 %v228
      %v548 = vunpack.c.l.b16 %v229
      %v549 = vunpack.c.l.b16 %v230
      %v550 = vunpack.c.l.b16 %v231
      %v551 = vunpack.c.l.b16 %v232
      %v552 = vunpack.c.l.b16 %v233
      %v553 = vunpack.c.l.b16 %v234
      %v554 = vunpack.c.l.b16 %v235
      %v555 = vunpack.c.l.b16 %v236
      %v556 = vunpack.c.l.b16 %v237
      %v557 = vunpack.c.l.b16 %v238
      %v558 = vunpack.c.l.b16 %v239
      %v559 = vunpack.c.l.b16 %v240
      %v560 = vunpack.c.l.b16 %v241
      %v561 = vunpack.c.l.b16 %v242
      %v562 = vunpack.c.l.b16 %v243
      %v563 = vunpack.c.l.b16 %v244
      %v564 = vunpack.c.l.b16 %v245
      %v565 = vunpack.c.l.b16 %v246
      %v566 = vunpack.c.l.b16 %v247
      %v567 = vunpack.c.l.b16 %v248
      %v568 = vunpack.c.l.b16 %v249
      %v569 = vunpack.c.l.b16 %v250
      %v570 = vunpack.c.l.b16 %v251
      %v571 = vunpack.c.l.b16 %v252
      %v572 = vunpack.c.l.b16 %v253
      %v573 = vunpack.c.l.b16 %v254
      %v574 = vunpack.c.l.b16 %v255
      %v575 = vunpack.c.l.b16 %v256
      %v576 = vunpack.c.l.b16 %v257
      %v577 = vunpack.c.l.b16 %v258
      %v578 = vunpack.c.l.b16 %v259
      %v579 = vunpack.c.l.b16 %v260
      %v580 = vunpack.c.l.b16 %v261
      %v581 = vunpack.c.l.b16 %v262
      %v582 = vunpack.c.l.b16 %v263
      %v583 = vunpack.c.l.b16 %v264
      %v584 = vunpack.c.l.b16 %v265
      %v585 = vunpack.c.l.b16 %v266
      %v586 = vunpack.c.l.b16 %v267
      %v587 = vunpack.c.l.b16 %v268
      %v588 = vunpack.c.l.b16 %v269
      %v589 = vunpack.c.l.b16 %v270
      %v590 = vunpack.c.l.b16 %v271
      %v591 = vunpack.c.l.b16 %v272
      %v592 = vunpack.c.l.b16 %v273
      %v593 = vunpack.c.l.b16 %v274
      %v594 = vunpack.c.l.b16 %v275
      %v595 = vunpack.c.l.b16 %v276
      %v596 = vunpack.c.l.b16 %v277
      %v597 = vunpack.c.l.b16 %v278
      %v598 = vunpack.c.l.b16 %v279
      %v599 = vunpack.c.l.b16 %v280
      %v600 = vunpack.c.l.b16 %v281
      %v601 = vunpack.c.l.b16 %v282
      %v602 = vunpack.c.l.b16 %v283
      %v603 = vunpack.c.l.b16 %v284
      %v604 = vunpack.c.l.b16 %v285
      %v605 = vunpack.c.l.b16 %v286
      %v606 = vunpack.c.l.b16 %v287
      %v607 = vunpack.c.l.b16 %v288
      %v608 = vunpack.c.l.b16 %v289
      %v609 = vunpack.c.l.b16 %v290
      %v610 = vunpack.c.l.b16 %v291
      %v611 = vunpack.c.l.b16 %v292
      %v612 = vunpack.c.l.b16 %v293
      %v613 = vunpack.c.l.b16 %v294
      %v614 = vunpack.c.l.b16 %v295
      %v615 = vunpack.c.l.b16 %v296
      %v616 = vunpack.c.l.b16 %v297
      %v617 = vpack.c.b16 %v522, %v521
      %v618 = vpack.c.b16 %v524, %v523
      %v619 = vpack.c.b16 %v526, %v525
      %v620 = vpack.c.b16 %v528, %v527
      %v621 = vpack.c.b16 %v530, %v529
      %v622 = vpack.c.b16 %v532, %v531
      %v623 = vpack.c.b16 %v534, %v533
      %v624 = vpack.c.b16 %v536, %v535
      %v625 = vpack.c.b16 %v538, %v537
      %v626 = vpack.c.b16 %v540, %v539
      %v627 = vpack.c.b16 %v542, %v541
      %v628 = vpack.c.b16 %v544, %v543
      %v629 = vpack.c.b16 %v546, %v545
      %v630 = vpack.c.b16 %v548, %v547
      %v631 = vpack.c.b16 %v550, %v549
      %v632 = vpack.c.b16 %v552, %v551
      %v633 = vpack.c.b16 %v554, %v553
      %v634 = vpack.c.b16 %v556, %v555
      %v635 = vpack.c.b16 %v558, %v557
      %v636 = vpack.c.b16 %v560, %v559
      %v637 = vpack.c.b16 %v562, %v561
      %v638 = vpack.c.b16 %v564, %v563
      %v639 = vpack.c.b16 %v566, %v565
      %v640 = vpack.c.b16 %v568, %v567
      %v641 = vpack.c.b16 %v570, %v569
      %v642 = vpack.c.b16 %v572, %v571
      %v643 = vpack.c.b16 %v574, %v573
      %v644 = vpack.c.b16 %v576, %v575
      %v645 = vpack.c.b16 %v578, %v577
      %v646 = vpack.c.b16 %v580, %v579
      %v647 = vpack.c.b16 %v582, %v581
      %v648 = vpack.c.b16 %v584, %v583
      %v649 = vpack.c.b16 %v586, %v585
      %v650 = vpack.c.b16 %v588, %v587
      %v651 = vpack.c.b16 %v590, %v589
      %v652 = vpack.c.b16 %v592, %v591
      %v653 = vpack.c.b16 %v594, %v593
      %v654 = vpack.c.b16 %v596, %v595
      %v655 = vpack.c.b16 %v598, %v597
      %v656 = vpack.c.b16 %v600, %v599
      %v657 = vpack.c.b16 %v602, %v601
      %v658 = vpack.c.b16 %v604, %v603
      %v659 = vpack.c.b16 %v606, %v605
      %v660 = vpack.c.b16 %v608, %v607
      %v661 = vpack.c.b16 %v610, %v609
      %v662 = vpack.c.b16 %v612, %v611
      %v663 = vpack.c.b16 %v614, %v613
      %v664 = vpack.c.b16 %v616, %v615
      %713 = vmatprep.subr.bf16.mxu0 0
      %714 = vmatpush1.bf16.msra.mxu0 %v617
      %715 = vmatprep.subr.bf16.mxu0 0
      %716 = vmatpush1.bf16.msra.mxu0 %v618
      %717 = vmatprep.subr.bf16.mxu0 0
      %718 = vmatpush1.bf16.msra.mxu0 %v619
      %719 = vmatprep.subr.bf16.mxu0 0
      %720 = vmatpush1.bf16.msra.mxu0 %v620
      %721 = vmatprep.subr.bf16.mxu0 0
      %722 = vmatpush1.bf16.msra.mxu0 %v621
      %723 = vmatprep.subr.bf16.mxu0 0
      %724 = vmatpush1.bf16.msra.mxu0 %v622
      %725 = vmatprep.subr.bf16.mxu0 0
      %726 = vmatpush1.bf16.msra.mxu0 %v623
      %727 = vmatprep.subr.bf16.mxu0 0
      %728 = vmatpush1.bf16.msra.mxu0 %v624
      %729 = vmatprep.subr.bf16.mxu0 0
      %730 = vmatpush1.bf16.msra.mxu0 %v625
      %731 = vmatprep.subr.bf16.mxu0 0
      %732 = vmatpush1.bf16.msra.mxu0 %v626
      %733 = vmatprep.subr.bf16.mxu0 0
      %734 = vmatpush1.bf16.msra.mxu0 %v627
      %735 = vmatprep.subr.bf16.mxu0 0
      %736 = vmatpush1.bf16.msra.mxu0 %v628
      %737 = vmatprep.subr.bf16.mxu0 0
      %738 = vmatpush1.bf16.msra.mxu0 %v629
      %739 = vmatprep.subr.bf16.mxu0 0
      %740 = vmatpush1.bf16.msra.mxu0 %v630
      %741 = vmatprep.subr.bf16.mxu0 0
      %742 = vmatpush1.bf16.msra.mxu0 %v631
      %743 = vmatprep.subr.bf16.mxu0 0
      %744 = vmatpush1.bf16.msra.mxu0 %v632
      %745 = vmatprep.mubr.bf16.mxu0 %v378
      %746 = vmatmul.mubr.bf16.gmra.mrb[0].mxu0 %v377
      %v747 = vpop.f32.mrb[0].mxu0
      %v748 = vadd.f32 %v303, %v747
      %v749 = vpop.f32.mrb[0].mxu0
      %v750 = vpop.f32.mrb[0].mxu0
      %v751 = vadd.f32 %v303, %v750
      %v752 = vpop.f32.mrb[0].mxu0
      %753 = vmatprep.mubr.bf16.mxu0 %v384
      %754 = vmatmul.mubr.bf16.gmra.mrb[0].mxu0 %v383
      %v755 = vpop.f32.mrb[0].mxu0
      %v756 = vadd.f32 %v303, %v755
      %v757 = vpop.f32.mrb[0].mxu0
      %v758 = vpop.f32.mrb[0].mxu0
      %v759 = vadd.f32 %v303, %v758
      %v760 = vpop.f32.mrb[0].mxu0
      %761 = vmatprep.mubr.bf16.mxu0 %v390
      %762 = vmatmul.mubr.bf16.gmra.mrb[0].mxu0 %v389
      %v763 = vpop.f32.mrb[0].mxu0
      %v764 = vadd.f32 %v303, %v763
      %v765 = vpop.f32.mrb[0].mxu0
      %v766 = vpop.f32.mrb[0].mxu0
      %v767 = vadd.f32 %v303, %v766
      %v768 = vpop.f32.mrb[0].mxu0
      %769 = vmatprep.mubr.bf16.mxu0 %v396
      %770 = vmatmul.mubr.bf16.gmra.mrb[0].mxu0 %v395
      %v771 = vpop.f32.mrb[0].mxu0
      %v772 = vadd.f32 %v303, %v771
      %v773 = vpop.f32.mrb[0].mxu0
      %v774 = vpop.f32.mrb[0].mxu0
      %v775 = vadd.f32 %v303, %v774
      %v776 = vpop.f32.mrb[0].mxu0
      %777 = vdwg.mxu0
      %778 = vmatprep.subr.bf16.mxu0 0
      %779 = vmatpush1.bf16.msra.mxu0 %v633
      %780 = vmatprep.subr.bf16.mxu0 0
      %781 = vmatpush1.bf16.msra.mxu0 %v634
      %782 = vmatprep.subr.bf16.mxu0 0
      %783 = vmatpush1.bf16.msra.mxu0 %v635
      %784 = vmatprep.subr.bf16.mxu0 0
      %785 = vmatpush1.bf16.msra.mxu0 %v636
      %786 = vmatprep.subr.bf16.mxu0 0
      %787 = vmatpush1.bf16.msra.mxu0 %v637
      %788 = vmatprep.subr.bf16.mxu0 0
      %789 = vmatpush1.bf16.msra.mxu0 %v638
      %790 = vmatprep.subr.bf16.mxu0 0
      %791 = vmatpush1.bf16.msra.mxu0 %v639
      %792 = vmatprep.subr.bf16.mxu0 0
      %793 = vmatpush1.bf16.msra.mxu0 %v640
      %794 = vmatprep.subr.bf16.mxu0 0
      %795 = vmatpush1.bf16.msra.mxu0 %v641
      %796 = vmatprep.subr.bf16.mxu0 0
      %797 = vmatpush1.bf16.msra.mxu0 %v642
      %798 = vmatprep.subr.bf16.mxu0 0
      %799 = vmatpush1.bf16.msra.mxu0 %v643
      %800 = vmatprep.subr.bf16.mxu0 0
      %801 = vmatpush1.bf16.msra.mxu0 %v644
      %802 = vmatprep.subr.bf16.mxu0 0
      %803 = vmatpush1.bf16.msra.mxu0 %v645
      %804 = vmatprep.subr.bf16.mxu0 0
      %805 = vmatpush1.bf16.msra.mxu0 %v646
      %806 = vmatprep.subr.bf16.mxu0 0
      %807 = vmatpush1.bf16.msra.mxu0 %v647
      %808 = vmatprep.subr.bf16.mxu0 0
      %809 = vmatpush1.bf16.msra.mxu0 %v648
      %810 = vmatprep.mubr.bf16.mxu0 %v380
      %811 = vmatmul.mubr.bf16.gmra.mrb[0].mxu0 %v379
      %v812 = vpop.f32.mrb[0].mxu0
      %v813 = vadd.f32 %v748, %v812
      %v814 = vpop.f32.mrb[0].mxu0
      %v815 = vpop.f32.mrb[0].mxu0
      %v816 = vadd.f32 %v751, %v815
      %v817 = vpop.f32.mrb[0].mxu0
      %818 = vmatprep.mubr.bf16.mxu0 %v386
      %819 = vmatmul.mubr.bf16.gmra.mrb[0].mxu0 %v385
      %v820 = vpop.f32.mrb[0].mxu0
      %v821 = vadd.f32 %v756, %v820
      %v822 = vpop.f32.mrb[0].mxu0
      %v823 = vpop.f32.mrb[0].mxu0
      %v824 = vadd.f32 %v759, %v823
      %v825 = vpop.f32.mrb[0].mxu0
      %826 = vmatprep.mubr.bf16.mxu0 %v392
      %827 = vmatmul.mubr.bf16.gmra.mrb[0].mxu0 %v391
      %v828 = vpop.f32.mrb[0].mxu0
      %v829 = vadd.f32 %v764, %v828
      %v830 = vpop.f32.mrb[0].mxu0
      %v831 = vpop.f32.mrb[0].mxu0
      %v832 = vadd.f32 %v767, %v831
      %v833 = vpop.f32.mrb[0].mxu0
      %834 = vmatprep.mubr.bf16.mxu0 %v398
      %835 = vmatmul.mubr.bf16.gmra.mrb[0].mxu0 %v397
      %v836 = vpop.f32.mrb[0].mxu0
      %v837 = vadd.f32 %v772, %v836
      %v838 = vpop.f32.mrb[0].mxu0
      %v839 = vpop.f32.mrb[0].mxu0
      %v840 = vadd.f32 %v775, %v839
      %v841 = vpop.f32.mrb[0].mxu0
      %842 = vdwg.mxu0
      %843 = vmatprep.subr.bf16.mxu0 0
      %844 = vmatpush1.bf16.msra.mxu0 %v649
      %845 = vmatprep.subr.bf16.mxu0 0
      %846 = vmatpush1.bf16.msra.mxu0 %v650
      %847 = vmatprep.subr.bf16.mxu0 0
      %848 = vmatpush1.bf16.msra.mxu0 %v651
      %849 = vmatprep.subr.bf16.mxu0 0
      %850 = vmatpush1.bf16.msra.mxu0 %v652
      %851 = vmatprep.subr.bf16.mxu0 0
      %852 = vmatpush1.bf16.msra.mxu0 %v653
      %853 = vmatprep.subr.bf16.mxu0 0
      %854 = vmatpush1.bf16.msra.mxu0 %v654
      %855 = vmatprep.subr.bf16.mxu0 0
      %856 = vmatpush1.bf16.msra.mxu0 %v655
      %857 = vmatprep.subr.bf16.mxu0 0
      %858 = vmatpush1.bf16.msra.mxu0 %v656
      %859 = vmatprep.subr.bf16.mxu0 0
      %860 = vmatpush1.bf16.msra.mxu0 %v657
      %861 = vmatprep.subr.bf16.mxu0 0
      %862 = vmatpush1.bf16.msra.mxu0 %v658
      %863 = vmatprep.subr.bf16.mxu0 0
      %864 = vmatpush1.bf16.msra.mxu0 %v659
      %865 = vmatprep.subr.bf16.mxu0 0
      %866 = vmatpush1.bf16.msra.mxu0 %v660
      %867 = vmatprep.subr.bf16.mxu0 0
      %868 = vmatpush1.bf16.msra.mxu0 %v661
      %869 = vmatprep.subr.bf16.mxu0 0
      %870 = vmatpush1.bf16.msra.mxu0 %v662
      %871 = vmatprep.subr.bf16.mxu0 0
      %872 = vmatpush1.bf16.msra.mxu0 %v663
      %873 = vmatprep.subr.bf16.mxu0 0
      %874 = vmatpush1.bf16.msra.mxu0 %v664
      %875 = vmatprep.mubr.bf16.mxu0 %v382
      %876 = vmatmul.mubr.bf16.gmra.mrb[0].mxu0 %v381
      %v877 = vpop.f32.mrb[0].mxu0
      %v878 = vadd.f32 %v813, %v877
      %v879 = vpop.f32.mrb[0].mxu0
      %v880 = vpop.f32.mrb[0].mxu0
      %v881 = vadd.f32 %v816, %v880
      %v882 = vpop.f32.mrb[0].mxu0
      %883 = vmatprep.mubr.bf16.mxu0 %v388
      %884 = vmatmul.mubr.bf16.gmra.mrb[0].mxu0 %v387
      %v885 = vpop.f32.mrb[0].mxu0
      %v886 = vadd.f32 %v821, %v885
      %v887 = vpop.f32.mrb[0].mxu0
      %v888 = vpop.f32.mrb[0].mxu0
      %v889 = vadd.f32 %v824, %v888
      %v890 = vpop.f32.mrb[0].mxu0
      %891 = vmatprep.mubr.bf16.mxu0 %v394
      %892 = vmatmul.mubr.bf16.gmra.mrb[0].mxu0 %v393
      %v893 = vpop.f32.mrb[0].mxu0
      %v894 = vadd.f32 %v829, %v893
      %v895 = vpop.f32.mrb[0].mxu0
      %v896 = vpop.f32.mrb[0].mxu0
      %v897 = vadd.f32 %v832, %v896
      %v898 = vpop.f32.mrb[0].mxu0
      %899 = vmatprep.mubr.bf16.mxu0 %v400
      %900 = vmatmul.mubr.bf16.gmra.mrb[0].mxu0 %v399
      %v901 = vpop.f32.mrb[0].mxu0
      %v902 = vadd.f32 %v837, %v901
      %v903 = vpop.f32.mrb[0].mxu0
      %v904 = vpop.f32.mrb[0].mxu0
      %v905 = vadd.f32 %v840, %v904
      %v906 = vpop.f32.mrb[0].mxu0
      %907 = vdwg.mxu0
      %vm908 = vcmp.ge.f32.partialorder %v878, 0.0
      %vm909 = vcmp.ge.f32.partialorder %v881, 0.0
      %vm910 = vcmp.ge.f32.partialorder %v886, 0.0
      %vm911 = vcmp.ge.f32.partialorder %v889, 0.0
      %vm912 = vcmp.ge.f32.partialorder %v894, 0.0
      %vm913 = vcmp.ge.f32.partialorder %v897, 0.0
      %vm914 = vcmp.ge.f32.partialorder %v902, 0.0
      %vm915 = vcmp.ge.f32.partialorder %v905, 0.0
      %v916 = vmul.f32 %v878, 0.2
      %v917 = vmul.f32 %v881, 0.2
      %v918 = vmul.f32 %v886, 0.2
      %v919 = vmul.f32 %v889, 0.2
      %v920 = vmul.f32 %v894, 0.2
      %v921 = vmul.f32 %v897, 0.2
      %v922 = vmul.f32 %v902, 0.2
      %v923 = vmul.f32 %v905, 0.2
      %v924 = vsel %vm908, %v878, %v916
      %v925 = vsel %vm909, %v881, %v917
      %v926 = vsel %vm910, %v886, %v918
      %v927 = vsel %vm911, %v889, %v919
      %v928 = vsel %vm912, %v894, %v920
      %v929 = vsel %vm913, %v897, %v921
      %v930 = vsel %vm914, %v902, %v922
      %v931 = vsel %vm915, %v905, %v923
      %v932 = vpack.c.bf16 %v925, %v924
      %v933 = vpack.c.bf16 %v927, %v926
      %v934 = vpack.c.bf16 %v929, %v928
      %v935 = vpack.c.bf16 %v931, %v930
      %v940 = vunpack.c.l.b16 %v932
      %v941 = vunpack.c.h.b16 %v932
      %v942 = vunpack.c.l.b16 %v933
      %v943 = vunpack.c.h.b16 %v933
      %v944 = vunpack.c.l.b16 %v934
      %v945 = vunpack.c.h.b16 %v934
      %v946 = vunpack.c.l.b16 %v935
      %v947 = vunpack.c.h.b16 %v935
      %v948 = vpack.c.b16 %v940, %v940
      %v949 = vpack.c.b16 %v941, %v941
      %v950 = vpack.c.b16 %v942, %v942
      %v951 = vpack.c.b16 %v943, %v943
      %v952 = vpack.c.b16 %v944, %v944
      %v953 = vpack.c.b16 %v945, %v945
      %v954 = vpack.c.b16 %v946, %v946
      %v955 = vpack.c.b16 %v947, %v947
      %964 = vst [vmem:[%s175] sm:$0xf] %v948
      %965 = vst [vmem:[%s175 + $0x4] sm:$0xf] %v949
      %966 = vst [vmem:[%s175 + $0x8] sm:$0xf] %v950
      %967 = vst [vmem:[%s175 + $0xc] sm:$0xf] %v951
      %968 = vst [vmem:[%s175 + $0x10] sm:$0xf] %v952
      %969 = vst [vmem:[%s175 + $0x14] sm:$0xf] %v953
      %970 = vst [vmem:[%s175 + $0x18] sm:$0xf] %v954
      %971 = vst [vmem:[%s175 + $0x1c] sm:$0xf] %v955
      %s972 = smul.u32 8, %s14
      %p973 = scmp.lt.s32.totalorder %s972, 15
      %s974 = scalar_select %p973, %s972, 15
      %s975 = smul.addr %s974, 4
      %s976 = scalar_lea.vmem %s3, %s975
      // Predicated region
      $region33: #{_lambda_.5} parent=31 // pred_check
        %p977 = pneg %p100
      $region34: #{_lambda_.5} parent=31 // pred_check_branch
        %979 = sbr.rel (%p977) target = $region36
      $region35: #{_lambda_.5} parent=31 // pred_region
        %s980 = smul.u32 8, %s14
      $region36: #{_lambda_.5} parent=31 // pred_fallthru
        _
    $region32: #{_lambda_.5} parent=5 // pred_fallthru
      _
    %p981 = scmp.le.s32.totalorder 2, %s9
    // Predicated region
    $region37: #{_lambda_.5} parent=5 // pred_check
      %p982 = pneg %p981
    $region38: #{_lambda_.5} parent=5 // pred_check_branch
      %984 = sbr.rel (%p982) target = $region40
    $region39: #{_lambda_.5} parent=5 // pred_region
      %s985 = ssub.s32 %s9, 2
      // Predicated region
      $region41: #{_lambda_.5} parent=39 // pred_check
        %p986 = pneg %p106
      $region42: #{_lambda_.5} parent=39 // pred_check_branch
        %988 = sbr.rel (%p986) target = $region44
      $region43: #{_lambda_.5} parent=39 // pred_region
        %s989 = smul.u32 8, %s15
        %p990 = scmp.lt.s32.totalorder %s989, 15
        %s991 = scalar_select %p990, %s989, 15
        %s992 = smul.addr %s991, 4
        %s993 = scalar_lea.vmem %s3, %s992
      $region44: #{_lambda_.5} parent=39 // pred_fallthru
        _
    $region40: #{_lambda_.5} parent=5 // pred_fallthru
      _
  $region6: #{_lambda_.5} parent=0 // loop_footer
    %s13 = sadd.s32 1, %s9
  $region7: #{_lambda_.5} parent=0 // loop_footer_branch
    %8 = sbr.rel target = $region3
  $region8: #{_lambda_.5} parent=0 // loop_exit
    _

// kernel: _lambda_.6
$region0: #{_lambda_.6}
  #allocation0 [shape = 'u32[]', space=smem, size = 0x4, offset = 0x4, fixed_abs, tag = 'smem constant byte address 0x4 - core index']
  #allocation1 [shape = 'u32[144,128]{1,0:T(1,128)}', space=vmem, size = 0x12000, scoped, tag = 'internal scratch']
  %s0 = inlined_call_operand.vmem [shape: bf16[64,1024], index: 0, kind: input, shape index: {}]
  %s1 = inlined_call_operand.vmem [shape: bf16[1024,128], index: 1, kind: input, shape index: {}]
  %s2 = inlined_call_operand.vmem [shape: bf16[64,128], index: 2, kind: output, shape index: {0}]
  %s3 = inlined_call_operand.vmem [shape: f32[2,2,128], index: 3, kind: output, shape index: {1}]
  %4 = xla_tuple %s2, %s3
  %s5 = sld [smem:[#allocation0]]
  $region49: #{_lambda_.6} parent=0
    _
  %s7 = ssub.s32 1, %s5
  %s8 = scalar_select 0, %s7, %s5
  loop: start=0, step=1, limit=4
  $region2: #{_lambda_.6} parent=0 // loop_pre_header
    _
  $region3: #{_lambda_.6} parent=0 // loop_header
    %s10 = sphi 0, %s14
    %p11 = scmp.ge.s32.totalorder %s10, 4
    %s20 = sphi 0, %s22
    %s23 = sphi 0, %s20
    %s24 = sphi 0, %s23
    %s40 = sphi 0, %s24
    %s44 = sphi 0, %s44
    %s46 = sphi 0, %s44
    %s47 = sphi 0, %s46
    %s61 = sphi 0, %s47
    %s67 = sphi 0, %s69
    %s70 = sphi 0, %s67
    %s71 = sphi 0, %s70
    %s87 = sphi 0, %s71
    %s93 = sphi 0, %s95
    %s96 = sphi 0, %s93
    %s97 = sphi 0, %s96
    %s113 = sphi 0, %s97
  $region4: #{_lambda_.6} parent=0 // loop_header_branch
    %13 = sbr.rel (%p11) target = $region8
  $region5: #{_lambda_.6} parent=0 // loop_body
    %s15 = ssub.s32 %s10, 1
    %s16 = ssub.s32 %s10, 2
    %s17 = sadd.s32 %s10, 1
    %s18 = ssub.s32 %s10, %s17
    %p19 = scmp.eq.s32.totalorder %s18, 0
    %s21 = sadd.s32 %s20, 1
    %s22 = scalar_select %p19, %s20, %s21
    %p25 = pneg %p19
    %p26 = scmp.eq.s32.totalorder %s10, 1
    %p27 = por %p25, %p26
    %p28 = scmp.ne.s32.totalorder %s20, %s23
    %p29 = scmp.eq.s32.totalorder %s10, 0
    %p30 = por %p28, %p29
    %p31 = scmp.ne.s32.totalorder %s20, %s23
    %p32 = scmp.eq.s32.totalorder %s15, 1
    %p33 = por %p31, %p32
    %p34 = scmp.ne.s32.totalorder %s23, %s24
    %p35 = scmp.eq.s32.totalorder %s15, 0
    %p36 = por %p34, %p35
    %p37 = scmp.ne.s32.totalorder %s23, %s24
    %p38 = scmp.eq.s32.totalorder %s16, 1
    %p39 = por %p37, %p38
    %p41 = scmp.ne.s32.totalorder %s24, %s40
    %p42 = scmp.eq.s32.totalorder %s16, 0
    %p43 = por %p41, %p42
    %s45 = sadd.s32 %s44, 1
    %p48 = scmp.eq.s32.totalorder %s10, 1
    %p49 = scmp.ne.s32.totalorder %s44, %s46
    %p50 = scmp.eq.s32.totalorder %s10, 0
    %p51 = por %p49, %p50
    %p52 = scmp.ne.s32.totalorder %s44, %s46
    %p53 = scmp.eq.s32.totalorder %s15, 1
    %p54 = por %p52, %p53
    %p55 = scmp.ne.s32.totalorder %s46, %s47
    %p56 = scmp.eq.s32.totalorder %s15, 0
    %p57 = por %p55, %p56
    %p58 = scmp.ne.s32.totalorder %s46, %s47
    %p59 = scmp.eq.s32.totalorder %s16, 1
    %p60 = por %p58, %p59
    %p62 = scmp.ne.s32.totalorder %s47, %s61
    %p63 = scmp.eq.s32.totalorder %s16, 0
    %p64 = por %p62, %p63
    %s65 = ssub.s32 %s10, %s17
    %p66 = scmp.eq.s32.totalorder %s65, 0
    %s68 = sadd.s32 %s67, 1
    %s69 = scalar_select %p66, %s67, %s68
    %p72 = pneg %p66
    %p73 = scmp.eq.s32.totalorder %s10, 1
    %p74 = por %p72, %p73
    %p75 = scmp.ne.s32.totalorder %s67, %s70
    %p76 = scmp.eq.s32.totalorder %s10, 0
    %p77 = por %p75, %p76
    %p78 = scmp.ne.s32.totalorder %s67, %s70
    %p79 = scmp.eq.s32.totalorder %s15, 1
    %p80 = por %p78, %p79
    %p81 = scmp.ne.s32.totalorder %s70, %s71
    %p82 = scmp.eq.s32.totalorder %s15, 0
    %p83 = por %p81, %p82
    %p84 = scmp.ne.s32.totalorder %s70, %s71
    %p85 = scmp.eq.s32.totalorder %s16, 1
    %p86 = por %p84, %p85
    %p88 = scmp.ne.s32.totalorder %s71, %s87
    %p89 = scmp.eq.s32.totalorder %s16, 0
    %p90 = por %p88, %p89
    %s91 = ssub.s32 %s10, %s17
    %p92 = scmp.eq.s32.totalorder %s91, 0
    %s94 = sadd.s32 %s93, 1
    %s95 = scalar_select %p92, %s93, %s94
    %p98 = pneg %p92
    %p99 = scmp.eq.s32.totalorder %s10, 1
    %p100 = por %p98, %p99
    %p101 = scmp.ne.s32.totalorder %s93, %s96
    %p102 = scmp.eq.s32.totalorder %s10, 0
    %p103 = por %p101, %p102
    %p104 = scmp.ne.s32.totalorder %s93, %s96
    %p105 = scmp.eq.s32.totalorder %s15, 1
    %p106 = por %p104, %p105
    %p107 = scmp.ne.s32.totalorder %s96, %s97
    %p108 = scmp.eq.s32.totalorder %s15, 0
    %p109 = por %p107, %p108
    %p110 = scmp.ne.s32.totalorder %s96, %s97
    %p111 = scmp.eq.s32.totalorder %s16, 1
    %p112 = por %p110, %p111
    %p114 = scmp.ne.s32.totalorder %s97, %s113
    %p115 = scmp.eq.s32.totalorder %s16, 0
    %p116 = por %p114, %p115
    %p117 = scmp.le.s32.totalorder 1, %s10
    %p118 = scmp.lt.s32.totalorder %s10, 3
    %p119 = pnand %p117, %p118
    %p120 = pneg %p119
    // Predicated region
    $region9: #{_lambda_.6} parent=5 // pred_check
      _
    $region10: #{_lambda_.6} parent=5 // pred_check_branch
      %122 = sbr.rel (%p119) target = $region12
    $region11: #{_lambda_.6} parent=5 // pred_region
      %s123 = ssub.s32 %s10, 1
      // Predicated region
      $region13: #{_lambda_.6} parent=11 // pred_check
        %p124 = pneg %p57
      $region14: #{_lambda_.6} parent=11 // pred_check_branch
        %126 = sbr.rel (%p124) target = $region16
      $region15: #{_lambda_.6} parent=11 // pred_region
        _
      $region16: #{_lambda_.6} parent=11 // pred_fallthru
        _
    $region12: #{_lambda_.6} parent=5 // pred_fallthru
      _
    %p127 = scmp.lt.s32.totalorder %s10, 2
    // Predicated region
    $region17: #{_lambda_.6} parent=5 // pred_check
      %p128 = pneg %p127
    $region18: #{_lambda_.6} parent=5 // pred_check_branch
      %130 = sbr.rel (%p128) target = $region20
    $region19: #{_lambda_.6} parent=5 // pred_region
      // Predicated region
      $region21: #{_lambda_.6} parent=19 // pred_check
        %p131 = pneg %p30
      $region22: #{_lambda_.6} parent=19 // pred_check_branch
        %133 = sbr.rel (%p131) target = $region24
      $region23: #{_lambda_.6} parent=19 // pred_region
        %s134 = smul.u32 4, %s10
        %p135 = scmp.lt.s32.totalorder %s134, 7
        %s136 = scalar_select %p135, %s134, 7
        %s137 = smul.addr %s136, 8
        %s138 = smul.addr %s137, 4
        %s139 = scalar_lea.vmem %s0, %s138
        %s140 = smul.u32 4, %s10
      $region24: #{_lambda_.6} parent=19 // pred_fallthru
        _
    $region20: #{_lambda_.6} parent=5 // pred_fallthru
      _
    %p141 = scmp.le.s32.totalorder 1, %s10
    %p142 = scmp.lt.s32.totalorder %s10, 3
    %p143 = pnand %p141, %p142
    %p144 = pneg %p143
    // Predicated region
    $region25: #{_lambda_.6} parent=5 // pred_check
      _
    $region26: #{_lambda_.6} parent=5 // pred_check_branch
      %146 = sbr.rel (%p143) target = $region28
    $region27: #{_lambda_.6} parent=5 // pred_region
      %s147 = ssub.s32 %s10, 1
      %s148 = smul.u32 4, %s15
      %p149 = scmp.lt.s32.totalorder %s148, 7
      %s150 = scalar_select %p149, %s148, 7
      %s151 = smul.addr %s150, 8
      %s152 = smul.addr %s151, 4
      %s153 = scalar_lea.vmem %s0, %s152
      %p154 = pneg %p36
      %p155 = pneg %p33
      %p156 = pneg %p57
      %p157 = pneg %p54
      %p158 = pneg %p83
      %p159 = pneg %p80
      %s160 = smul.u32 4, %s15
      %p161 = scmp.lt.s32.totalorder %s160, 7
      %s162 = scalar_select %p161, %s160, 7
      %s163 = smul.addr %s162, 4
      %s164 = scalar_lea.vmem %s2, %s163
      %p165 = pneg %p109
      %p166 = pneg %p106
      %p167 = scmp.lt.s32.totalorder %s15, 1
      %s168 = scalar_select %p167, %s15, 1
      %s169 = smul.addr %s168, 2
      %s170 = scalar_lea.vmem %s3, %s169
      %s171 = smul.u32 4, %s15
      %p172 = scmp.lt.s32.totalorder %s171, 7
      %s173 = scalar_select %p172, %s171, 7
      %s174 = smul.addr %s173, 8
      %s175 = smul.addr %s174, 4
      %s176 = scalar_lea.vmem %s0, %s175
      %s177 = smul.u32 4, %s15
      %s178 = smul.u32 4, %s15
      %p179 = scmp.lt.s32.totalorder %s178, 7
      %s180 = scalar_select %p179, %s178, 7
      %s181 = smul.addr %s180, 4
      %s182 = scalar_lea.vmem %s2, %s181
      %s183 = smul.u32 4, %s15
      %p184 = scmp.lt.s32.totalorder %s15, 1
      %s185 = scalar_select %p184, %s15, 1
      %s186 = smul.addr %s185, 2
      %s187 = scalar_lea.vmem %s3, %s186
      %v189 = vld [vmem:[%s176] sm:$0xff]
      %v190 = vld [vmem:[%s176 + $0x8] sm:$0xff]
      %v191 = vld [vmem:[%s176 + $0x10] sm:$0xff]
      %v192 = vld [vmem:[%s176 + $0x18] sm:$0xff]
      %v193 = vld [vmem:[%s176 + $0x20] sm:$0xff]
      %v194 = vld [vmem:[%s176 + $0x28] sm:$0xff]
      %v195 = vld [vmem:[%s176 + $0x30] sm:$0xff]
      %v196 = vld [vmem:[%s176 + $0x38] sm:$0xff]
      %v197 = vld [vmem:[%s176 + $0x40] sm:$0xff]
      %v198 = vld [vmem:[%s176 + $0x48] sm:$0xff]
      %v199 = vld [vmem:[%s176 + $0x50] sm:$0xff]
      %v200 = vld [vmem:[%s176 + $0x58] sm:$0xff]
      %v201 = vld [vmem:[%s176 + $0x60] sm:$0xff]
      %v202 = vld [vmem:[%s176 + $0x68] sm:$0xff]
      %v203 = vld [vmem:[%s176 + $0x70] sm:$0xff]
      %v204 = vld [vmem:[%s176 + $0x78] sm:$0xff]
      %v205 = vld [vmem:[%s1] sm:$0xf]
      %v206 = vld [vmem:[%s1 + $0x4] sm:$0xf]
      %v207 = vld [vmem:[%s1 + $0x8] sm:$0xf]
      %v208 = vld [vmem:[%s1 + $0xc] sm:$0xf]
      %v209 = vld [vmem:[%s1 + $0x10] sm:$0xf]
      %v210 = vld [vmem:[%s1 + $0x14] sm:$0xf]
      %v211 = vld [vmem:[%s1 + $0x18] sm:$0xf]
      %v212 = vld [vmem:[%s1 + $0x1c] sm:$0xf]
      %v213 = vld [vmem:[%s1 + $0x20] sm:$0xf]
      %v214 = vld [vmem:[%s1 + $0x24] sm:$0xf]
      %v215 = vld [vmem:[%s1 + $0x28] sm:$0xf]
      %v216 = vld [vmem:[%s1 + $0x2c] sm:$0xf]
      %v217 = vld [vmem:[%s1 + $0x30] sm:$0xf]
      %v218 = vld [vmem:[%s1 + $0x34] sm:$0xf]
      %v219 = vld [vmem:[%s1 + $0x38] sm:$0xf]
      %v220 = vld [vmem:[%s1 + $0x3c] sm:$0xf]
      %v221 = vld [vmem:[%s1 + $0x40] sm:$0xf]
      %v222 = vld [vmem:[%s1 + $0x44] sm:$0xf]
      %v223 = vld [vmem:[%s1 + $0x48] sm:$0xf]
      %v224 = vld [vmem:[%s1 + $0x4c] sm:$0xf]
      %v225 = vld [vmem:[%s1 + $0x50] sm:$0xf]
      %v226 = vld [vmem:[%s1 + $0x54] sm:$0xf]
      %v227 = vld [vmem:[%s1 + $0x58] sm:$0xf]
      %v228 = vld [vmem:[%s1 + $0x5c] sm:$0xf]
      %v229 = vld [vmem:[%s1 + $0x60] sm:$0xf]
      %v230 = vld [vmem:[%s1 + $0x64] sm:$0xf]
      %v231 = vld [vmem:[%s1 + $0x68] sm:$0xf]
      %v232 = vld [vmem:[%s1 + $0x6c] sm:$0xf]
      %v233 = vld [vmem:[%s1 + $0x70] sm:$0xf]
      %v234 = vld [vmem:[%s1 + $0x74] sm:$0xf]
      %v235 = vld [vmem:[%s1 + $0x78] sm:$0xf]
      %v236 = vld [vmem:[%s1 + $0x7c] sm:$0xf]
      %v237 = vld [vmem:[%s1 + $0x80] sm:$0xf]
      %v238 = vld [vmem:[%s1 + $0x84] sm:$0xf]
      %v239 = vld [vmem:[%s1 + $0x88] sm:$0xf]
      %v240 = vld [vmem:[%s1 + $0x8c] sm:$0xf]
      %v241 = vld [vmem:[%s1 + $0x90] sm:$0xf]
      %v242 = vld [vmem:[%s1 + $0x94] sm:$0xf]
      %v243 = vld [vmem:[%s1 + $0x98] sm:$0xf]
      %v244 = vld [vmem:[%s1 + $0x9c] sm:$0xf]
      %v245 = vld [vmem:[%s1 + $0xa0] sm:$0xf]
      %v246 = vld [vmem:[%s1 + $0xa4] sm:$0xf]
      %v247 = vld [vmem:[%s1 + $0xa8] sm:$0xf]
      %v248 = vld [vmem:[%s1 + $0xac] sm:$0xf]
      %v249 = vld [vmem:[%s1 + $0xb0] sm:$0xf]
      %v250 = vld [vmem:[%s1 + $0xb4] sm:$0xf]
      %v251 = vld [vmem:[%s1 + $0xb8] sm:$0xf]
      %v252 = vld [vmem:[%s1 + $0xbc] sm:$0xf]
      %v253 = vld [vmem:[%s1 + $0xc0] sm:$0xf]
      %v254 = vld [vmem:[%s1 + $0xc4] sm:$0xf]
      %v255 = vld [vmem:[%s1 + $0xc8] sm:$0xf]
      %v256 = vld [vmem:[%s1 + $0xcc] sm:$0xf]
      %v257 = vld [vmem:[%s1 + $0xd0] sm:$0xf]
      %v258 = vld [vmem:[%s1 + $0xd4] sm:$0xf]
      %v259 = vld [vmem:[%s1 + $0xd8] sm:$0xf]
      %v260 = vld [vmem:[%s1 + $0xdc] sm:$0xf]
      %v261 = vld [vmem:[%s1 + $0xe0] sm:$0xf]
      %v262 = vld [vmem:[%s1 + $0xe4] sm:$0xf]
      %v263 = vld [vmem:[%s1 + $0xe8] sm:$0xf]
      %v264 = vld [vmem:[%s1 + $0xec] sm:$0xf]
      %v265 = vld [vmem:[%s1 + $0xf0] sm:$0xf]
      %v266 = vld [vmem:[%s1 + $0xf4] sm:$0xf]
      %v267 = vld [vmem:[%s1 + $0xf8] sm:$0xf]
      %v268 = vld [vmem:[%s1 + $0xfc] sm:$0xf]
      %v269 = vld [vmem:[%s1 + $0x100] sm:$0xf]
      %v270 = vld [vmem:[%s1 + $0x104] sm:$0xf]
      %v271 = vld [vmem:[%s1 + $0x108] sm:$0xf]
      %v272 = vld [vmem:[%s1 + $0x10c] sm:$0xf]
      %v273 = vld [vmem:[%s1 + $0x110] sm:$0xf]
      %v274 = vld [vmem:[%s1 + $0x114] sm:$0xf]
      %v275 = vld [vmem:[%s1 + $0x118] sm:$0xf]
      %v276 = vld [vmem:[%s1 + $0x11c] sm:$0xf]
      %v277 = vld [vmem:[%s1 + $0x120] sm:$0xf]
      %v278 = vld [vmem:[%s1 + $0x124] sm:$0xf]
      %v279 = vld [vmem:[%s1 + $0x128] sm:$0xf]
      %v280 = vld [vmem:[%s1 + $0x12c] sm:$0xf]
      %v281 = vld [vmem:[%s1 + $0x130] sm:$0xf]
      %v282 = vld [vmem:[%s1 + $0x134] sm:$0xf]
      %v283 = vld [vmem:[%s1 + $0x138] sm:$0xf]
      %v284 = vld [vmem:[%s1 + $0x13c] sm:$0xf]
      %v285 = vld [vmem:[%s1 + $0x140] sm:$0xf]
      %v286 = vld [vmem:[%s1 + $0x144] sm:$0xf]
      %v287 = vld [vmem:[%s1 + $0x148] sm:$0xf]
      %v288 = vld [vmem:[%s1 + $0x14c] sm:$0xf]
      %v289 = vld [vmem:[%s1 + $0x150] sm:$0xf]
      %v290 = vld [vmem:[%s1 + $0x154] sm:$0xf]
      %v291 = vld [vmem:[%s1 + $0x158] sm:$0xf]
      %v292 = vld [vmem:[%s1 + $0x15c] sm:$0xf]
      %v293 = vld [vmem:[%s1 + $0x160] sm:$0xf]
      %v294 = vld [vmem:[%s1 + $0x164] sm:$0xf]
      %v295 = vld [vmem:[%s1 + $0x168] sm:$0xf]
      %v296 = vld [vmem:[%s1 + $0x16c] sm:$0xf]
      %v297 = vld [vmem:[%s1 + $0x170] sm:$0xf]
      %v298 = vld [vmem:[%s1 + $0x174] sm:$0xf]
      %v299 = vld [vmem:[%s1 + $0x178] sm:$0xf]
      %v300 = vld [vmem:[%s1 + $0x17c] sm:$0xf]
      %v301 = vld [vmem:[%s1 + $0x180] sm:$0xf]
      %v302 = vld [vmem:[%s1 + $0x184] sm:$0xf]
      %v303 = vld [vmem:[%s1 + $0x188] sm:$0xf]
      %v304 = vld [vmem:[%s1 + $0x18c] sm:$0xf]
      %v305 = vld [vmem:[%s1 + $0x190] sm:$0xf]
      %v306 = vld [vmem:[%s1 + $0x194] sm:$0xf]
      %v307 = vld [vmem:[%s1 + $0x198] sm:$0xf]
      %v308 = vld [vmem:[%s1 + $0x19c] sm:$0xf]
      %v309 = vld [vmem:[%s1 + $0x1a0] sm:$0xf]
      %v310 = vld [vmem:[%s1 + $0x1a4] sm:$0xf]
      %v311 = vld [vmem:[%s1 + $0x1a8] sm:$0xf]
      %v312 = vld [vmem:[%s1 + $0x1ac] sm:$0xf]
      %v313 = vld [vmem:[%s1 + $0x1b0] sm:$0xf]
      %v314 = vld [vmem:[%s1 + $0x1b4] sm:$0xf]
      %v315 = vld [vmem:[%s1 + $0x1b8] sm:$0xf]
      %v316 = vld [vmem:[%s1 + $0x1bc] sm:$0xf]
      %v317 = vld [vmem:[%s1 + $0x1c0] sm:$0xf]
      %v318 = vld [vmem:[%s1 + $0x1c4] sm:$0xf]
      %v319 = vld [vmem:[%s1 + $0x1c8] sm:$0xf]
      %v320 = vld [vmem:[%s1 + $0x1cc] sm:$0xf]
      %v321 = vld [vmem:[%s1 + $0x1d0] sm:$0xf]
      %v322 = vld [vmem:[%s1 + $0x1d4] sm:$0xf]
      %v323 = vld [vmem:[%s1 + $0x1d8] sm:$0xf]
      %v324 = vld [vmem:[%s1 + $0x1dc] sm:$0xf]
      %v325 = vld [vmem:[%s1 + $0x1e0] sm:$0xf]
      %v326 = vld [vmem:[%s1 + $0x1e4] sm:$0xf]
      %v327 = vld [vmem:[%s1 + $0x1e8] sm:$0xf]
      %v328 = vld [vmem:[%s1 + $0x1ec] sm:$0xf]
      %v329 = vld [vmem:[%s1 + $0x1f0] sm:$0xf]
      %v330 = vld [vmem:[%s1 + $0x1f4] sm:$0xf]
      %v331 = vld [vmem:[%s1 + $0x1f8] sm:$0xf]
      %v332 = vld [vmem:[%s1 + $0x1fc] sm:$0xf]
      %v349 = vunpack.c.l.b16 %v189
      %v350 = vunpack.c.h.b16 %v189
      %v351 = vunpack.c.l.b16 %v190
      %v352 = vunpack.c.h.b16 %v190
      %v353 = vunpack.c.l.b16 %v191
      %v354 = vunpack.c.h.b16 %v191
      %v355 = vunpack.c.l.b16 %v192
      %v356 = vunpack.c.h.b16 %v192
      %v357 = vunpack.c.l.b16 %v193
      %v358 = vunpack.c.h.b16 %v193
      %v359 = vunpack.c.l.b16 %v194
      %v360 = vunpack.c.h.b16 %v194
      %v361 = vunpack.c.l.b16 %v195
      %v362 = vunpack.c.h.b16 %v195
      %v363 = vunpack.c.l.b16 %v196
      %v364 = vunpack.c.h.b16 %v196
      %v365 = vunpack.c.l.b16 %v197
      %v366 = vunpack.c.h.b16 %v197
      %v367 = vunpack.c.l.b16 %v198
      %v368 = vunpack.c.h.b16 %v198
      %v369 = vunpack.c.l.b16 %v199
      %v370 = vunpack.c.h.b16 %v199
      %v371 = vunpack.c.l.b16 %v200
      %v372 = vunpack.c.h.b16 %v200
      %v373 = vunpack.c.l.b16 %v201
      %v374 = vunpack.c.h.b16 %v201
      %v375 = vunpack.c.l.b16 %v202
      %v376 = vunpack.c.h.b16 %v202
      %v377 = vunpack.c.l.b16 %v203
      %v378 = vunpack.c.h.b16 %v203
      %v379 = vunpack.c.l.b16 %v204
      %v380 = vunpack.c.h.b16 %v204
      %v381 = vpack.c.b16 %v357, %v349
      %v382 = vpack.c.b16 %v358, %v350
      %v383 = vpack.c.b16 %v359, %v351
      %v384 = vpack.c.b16 %v360, %v352
      %v385 = vpack.c.b16 %v361, %v353
      %v386 = vpack.c.b16 %v362, %v354
      %v387 = vpack.c.b16 %v363, %v355
      %v388 = vpack.c.b16 %v364, %v356
      %v389 = vpack.c.b16 %v373, %v365
      %v390 = vpack.c.b16 %v374, %v366
      %v391 = vpack.c.b16 %v375, %v367
      %v392 = vpack.c.b16 %v376, %v368
      %v393 = vpack.c.b16 %v377, %v369
      %v394 = vpack.c.b16 %v378, %v370
      %v395 = vpack.c.b16 %v379, %v371
      %v396 = vpack.c.b16 %v380, %v372
      %v541 = vunpack.c.l.b16 %v205
      %v542 = vunpack.c.l.b16 %v206
      %v543 = vunpack.c.l.b16 %v207
      %v544 = vunpack.c.l.b16 %v208
      %v545 = vunpack.c.l.b16 %v209
      %v546 = vunpack.c.l.b16 %v210
      %v547 = vunpack.c.l.b16 %v211
      %v548 = vunpack.c.l.b16 %v212
      %v549 = vunpack.c.l.b16 %v213
      %v550 = vunpack.c.l.b16 %v214
      %v551 = vunpack.c.l.b16 %v215
      %v552 = vunpack.c.l.b16 %v216
      %v553 = vunpack.c.l.b16 %v217
      %v554 = vunpack.c.l.b16 %v218
      %v555 = vunpack.c.l.b16 %v219
      %v556 = vunpack.c.l.b16 %v220
      %v557 = vunpack.c.l.b16 %v221
      %v558 = vunpack.c.l.b16 %v222
      %v559 = vunpack.c.l.b16 %v223
      %v560 = vunpack.c.l.b16 %v224
      %v561 = vunpack.c.l.b16 %v225
      %v562 = vunpack.c.l.b16 %v226
      %v563 = vunpack.c.l.b16 %v227
      %v564 = vunpack.c.l.b16 %v228
      %v565 = vunpack.c.l.b16 %v229
      %v566 = vunpack.c.l.b16 %v230
      %v567 = vunpack.c.l.b16 %v231
      %v568 = vunpack.c.l.b16 %v232
      %v569 = vunpack.c.l.b16 %v233
      %v570 = vunpack.c.l.b16 %v234
      %v571 = vunpack.c.l.b16 %v235
      %v572 = vunpack.c.l.b16 %v236
      %v573 = vunpack.c.l.b16 %v237
      %v574 = vunpack.c.l.b16 %v238
      %v575 = vunpack.c.l.b16 %v239
      %v576 = vunpack.c.l.b16 %v240
      %v577 = vunpack.c.l.b16 %v241
      %v578 = vunpack.c.l.b16 %v242
      %v579 = vunpack.c.l.b16 %v243
      %v580 = vunpack.c.l.b16 %v244
      %v581 = vunpack.c.l.b16 %v245
      %v582 = vunpack.c.l.b16 %v246
      %v583 = vunpack.c.l.b16 %v247
      %v584 = vunpack.c.l.b16 %v248
      %v585 = vunpack.c.l.b16 %v249
      %v586 = vunpack.c.l.b16 %v250
      %v587 = vunpack.c.l.b16 %v251
      %v588 = vunpack.c.l.b16 %v252
      %v589 = vunpack.c.l.b16 %v253
      %v590 = vunpack.c.l.b16 %v254
      %v591 = vunpack.c.l.b16 %v255
      %v592 = vunpack.c.l.b16 %v256
      %v593 = vunpack.c.l.b16 %v257
      %v594 = vunpack.c.l.b16 %v258
      %v595 = vunpack.c.l.b16 %v259
      %v596 = vunpack.c.l.b16 %v260
      %v597 = vunpack.c.l.b16 %v261
      %v598 = vunpack.c.l.b16 %v262
      %v599 = vunpack.c.l.b16 %v263
      %v600 = vunpack.c.l.b16 %v264
      %v601 = vunpack.c.l.b16 %v265
      %v602 = vunpack.c.l.b16 %v266
      %v603 = vunpack.c.l.b16 %v267
      %v604 = vunpack.c.l.b16 %v268
      %v605 = vunpack.c.l.b16 %v269
      %v606 = vunpack.c.l.b16 %v270
      %v607 = vunpack.c.l.b16 %v271
      %v608 = vunpack.c.l.b16 %v272
      %v609 = vunpack.c.l.b16 %v273
      %v610 = vunpack.c.l.b16 %v274
      %v611 = vunpack.c.l.b16 %v275
      %v612 = vunpack.c.l.b16 %v276
      %v613 = vunpack.c.l.b16 %v277
      %v614 = vunpack.c.l.b16 %v278
      %v615 = vunpack.c.l.b16 %v279
      %v616 = vunpack.c.l.b16 %v280
      %v617 = vunpack.c.l.b16 %v281
      %v618 = vunpack.c.l.b16 %v282
      %v619 = vunpack.c.l.b16 %v283
      %v620 = vunpack.c.l.b16 %v284
      %v621 = vunpack.c.l.b16 %v285
      %v622 = vunpack.c.l.b16 %v286
      %v623 = vunpack.c.l.b16 %v287
      %v624 = vunpack.c.l.b16 %v288
      %v625 = vunpack.c.l.b16 %v289
      %v626 = vunpack.c.l.b16 %v290
      %v627 = vunpack.c.l.b16 %v291
      %v628 = vunpack.c.l.b16 %v292
      %v629 = vunpack.c.l.b16 %v293
      %v630 = vunpack.c.l.b16 %v294
      %v631 = vunpack.c.l.b16 %v295
      %v632 = vunpack.c.l.b16 %v296
      %v633 = vunpack.c.l.b16 %v297
      %v634 = vunpack.c.l.b16 %v298
      %v635 = vunpack.c.l.b16 %v299
      %v636 = vunpack.c.l.b16 %v300
      %v637 = vunpack.c.l.b16 %v301
      %v638 = vunpack.c.l.b16 %v302
      %v639 = vunpack.c.l.b16 %v303
      %v640 = vunpack.c.l.b16 %v304
      %v641 = vunpack.c.l.b16 %v305
      %v642 = vunpack.c.l.b16 %v306
      %v643 = vunpack.c.l.b16 %v307
      %v644 = vunpack.c.l.b16 %v308
      %v645 = vunpack.c.l.b16 %v309
      %v646 = vunpack.c.l.b16 %v310
      %v647 = vunpack.c.l.b16 %v311
      %v648 = vunpack.c.l.b16 %v312
      %v649 = vunpack.c.l.b16 %v313
      %v650 = vunpack.c.l.b16 %v314
      %v651 = vunpack.c.l.b16 %v315
      %v652 = vunpack.c.l.b16 %v316
      %v653 = vunpack.c.l.b16 %v317
      %v654 = vunpack.c.l.b16 %v318
      %v655 = vunpack.c.l.b16 %v319
      %v656 = vunpack.c.l.b16 %v320
      %v657 = vunpack.c.l.b16 %v321
      %v658 = vunpack.c.l.b16 %v322
      %v659 = vunpack.c.l.b16 %v323
      %v660 = vunpack.c.l.b16 %v324
      %v661 = vunpack.c.l.b16 %v325
      %v662 = vunpack.c.l.b16 %v326
      %v663 = vunpack.c.l.b16 %v327
      %v664 = vunpack.c.l.b16 %v328
      %v665 = vunpack.c.l.b16 %v329
      %v666 = vunpack.c.l.b16 %v330
      %v667 = vunpack.c.l.b16 %v331
      %v668 = vunpack.c.l.b16 %v332
      %v669 = vpack.c.b16 %v542, %v541
      %v670 = vpack.c.b16 %v544, %v543
      %v671 = vpack.c.b16 %v546, %v545
      %v672 = vpack.c.b16 %v548, %v547
      %v673 = vpack.c.b16 %v550, %v549
      %v674 = vpack.c.b16 %v552, %v551
      %v675 = vpack.c.b16 %v554, %v553
      %v676 = vpack.c.b16 %v556, %v555
      %v677 = vpack.c.b16 %v558, %v557
      %v678 = vpack.c.b16 %v560, %v559
      %v679 = vpack.c.b16 %v562, %v561
      %v680 = vpack.c.b16 %v564, %v563
      %v681 = vpack.c.b16 %v566, %v565
      %v682 = vpack.c.b16 %v568, %v567
      %v683 = vpack.c.b16 %v570, %v569
      %v684 = vpack.c.b16 %v572, %v571
      %v685 = vpack.c.b16 %v574, %v573
      %v686 = vpack.c.b16 %v576, %v575
      %v687 = vpack.c.b16 %v578, %v577
      %v688 = vpack.c.b16 %v580, %v579
      %v689 = vpack.c.b16 %v582, %v581
      %v690 = vpack.c.b16 %v584, %v583
      %v691 = vpack.c.b16 %v586, %v585
      %v692 = vpack.c.b16 %v588, %v587
      %v693 = vpack.c.b16 %v590, %v589
      %v694 = vpack.c.b16 %v592, %v591
      %v695 = vpack.c.b16 %v594, %v593
      %v696 = vpack.c.b16 %v596, %v595
      %v697 = vpack.c.b16 %v598, %v597
      %v698 = vpack.c.b16 %v600, %v599
      %v699 = vpack.c.b16 %v602, %v601
      %v700 = vpack.c.b16 %v604, %v603
      %v701 = vpack.c.b16 %v606, %v605
      %v702 = vpack.c.b16 %v608, %v607
      %v703 = vpack.c.b16 %v610, %v609
      %v704 = vpack.c.b16 %v612, %v611
      %v705 = vpack.c.b16 %v614, %v613
      %v706 = vpack.c.b16 %v616, %v615
      %v707 = vpack.c.b16 %v618, %v617
      %v708 = vpack.c.b16 %v620, %v619
      %v709 = vpack.c.b16 %v622, %v621
      %v710 = vpack.c.b16 %v624, %v623
      %v711 = vpack.c.b16 %v626, %v625
      %v712 = vpack.c.b16 %v628, %v627
      %v713 = vpack.c.b16 %v630, %v629
      %v714 = vpack.c.b16 %v632, %v631
      %v715 = vpack.c.b16 %v634, %v633
      %v716 = vpack.c.b16 %v636, %v635
      %v717 = vpack.c.b16 %v638, %v637
      %v718 = vpack.c.b16 %v640, %v639
      %v719 = vpack.c.b16 %v642, %v641
      %v720 = vpack.c.b16 %v644, %v643
      %v721 = vpack.c.b16 %v646, %v645
      %v722 = vpack.c.b16 %v648, %v647
      %v723 = vpack.c.b16 %v650, %v649
      %v724 = vpack.c.b16 %v652, %v651
      %v725 = vpack.c.b16 %v654, %v653
      %v726 = vpack.c.b16 %v656, %v655
      %v727 = vpack.c.b16 %v658, %v657
      %v728 = vpack.c.b16 %v660, %v659
      %v729 = vpack.c.b16 %v662, %v661
      %v730 = vpack.c.b16 %v664, %v663
      %v731 = vpack.c.b16 %v666, %v665
      %v732 = vpack.c.b16 %v668, %v667
      %797 = vmatprep.subr.bf16.mxu0 0
      %798 = vmatpush1.bf16.msra.mxu0 %v669
      %799 = vmatprep.subr.bf16.mxu0 0
      %800 = vmatpush1.bf16.msra.mxu0 %v670
      %801 = vmatprep.subr.bf16.mxu0 0
      %802 = vmatpush1.bf16.msra.mxu0 %v671
      %803 = vmatprep.subr.bf16.mxu0 0
      %804 = vmatpush1.bf16.msra.mxu0 %v672
      %805 = vmatprep.subr.bf16.mxu0 0
      %806 = vmatpush1.bf16.msra.mxu0 %v673
      %807 = vmatprep.subr.bf16.mxu0 0
      %808 = vmatpush1.bf16.msra.mxu0 %v674
      %809 = vmatprep.subr.bf16.mxu0 0
      %810 = vmatpush1.bf16.msra.mxu0 %v675
      %811 = vmatprep.subr.bf16.mxu0 0
      %812 = vmatpush1.bf16.msra.mxu0 %v676
      %813 = vmatprep.subr.bf16.mxu0 0
      %814 = vmatpush1.bf16.msra.mxu0 %v677
      %815 = vmatprep.subr.bf16.mxu0 0
      %816 = vmatpush1.bf16.msra.mxu0 %v678
      %817 = vmatprep.subr.bf16.mxu0 0
      %818 = vmatpush1.bf16.msra.mxu0 %v679
      %819 = vmatprep.subr.bf16.mxu0 0
      %820 = vmatpush1.bf16.msra.mxu0 %v680
      %821 = vmatprep.subr.bf16.mxu0 0
      %822 = vmatpush1.bf16.msra.mxu0 %v681
      %823 = vmatprep.subr.bf16.mxu0 0
      %824 = vmatpush1.bf16.msra.mxu0 %v682
      %825 = vmatprep.subr.bf16.mxu0 0
      %826 = vmatpush1.bf16.msra.mxu0 %v683
      %827 = vmatprep.subr.bf16.mxu0 0
      %828 = vmatpush1.bf16.msra.mxu0 %v684
      %829 = vmatprep.mubr.bf16.mxu0 %v382
      %830 = vmatmul.mubr.bf16.gmra.mrb[0].mxu0 %v381
      %v831 = vpop.f32.mrb[0].mxu0
      %v832 = vadd.f32 0.0, %v831
      %v833 = vpop.f32.mrb[0].mxu0
      %v834 = vpop.f32.mrb[0].mxu0
      %v835 = vadd.f32 0.0, %v834
      %v836 = vpop.f32.mrb[0].mxu0
      %837 = vmatprep.mubr.bf16.mxu0 %v390
      %838 = vmatmul.mubr.bf16.gmra.mrb[0].mxu0 %v389
      %v839 = vpop.f32.mrb[0].mxu0
      %v840 = vadd.f32 0.0, %v839
      %v841 = vpop.f32.mrb[0].mxu0
      %v842 = vpop.f32.mrb[0].mxu0
      %v843 = vadd.f32 0.0, %v842
      %v844 = vpop.f32.mrb[0].mxu0
      %845 = vdwg.mxu0
      %846 = vmatprep.subr.bf16.mxu0 0
      %847 = vmatpush1.bf16.msra.mxu0 %v685
      %848 = vmatprep.subr.bf16.mxu0 0
      %849 = vmatpush1.bf16.msra.mxu0 %v686
      %850 = vmatprep.subr.bf16.mxu0 0
      %851 = vmatpush1.bf16.msra.mxu0 %v687
      %852 = vmatprep.subr.bf16.mxu0 0
      %853 = vmatpush1.bf16.msra.mxu0 %v688
      %854 = vmatprep.subr.bf16.mxu0 0
      %855 = vmatpush1.bf16.msra.mxu0 %v689
      %856 = vmatprep.subr.bf16.mxu0 0
      %857 = vmatpush1.bf16.msra.mxu0 %v690
      %858 = vmatprep.subr.bf16.mxu0 0
      %859 = vmatpush1.bf16.msra.mxu0 %v691
      %860 = vmatprep.subr.bf16.mxu0 0
      %861 = vmatpush1.bf16.msra.mxu0 %v692
      %862 = vmatprep.subr.bf16.mxu0 0
      %863 = vmatpush1.bf16.msra.mxu0 %v693
      %864 = vmatprep.subr.bf16.mxu0 0
      %865 = vmatpush1.bf16.msra.mxu0 %v694
      %866 = vmatprep.subr.bf16.mxu0 0
      %867 = vmatpush1.bf16.msra.mxu0 %v695
      %868 = vmatprep.subr.bf16.mxu0 0
      %869 = vmatpush1.bf16.msra.mxu0 %v696
      %870 = vmatprep.subr.bf16.mxu0 0
      %871 = vmatpush1.bf16.msra.mxu0 %v697
      %872 = vmatprep.subr.bf16.mxu0 0
      %873 = vmatpush1.bf16.msra.mxu0 %v698
      %874 = vmatprep.subr.bf16.mxu0 0
      %875 = vmatpush1.bf16.msra.mxu0 %v699
      %876 = vmatprep.subr.bf16.mxu0 0
      %877 = vmatpush1.bf16.msra.mxu0 %v700
      %878 = vmatprep.mubr.bf16.mxu0 %v384
      %879 = vmatmul.mubr.bf16.gmra.mrb[0].mxu0 %v383
      %v880 = vpop.f32.mrb[0].mxu0
      %v881 = vadd.f32 %v832, %v880
      %v882 = vpop.f32.mrb[0].mxu0
      %v883 = vpop.f32.mrb[0].mxu0
      %v884 = vadd.f32 %v835, %v883
      %v885 = vpop.f32.mrb[0].mxu0
      %886 = vmatprep.mubr.bf16.mxu0 %v392
      %887 = vmatmul.mubr.bf16.gmra.mrb[0].mxu0 %v391
      %v888 = vpop.f32.mrb[0].mxu0
      %v889 = vadd.f32 %v840, %v888
      %v890 = vpop.f32.mrb[0].mxu0
      %v891 = vpop.f32.mrb[0].mxu0
      %v892 = vadd.f32 %v843, %v891
      %v893 = vpop.f32.mrb[0].mxu0
      %894 = vdwg.mxu0
      %895 = vmatprep.subr.bf16.mxu0 0
      %896 = vmatpush1.bf16.msra.mxu0 %v701
      %897 = vmatprep.subr.bf16.mxu0 0
      %898 = vmatpush1.bf16.msra.mxu0 %v702
      %899 = vmatprep.subr.bf16.mxu0 0
      %900 = vmatpush1.bf16.msra.mxu0 %v703
      %901 = vmatprep.subr.bf16.mxu0 0
      %902 = vmatpush1.bf16.msra.mxu0 %v704
      %903 = vmatprep.subr.bf16.mxu0 0
      %904 = vmatpush1.bf16.msra.mxu0 %v705
      %905 = vmatprep.subr.bf16.mxu0 0
      %906 = vmatpush1.bf16.msra.mxu0 %v706
      %907 = vmatprep.subr.bf16.mxu0 0
      %908 = vmatpush1.bf16.msra.mxu0 %v707
      %909 = vmatprep.subr.bf16.mxu0 0
      %910 = vmatpush1.bf16.msra.mxu0 %v708
      %911 = vmatprep.subr.bf16.mxu0 0
      %912 = vmatpush1.bf16.msra.mxu0 %v709
      %913 = vmatprep.subr.bf16.mxu0 0
      %914 = vmatpush1.bf16.msra.mxu0 %v710
      %915 = vmatprep.subr.bf16.mxu0 0
      %916 = vmatpush1.bf16.msra.mxu0 %v711
      %917 = vmatprep.subr.bf16.mxu0 0
      %918 = vmatpush1.bf16.msra.mxu0 %v712
      %919 = vmatprep.subr.bf16.mxu0 0
      %920 = vmatpush1.bf16.msra.mxu0 %v713
      %921 = vmatprep.subr.bf16.mxu0 0
      %922 = vmatpush1.bf16.msra.mxu0 %v714
      %923 = vmatprep.subr.bf16.mxu0 0
      %924 = vmatpush1.bf16.msra.mxu0 %v715
      %925 = vmatprep.subr.bf16.mxu0 0
      %926 = vmatpush1.bf16.msra.mxu0 %v716
      %927 = vmatprep.mubr.bf16.mxu0 %v386
      %928 = vmatmul.mubr.bf16.gmra.mrb[0].mxu0 %v385
      %v929 = vpop.f32.mrb[0].mxu0
      %v930 = vadd.f32 %v881, %v929
      %v931 = vpop.f32.mrb[0].mxu0
      %v932 = vpop.f32.mrb[0].mxu0
      %v933 = vadd.f32 %v884, %v932
      %v934 = vpop.f32.mrb[0].mxu0
      %935 = vmatprep.mubr.bf16.mxu0 %v394
      %936 = vmatmul.mubr.bf16.gmra.mrb[0].mxu0 %v393
      %v937 = vpop.f32.mrb[0].mxu0
      %v938 = vadd.f32 %v889, %v937
      %v939 = vpop.f32.mrb[0].mxu0
      %v940 = vpop.f32.mrb[0].mxu0
      %v941 = vadd.f32 %v892, %v940
      %v942 = vpop.f32.mrb[0].mxu0
      %943 = vdwg.mxu0
      %944 = vmatprep.subr.bf16.mxu0 0
      %945 = vmatpush1.bf16.msra.mxu0 %v717
      %946 = vmatprep.subr.bf16.mxu0 0
      %947 = vmatpush1.bf16.msra.mxu0 %v718
      %948 = vmatprep.subr.bf16.mxu0 0
      %949 = vmatpush1.bf16.msra.mxu0 %v719
      %950 = vmatprep.subr.bf16.mxu0 0
      %951 = vmatpush1.bf16.msra.mxu0 %v720
      %952 = vmatprep.subr.bf16.mxu0 0
      %953 = vmatpush1.bf16.msra.mxu0 %v721
      %954 = vmatprep.subr.bf16.mxu0 0
      %955 = vmatpush1.bf16.msra.mxu0 %v722
      %956 = vmatprep.subr.bf16.mxu0 0
      %957 = vmatpush1.bf16.msra.mxu0 %v723
      %958 = vmatprep.subr.bf16.mxu0 0
      %959 = vmatpush1.bf16.msra.mxu0 %v724
      %960 = vmatprep.subr.bf16.mxu0 0
      %961 = vmatpush1.bf16.msra.mxu0 %v725
      %962 = vmatprep.subr.bf16.mxu0 0
      %963 = vmatpush1.bf16.msra.mxu0 %v726
      %964 = vmatprep.subr.bf16.mxu0 0
      %965 = vmatpush1.bf16.msra.mxu0 %v727
      %966 = vmatprep.subr.bf16.mxu0 0
      %967 = vmatpush1.bf16.msra.mxu0 %v728
      %968 = vmatprep.subr.bf16.mxu0 0
      %969 = vmatpush1.bf16.msra.mxu0 %v729
      %970 = vmatprep.subr.bf16.mxu0 0
      %971 = vmatpush1.bf16.msra.mxu0 %v730
      %972 = vmatprep.subr.bf16.mxu0 0
      %973 = vmatpush1.bf16.msra.mxu0 %v731
      %974 = vmatprep.subr.bf16.mxu0 0
      %975 = vmatpush1.bf16.msra.mxu0 %v732
      %976 = vmatprep.mubr.bf16.mxu0 %v388
      %977 = vmatmul.mubr.bf16.gmra.mrb[0].mxu0 %v387
      %v978 = vpop.f32.mrb[0].mxu0
      %v979 = vadd.f32 %v930, %v978
      %v980 = vpop.f32.mrb[0].mxu0
      %v981 = vpop.f32.mrb[0].mxu0
      %v982 = vadd.f32 %v933, %v981
      %v983 = vpop.f32.mrb[0].mxu0
      %984 = vmatprep.mubr.bf16.mxu0 %v396
      %985 = vmatmul.mubr.bf16.gmra.mrb[0].mxu0 %v395
      %v986 = vpop.f32.mrb[0].mxu0
      %v987 = vadd.f32 %v938, %v986
      %v988 = vpop.f32.mrb[0].mxu0
      %v989 = vpop.f32.mrb[0].mxu0
      %v990 = vadd.f32 %v941, %v989
      %v991 = vpop.f32.mrb[0].mxu0
      %992 = vdwg.mxu0
      %v993 = vpack.c.bf16 %v982, %v979
      %v994 = vpack.c.bf16 %v990, %v987
      %v997 = vunpack.c.l.b16 %v993
      %v998 = vunpack.c.h.b16 %v993
      %v999 = vunpack.c.l.b16 %v994
      %v1000 = vunpack.c.h.b16 %v994
      %v1001 = vpack.c.b16 %v997, %v997
      %v1002 = vpack.c.b16 %v998, %v998
      %v1003 = vpack.c.b16 %v999, %v999
      %v1004 = vpack.c.b16 %v1000, %v1000
      %1009 = vst [vmem:[%s182] sm:$0xf] %v1001
      %1010 = vst [vmem:[%s182 + $0x4] sm:$0xf] %v1002
      %1011 = vst [vmem:[%s182 + $0x8] sm:$0xf] %v1003
      %1012 = vst [vmem:[%s182 + $0xc] sm:$0xf] %v1004
      %v1013 = vadd.f32 %v979, %v982
      %v1014 = vadd.f32 %v1013, %v987
      %v1015 = vadd.f32 %v1014, %v990
      %v1016 = vrot.slane %v1015, 4
      %v1017 = vadd.f32 %v1015, %v1016
      %v1018 = vrot.slane %v1017, 2
      %v1019 = vadd.f32 %v1017, %v1018
      %v1020 = vrot.slane %v1019, 1
      %v1021 = vadd.f32 %v1019, %v1020
      %v1022 = vmul.f32 %v979, %v979
      %v1023 = vmul.f32 %v982, %v982
      %v1024 = vmul.f32 %v987, %v987
      %v1025 = vmul.f32 %v990, %v990
      %v1026 = vadd.f32 %v1022, %v1023
      %v1027 = vadd.f32 %v1026, %v1024
      %v1028 = vadd.f32 %v1027, %v1025
      %v1029 = vrot.slane %v1028, 4
      %v1030 = vadd.f32 %v1028, %v1029
      %v1031 = vrot.slane %v1030, 2
      %v1032 = vadd.f32 %v1030, %v1031
      %v1033 = vrot.slane %v1032, 1
      %v1034 = vadd.f32 %v1032, %v1033
      %vm1035 = vcmask 1040384
      %v1036 = vsel %vm1035, %v1021, %v1034
      %1037 = vst [vmem:[%s187] sm:$0x3] %v1036
      %s1038 = smul.u32 4, %s15
      %p1039 = scmp.lt.s32.totalorder %s1038, 7
      %s1040 = scalar_select %p1039, %s1038, 7
      %s1041 = smul.addr %s1040, 4
      %s1042 = scalar_lea.vmem %s2, %s1041
      %p1043 = scmp.lt.s32.totalorder %s15, 1
      %s1044 = scalar_select %p1043, %s15, 1
      %s1045 = smul.addr %s1044, 2
      %s1046 = scalar_lea.vmem %s3, %s1045
      // Predicated region
      $region29: #{_lambda_.6} parent=27 // pred_check
        %p1047 = pneg %p80
      $region30: #{_lambda_.6} parent=27 // pred_check_branch
        %1049 = sbr.rel (%p1047) target = $region32
      $region31: #{_lambda_.6} parent=27 // pred_region
        %s1050 = smul.u32 4, %s15
      $region32: #{_lambda_.6} parent=27 // pred_fallthru
        _
      // Predicated region
      $region33: #{_lambda_.6} parent=27 // pred_check
        %p1051 = pneg %p106
      $region34: #{_lambda_.6} parent=27 // pred_check_branch
        %1053 = sbr.rel (%p1051) target = $region36
      $region35: #{_lambda_.6} parent=27 // pred_region
        _
      $region36: #{_lambda_.6} parent=27 // pred_fallthru
        _
    $region28: #{_lambda_.6} parent=5 // pred_fallthru
      _
    %p1054 = scmp.le.s32.totalorder 2, %s10
    // Predicated region
    $region37: #{_lambda_.6} parent=5 // pred_check
      %p1055 = pneg %p1054
    $region38: #{_lambda_.6} parent=5 // pred_check_branch
      %1057 = sbr.rel (%p1055) target = $region40
    $region39: #{_lambda_.6} parent=5 // pred_region
      %s1058 = ssub.s32 %s10, 2
      // Predicated region
      $region41: #{_lambda_.6} parent=39 // pred_check
        %p1059 = pneg %p86
      $region42: #{_lambda_.6} parent=39 // pred_check_branch
        %1061 = sbr.rel (%p1059) target = $region44
      $region43: #{_lambda_.6} parent=39 // pred_region
        %s1062 = smul.u32 4, %s16
        %p1063 = scmp.lt.s32.totalorder %s1062, 7
        %s1064 = scalar_select %p1063, %s1062, 7
        %s1065 = smul.addr %s1064, 4
        %s1066 = scalar_lea.vmem %s2, %s1065
      $region44: #{_lambda_.6} parent=39 // pred_fallthru
        _
      // Predicated region
      $region45: #{_lambda_.6} parent=39 // pred_check
        %p1067 = pneg %p112
      $region46: #{_lambda_.6} parent=39 // pred_check_branch
        %1069 = sbr.rel (%p1067) target = $region48
      $region47: #{_lambda_.6} parent=39 // pred_region
        %p1070 = scmp.lt.s32.totalorder %s16, 1
        %s1071 = scalar_select %p1070, %s16, 1
        %s1072 = smul.addr %s1071, 2
        %s1073 = scalar_lea.vmem %s3, %s1072
      $region48: #{_lambda_.6} parent=39 // pred_fallthru
        _
    $region40: #{_lambda_.6} parent=5 // pred_fallthru
      _
  $region6: #{_lambda_.6} parent=0 // loop_footer
    %s14 = sadd.s32 1, %s10
  $region7: #{_lambda_.6} parent=0 // loop_footer_branch
    %9 = sbr.rel target = $region3
  $region8: #{_lambda_.6} parent=0 // loop_exit
    _

// kernel: _lambda_.7
$region0: #{_lambda_.7}
  #allocation0 [shape = 'u32[]', space=smem, size = 0x4, offset = 0x4, fixed_abs, tag = 'smem constant byte address 0x4 - core index']
  #allocation1 [shape = 'u32[144,128]{1,0:T(1,128)}', space=vmem, size = 0x12000, scoped, tag = 'internal scratch']
  %s0 = inlined_call_operand.vmem [shape: bf16[32,1024], index: 0, kind: input, shape index: {}]
  %s1 = inlined_call_operand.vmem [shape: bf16[1024,128], index: 1, kind: input, shape index: {}]
  %s2 = inlined_call_operand.vmem [shape: bf16[32,128], index: 2, kind: output, shape index: {0}]
  %s3 = inlined_call_operand.vmem [shape: f32[2,2,128], index: 3, kind: output, shape index: {1}]
  %4 = xla_tuple %s2, %s3
  %s5 = sld [smem:[#allocation0]]
  $region49: #{_lambda_.7} parent=0
    _
  %s7 = ssub.s32 1, %s5
  %s8 = scalar_select 0, %s7, %s5
  loop: start=0, step=1, limit=4
  $region2: #{_lambda_.7} parent=0 // loop_pre_header
    _
  $region3: #{_lambda_.7} parent=0 // loop_header
    %s10 = sphi 0, %s14
    %p11 = scmp.ge.s32.totalorder %s10, 4
    %s20 = sphi 0, %s22
    %s23 = sphi 0, %s20
    %s24 = sphi 0, %s23
    %s40 = sphi 0, %s24
    %s44 = sphi 0, %s44
    %s46 = sphi 0, %s44
    %s47 = sphi 0, %s46
    %s61 = sphi 0, %s47
    %s67 = sphi 0, %s69
    %s70 = sphi 0, %s67
    %s71 = sphi 0, %s70
    %s87 = sphi 0, %s71
    %s93 = sphi 0, %s95
    %s96 = sphi 0, %s93
    %s97 = sphi 0, %s96
    %s113 = sphi 0, %s97
  $region4: #{_lambda_.7} parent=0 // loop_header_branch
    %13 = sbr.rel (%p11) target = $region8
  $region5: #{_lambda_.7} parent=0 // loop_body
    %s15 = ssub.s32 %s10, 1
    %s16 = ssub.s32 %s10, 2
    %s17 = sadd.s32 %s10, 1
    %s18 = ssub.s32 %s10, %s17
    %p19 = scmp.eq.s32.totalorder %s18, 0
    %s21 = sadd.s32 %s20, 1
    %s22 = scalar_select %p19, %s20, %s21
    %p25 = pneg %p19
    %p26 = scmp.eq.s32.totalorder %s10, 1
    %p27 = por %p25, %p26
    %p28 = scmp.ne.s32.totalorder %s20, %s23
    %p29 = scmp.eq.s32.totalorder %s10, 0
    %p30 = por %p28, %p29
    %p31 = scmp.ne.s32.totalorder %s20, %s23
    %p32 = scmp.eq.s32.totalorder %s15, 1
    %p33 = por %p31, %p32
    %p34 = scmp.ne.s32.totalorder %s23, %s24
    %p35 = scmp.eq.s32.totalorder %s15, 0
    %p36 = por %p34, %p35
    %p37 = scmp.ne.s32.totalorder %s23, %s24
    %p38 = scmp.eq.s32.totalorder %s16, 1
    %p39 = por %p37, %p38
    %p41 = scmp.ne.s32.totalorder %s24, %s40
    %p42 = scmp.eq.s32.totalorder %s16, 0
    %p43 = por %p41, %p42
    %s45 = sadd.s32 %s44, 1
    %p48 = scmp.eq.s32.totalorder %s10, 1
    %p49 = scmp.ne.s32.totalorder %s44, %s46
    %p50 = scmp.eq.s32.totalorder %s10, 0
    %p51 = por %p49, %p50
    %p52 = scmp.ne.s32.totalorder %s44, %s46
    %p53 = scmp.eq.s32.totalorder %s15, 1
    %p54 = por %p52, %p53
    %p55 = scmp.ne.s32.totalorder %s46, %s47
    %p56 = scmp.eq.s32.totalorder %s15, 0
    %p57 = por %p55, %p56
    %p58 = scmp.ne.s32.totalorder %s46, %s47
    %p59 = scmp.eq.s32.totalorder %s16, 1
    %p60 = por %p58, %p59
    %p62 = scmp.ne.s32.totalorder %s47, %s61
    %p63 = scmp.eq.s32.totalorder %s16, 0
    %p64 = por %p62, %p63
    %s65 = ssub.s32 %s10, %s17
    %p66 = scmp.eq.s32.totalorder %s65, 0
    %s68 = sadd.s32 %s67, 1
    %s69 = scalar_select %p66, %s67, %s68
    %p72 = pneg %p66
    %p73 = scmp.eq.s32.totalorder %s10, 1
    %p74 = por %p72, %p73
    %p75 = scmp.ne.s32.totalorder %s67, %s70
    %p76 = scmp.eq.s32.totalorder %s10, 0
    %p77 = por %p75, %p76
    %p78 = scmp.ne.s32.totalorder %s67, %s70
    %p79 = scmp.eq.s32.totalorder %s15, 1
    %p80 = por %p78, %p79
    %p81 = scmp.ne.s32.totalorder %s70, %s71
    %p82 = scmp.eq.s32.totalorder %s15, 0
    %p83 = por %p81, %p82
    %p84 = scmp.ne.s32.totalorder %s70, %s71
    %p85 = scmp.eq.s32.totalorder %s16, 1
    %p86 = por %p84, %p85
    %p88 = scmp.ne.s32.totalorder %s71, %s87
    %p89 = scmp.eq.s32.totalorder %s16, 0
    %p90 = por %p88, %p89
    %s91 = ssub.s32 %s10, %s17
    %p92 = scmp.eq.s32.totalorder %s91, 0
    %s94 = sadd.s32 %s93, 1
    %s95 = scalar_select %p92, %s93, %s94
    %p98 = pneg %p92
    %p99 = scmp.eq.s32.totalorder %s10, 1
    %p100 = por %p98, %p99
    %p101 = scmp.ne.s32.totalorder %s93, %s96
    %p102 = scmp.eq.s32.totalorder %s10, 0
    %p103 = por %p101, %p102
    %p104 = scmp.ne.s32.totalorder %s93, %s96
    %p105 = scmp.eq.s32.totalorder %s15, 1
    %p106 = por %p104, %p105
    %p107 = scmp.ne.s32.totalorder %s96, %s97
    %p108 = scmp.eq.s32.totalorder %s15, 0
    %p109 = por %p107, %p108
    %p110 = scmp.ne.s32.totalorder %s96, %s97
    %p111 = scmp.eq.s32.totalorder %s16, 1
    %p112 = por %p110, %p111
    %p114 = scmp.ne.s32.totalorder %s97, %s113
    %p115 = scmp.eq.s32.totalorder %s16, 0
    %p116 = por %p114, %p115
    %p117 = scmp.le.s32.totalorder 1, %s10
    %p118 = scmp.lt.s32.totalorder %s10, 3
    %p119 = pnand %p117, %p118
    %p120 = pneg %p119
    // Predicated region
    $region9: #{_lambda_.7} parent=5 // pred_check
      _
    $region10: #{_lambda_.7} parent=5 // pred_check_branch
      %122 = sbr.rel (%p119) target = $region12
    $region11: #{_lambda_.7} parent=5 // pred_region
      %s123 = ssub.s32 %s10, 1
      // Predicated region
      $region13: #{_lambda_.7} parent=11 // pred_check
        %p124 = pneg %p57
      $region14: #{_lambda_.7} parent=11 // pred_check_branch
        %126 = sbr.rel (%p124) target = $region16
      $region15: #{_lambda_.7} parent=11 // pred_region
        _
      $region16: #{_lambda_.7} parent=11 // pred_fallthru
        _
    $region12: #{_lambda_.7} parent=5 // pred_fallthru
      _
    %p127 = scmp.lt.s32.totalorder %s10, 2
    // Predicated region
    $region17: #{_lambda_.7} parent=5 // pred_check
      %p128 = pneg %p127
    $region18: #{_lambda_.7} parent=5 // pred_check_branch
      %130 = sbr.rel (%p128) target = $region20
    $region19: #{_lambda_.7} parent=5 // pred_region
      // Predicated region
      $region21: #{_lambda_.7} parent=19 // pred_check
        %p131 = pneg %p30
      $region22: #{_lambda_.7} parent=19 // pred_check_branch
        %133 = sbr.rel (%p131) target = $region24
      $region23: #{_lambda_.7} parent=19 // pred_region
        %s134 = smul.u32 2, %s10
        %p135 = scmp.lt.s32.totalorder %s134, 3
        %s136 = scalar_select %p135, %s134, 3
        %s137 = smul.addr %s136, 8
        %s138 = smul.addr %s137, 4
        %s139 = scalar_lea.vmem %s0, %s138
        %s140 = smul.u32 2, %s10
      $region24: #{_lambda_.7} parent=19 // pred_fallthru
        _
    $region20: #{_lambda_.7} parent=5 // pred_fallthru
      _
    %p141 = scmp.le.s32.totalorder 1, %s10
    %p142 = scmp.lt.s32.totalorder %s10, 3
    %p143 = pnand %p141, %p142
    %p144 = pneg %p143
    // Predicated region
    $region25: #{_lambda_.7} parent=5 // pred_check
      _
    $region26: #{_lambda_.7} parent=5 // pred_check_branch
      %146 = sbr.rel (%p143) target = $region28
    $region27: #{_lambda_.7} parent=5 // pred_region
      %s147 = ssub.s32 %s10, 1
      %s148 = smul.u32 2, %s15
      %p149 = scmp.lt.s32.totalorder %s148, 3
      %s150 = scalar_select %p149, %s148, 3
      %s151 = smul.addr %s150, 8
      %s152 = smul.addr %s151, 4
      %s153 = scalar_lea.vmem %s0, %s152
      %p154 = pneg %p36
      %p155 = pneg %p33
      %p156 = pneg %p57
      %p157 = pneg %p54
      %p158 = pneg %p83
      %p159 = pneg %p80
      %s160 = smul.u32 2, %s15
      %p161 = scmp.lt.s32.totalorder %s160, 3
      %s162 = scalar_select %p161, %s160, 3
      %s163 = smul.addr %s162, 4
      %s164 = scalar_lea.vmem %s2, %s163
      %p165 = pneg %p109
      %p166 = pneg %p106
      %p167 = scmp.lt.s32.totalorder %s15, 1
      %s168 = scalar_select %p167, %s15, 1
      %s169 = smul.addr %s168, 2
      %s170 = scalar_lea.vmem %s3, %s169
      %s171 = smul.u32 2, %s15
      %p172 = scmp.lt.s32.totalorder %s171, 3
      %s173 = scalar_select %p172, %s171, 3
      %s174 = smul.addr %s173, 8
      %s175 = smul.addr %s174, 4
      %s176 = scalar_lea.vmem %s0, %s175
      %s177 = smul.u32 2, %s15
      %s178 = smul.u32 2, %s15
      %p179 = scmp.lt.s32.totalorder %s178, 3
      %s180 = scalar_select %p179, %s178, 3
      %s181 = smul.addr %s180, 4
      %s182 = scalar_lea.vmem %s2, %s181
      %s183 = smul.u32 2, %s15
      %p184 = scmp.lt.s32.totalorder %s15, 1
      %s185 = scalar_select %p184, %s15, 1
      %s186 = smul.addr %s185, 2
      %s187 = scalar_lea.vmem %s3, %s186
      %v189 = vld [vmem:[%s176] sm:$0xff]
      %v190 = vld [vmem:[%s176 + $0x8] sm:$0xff]
      %v191 = vld [vmem:[%s176 + $0x10] sm:$0xff]
      %v192 = vld [vmem:[%s176 + $0x18] sm:$0xff]
      %v193 = vld [vmem:[%s176 + $0x20] sm:$0xff]
      %v194 = vld [vmem:[%s176 + $0x28] sm:$0xff]
      %v195 = vld [vmem:[%s176 + $0x30] sm:$0xff]
      %v196 = vld [vmem:[%s176 + $0x38] sm:$0xff]
      %v197 = vld [vmem:[%s1] sm:$0xf]
      %v198 = vld [vmem:[%s1 + $0x4] sm:$0xf]
      %v199 = vld [vmem:[%s1 + $0x8] sm:$0xf]
      %v200 = vld [vmem:[%s1 + $0xc] sm:$0xf]
      %v201 = vld [vmem:[%s1 + $0x10] sm:$0xf]
      %v202 = vld [vmem:[%s1 + $0x14] sm:$0xf]
      %v203 = vld [vmem:[%s1 + $0x18] sm:$0xf]
      %v204 = vld [vmem:[%s1 + $0x1c] sm:$0xf]
      %v205 = vld [vmem:[%s1 + $0x20] sm:$0xf]
      %v206 = vld [vmem:[%s1 + $0x24] sm:$0xf]
      %v207 = vld [vmem:[%s1 + $0x28] sm:$0xf]
      %v208 = vld [vmem:[%s1 + $0x2c] sm:$0xf]
      %v209 = vld [vmem:[%s1 + $0x30] sm:$0xf]
      %v210 = vld [vmem:[%s1 + $0x34] sm:$0xf]
      %v211 = vld [vmem:[%s1 + $0x38] sm:$0xf]
      %v212 = vld [vmem:[%s1 + $0x3c] sm:$0xf]
      %v213 = vld [vmem:[%s1 + $0x40] sm:$0xf]
      %v214 = vld [vmem:[%s1 + $0x44] sm:$0xf]
      %v215 = vld [vmem:[%s1 + $0x48] sm:$0xf]
      %v216 = vld [vmem:[%s1 + $0x4c] sm:$0xf]
      %v217 = vld [vmem:[%s1 + $0x50] sm:$0xf]
      %v218 = vld [vmem:[%s1 + $0x54] sm:$0xf]
      %v219 = vld [vmem:[%s1 + $0x58] sm:$0xf]
      %v220 = vld [vmem:[%s1 + $0x5c] sm:$0xf]
      %v221 = vld [vmem:[%s1 + $0x60] sm:$0xf]
      %v222 = vld [vmem:[%s1 + $0x64] sm:$0xf]
      %v223 = vld [vmem:[%s1 + $0x68] sm:$0xf]
      %v224 = vld [vmem:[%s1 + $0x6c] sm:$0xf]
      %v225 = vld [vmem:[%s1 + $0x70] sm:$0xf]
      %v226 = vld [vmem:[%s1 + $0x74] sm:$0xf]
      %v227 = vld [vmem:[%s1 + $0x78] sm:$0xf]
      %v228 = vld [vmem:[%s1 + $0x7c] sm:$0xf]
      %v229 = vld [vmem:[%s1 + $0x80] sm:$0xf]
      %v230 = vld [vmem:[%s1 + $0x84] sm:$0xf]
      %v231 = vld [vmem:[%s1 + $0x88] sm:$0xf]
      %v232 = vld [vmem:[%s1 + $0x8c] sm:$0xf]
      %v233 = vld [vmem:[%s1 + $0x90] sm:$0xf]
      %v234 = vld [vmem:[%s1 + $0x94] sm:$0xf]
      %v235 = vld [vmem:[%s1 + $0x98] sm:$0xf]
      %v236 = vld [vmem:[%s1 + $0x9c] sm:$0xf]
      %v237 = vld [vmem:[%s1 + $0xa0] sm:$0xf]
      %v238 = vld [vmem:[%s1 + $0xa4] sm:$0xf]
      %v239 = vld [vmem:[%s1 + $0xa8] sm:$0xf]
      %v240 = vld [vmem:[%s1 + $0xac] sm:$0xf]
      %v241 = vld [vmem:[%s1 + $0xb0] sm:$0xf]
      %v242 = vld [vmem:[%s1 + $0xb4] sm:$0xf]
      %v243 = vld [vmem:[%s1 + $0xb8] sm:$0xf]
      %v244 = vld [vmem:[%s1 + $0xbc] sm:$0xf]
      %v245 = vld [vmem:[%s1 + $0xc0] sm:$0xf]
      %v246 = vld [vmem:[%s1 + $0xc4] sm:$0xf]
      %v247 = vld [vmem:[%s1 + $0xc8] sm:$0xf]
      %v248 = vld [vmem:[%s1 + $0xcc] sm:$0xf]
      %v249 = vld [vmem:[%s1 + $0xd0] sm:$0xf]
      %v250 = vld [vmem:[%s1 + $0xd4] sm:$0xf]
      %v251 = vld [vmem:[%s1 + $0xd8] sm:$0xf]
      %v252 = vld [vmem:[%s1 + $0xdc] sm:$0xf]
      %v253 = vld [vmem:[%s1 + $0xe0] sm:$0xf]
      %v254 = vld [vmem:[%s1 + $0xe4] sm:$0xf]
      %v255 = vld [vmem:[%s1 + $0xe8] sm:$0xf]
      %v256 = vld [vmem:[%s1 + $0xec] sm:$0xf]
      %v257 = vld [vmem:[%s1 + $0xf0] sm:$0xf]
      %v258 = vld [vmem:[%s1 + $0xf4] sm:$0xf]
      %v259 = vld [vmem:[%s1 + $0xf8] sm:$0xf]
      %v260 = vld [vmem:[%s1 + $0xfc] sm:$0xf]
      %v261 = vld [vmem:[%s1 + $0x100] sm:$0xf]
      %v262 = vld [vmem:[%s1 + $0x104] sm:$0xf]
      %v263 = vld [vmem:[%s1 + $0x108] sm:$0xf]
      %v264 = vld [vmem:[%s1 + $0x10c] sm:$0xf]
      %v265 = vld [vmem:[%s1 + $0x110] sm:$0xf]
      %v266 = vld [vmem:[%s1 + $0x114] sm:$0xf]
      %v267 = vld [vmem:[%s1 + $0x118] sm:$0xf]
      %v268 = vld [vmem:[%s1 + $0x11c] sm:$0xf]
      %v269 = vld [vmem:[%s1 + $0x120] sm:$0xf]
      %v270 = vld [vmem:[%s1 + $0x124] sm:$0xf]
      %v271 = vld [vmem:[%s1 + $0x128] sm:$0xf]
      %v272 = vld [vmem:[%s1 + $0x12c] sm:$0xf]
      %v273 = vld [vmem:[%s1 + $0x130] sm:$0xf]
      %v274 = vld [vmem:[%s1 + $0x134] sm:$0xf]
      %v275 = vld [vmem:[%s1 + $0x138] sm:$0xf]
      %v276 = vld [vmem:[%s1 + $0x13c] sm:$0xf]
      %v277 = vld [vmem:[%s1 + $0x140] sm:$0xf]
      %v278 = vld [vmem:[%s1 + $0x144] sm:$0xf]
      %v279 = vld [vmem:[%s1 + $0x148] sm:$0xf]
      %v280 = vld [vmem:[%s1 + $0x14c] sm:$0xf]
      %v281 = vld [vmem:[%s1 + $0x150] sm:$0xf]
      %v282 = vld [vmem:[%s1 + $0x154] sm:$0xf]
      %v283 = vld [vmem:[%s1 + $0x158] sm:$0xf]
      %v284 = vld [vmem:[%s1 + $0x15c] sm:$0xf]
      %v285 = vld [vmem:[%s1 + $0x160] sm:$0xf]
      %v286 = vld [vmem:[%s1 + $0x164] sm:$0xf]
      %v287 = vld [vmem:[%s1 + $0x168] sm:$0xf]
      %v288 = vld [vmem:[%s1 + $0x16c] sm:$0xf]
      %v289 = vld [vmem:[%s1 + $0x170] sm:$0xf]
      %v290 = vld [vmem:[%s1 + $0x174] sm:$0xf]
      %v291 = vld [vmem:[%s1 + $0x178] sm:$0xf]
      %v292 = vld [vmem:[%s1 + $0x17c] sm:$0xf]
      %v293 = vld [vmem:[%s1 + $0x180] sm:$0xf]
      %v294 = vld [vmem:[%s1 + $0x184] sm:$0xf]
      %v295 = vld [vmem:[%s1 + $0x188] sm:$0xf]
      %v296 = vld [vmem:[%s1 + $0x18c] sm:$0xf]
      %v297 = vld [vmem:[%s1 + $0x190] sm:$0xf]
      %v298 = vld [vmem:[%s1 + $0x194] sm:$0xf]
      %v299 = vld [vmem:[%s1 + $0x198] sm:$0xf]
      %v300 = vld [vmem:[%s1 + $0x19c] sm:$0xf]
      %v301 = vld [vmem:[%s1 + $0x1a0] sm:$0xf]
      %v302 = vld [vmem:[%s1 + $0x1a4] sm:$0xf]
      %v303 = vld [vmem:[%s1 + $0x1a8] sm:$0xf]
      %v304 = vld [vmem:[%s1 + $0x1ac] sm:$0xf]
      %v305 = vld [vmem:[%s1 + $0x1b0] sm:$0xf]
      %v306 = vld [vmem:[%s1 + $0x1b4] sm:$0xf]
      %v307 = vld [vmem:[%s1 + $0x1b8] sm:$0xf]
      %v308 = vld [vmem:[%s1 + $0x1bc] sm:$0xf]
      %v309 = vld [vmem:[%s1 + $0x1c0] sm:$0xf]
      %v310 = vld [vmem:[%s1 + $0x1c4] sm:$0xf]
      %v311 = vld [vmem:[%s1 + $0x1c8] sm:$0xf]
      %v312 = vld [vmem:[%s1 + $0x1cc] sm:$0xf]
      %v313 = vld [vmem:[%s1 + $0x1d0] sm:$0xf]
      %v314 = vld [vmem:[%s1 + $0x1d4] sm:$0xf]
      %v315 = vld [vmem:[%s1 + $0x1d8] sm:$0xf]
      %v316 = vld [vmem:[%s1 + $0x1dc] sm:$0xf]
      %v317 = vld [vmem:[%s1 + $0x1e0] sm:$0xf]
      %v318 = vld [vmem:[%s1 + $0x1e4] sm:$0xf]
      %v319 = vld [vmem:[%s1 + $0x1e8] sm:$0xf]
      %v320 = vld [vmem:[%s1 + $0x1ec] sm:$0xf]
      %v321 = vld [vmem:[%s1 + $0x1f0] sm:$0xf]
      %v322 = vld [vmem:[%s1 + $0x1f4] sm:$0xf]
      %v323 = vld [vmem:[%s1 + $0x1f8] sm:$0xf]
      %v324 = vld [vmem:[%s1 + $0x1fc] sm:$0xf]
      %v333 = vunpack.c.l.b16 %v189
      %v334 = vunpack.c.h.b16 %v189
      %v335 = vunpack.c.l.b16 %v190
      %v336 = vunpack.c.h.b16 %v190
      %v337 = vunpack.c.l.b16 %v191
      %v338 = vunpack.c.h.b16 %v191
      %v339 = vunpack.c.l.b16 %v192
      %v340 = vunpack.c.h.b16 %v192
      %v341 = vunpack.c.l.b16 %v193
      %v342 = vunpack.c.h.b16 %v193
      %v343 = vunpack.c.l.b16 %v194
      %v344 = vunpack.c.h.b16 %v194
      %v345 = vunpack.c.l.b16 %v195
      %v346 = vunpack.c.h.b16 %v195
      %v347 = vunpack.c.l.b16 %v196
      %v348 = vunpack.c.h.b16 %v196
      %v349 = vpack.c.b16 %v341, %v333
      %v350 = vpack.c.b16 %v342, %v334
      %v351 = vpack.c.b16 %v343, %v335
      %v352 = vpack.c.b16 %v344, %v336
      %v353 = vpack.c.b16 %v345, %v337
      %v354 = vpack.c.b16 %v346, %v338
      %v355 = vpack.c.b16 %v347, %v339
      %v356 = vpack.c.b16 %v348, %v340
      %v493 = vunpack.c.l.b16 %v197
      %v494 = vunpack.c.l.b16 %v198
      %v495 = vunpack.c.l.b16 %v199
      %v496 = vunpack.c.l.b16 %v200
      %v497 = vunpack.c.l.b16 %v201
      %v498 = vunpack.c.l.b16 %v202
      %v499 = vunpack.c.l.b16 %v203
      %v500 = vunpack.c.l.b16 %v204
      %v501 = vunpack.c.l.b16 %v205
      %v502 = vunpack.c.l.b16 %v206
      %v503 = vunpack.c.l.b16 %v207
      %v504 = vunpack.c.l.b16 %v208
      %v505 = vunpack.c.l.b16 %v209
      %v506 = vunpack.c.l.b16 %v210
      %v507 = vunpack.c.l.b16 %v211
      %v508 = vunpack.c.l.b16 %v212
      %v509 = vunpack.c.l.b16 %v213
      %v510 = vunpack.c.l.b16 %v214
      %v511 = vunpack.c.l.b16 %v215
      %v512 = vunpack.c.l.b16 %v216
      %v513 = vunpack.c.l.b16 %v217
      %v514 = vunpack.c.l.b16 %v218
      %v515 = vunpack.c.l.b16 %v219
      %v516 = vunpack.c.l.b16 %v220
      %v517 = vunpack.c.l.b16 %v221
      %v518 = vunpack.c.l.b16 %v222
      %v519 = vunpack.c.l.b16 %v223
      %v520 = vunpack.c.l.b16 %v224
      %v521 = vunpack.c.l.b16 %v225
      %v522 = vunpack.c.l.b16 %v226
      %v523 = vunpack.c.l.b16 %v227
      %v524 = vunpack.c.l.b16 %v228
      %v525 = vunpack.c.l.b16 %v229
      %v526 = vunpack.c.l.b16 %v230
      %v527 = vunpack.c.l.b16 %v231
      %v528 = vunpack.c.l.b16 %v232
      %v529 = vunpack.c.l.b16 %v233
      %v530 = vunpack.c.l.b16 %v234
      %v531 = vunpack.c.l.b16 %v235
      %v532 = vunpack.c.l.b16 %v236
      %v533 = vunpack.c.l.b16 %v237
      %v534 = vunpack.c.l.b16 %v238
      %v535 = vunpack.c.l.b16 %v239
      %v536 = vunpack.c.l.b16 %v240
      %v537 = vunpack.c.l.b16 %v241
      %v538 = vunpack.c.l.b16 %v242
      %v539 = vunpack.c.l.b16 %v243
      %v540 = vunpack.c.l.b16 %v244
      %v541 = vunpack.c.l.b16 %v245
      %v542 = vunpack.c.l.b16 %v246
      %v543 = vunpack.c.l.b16 %v247
      %v544 = vunpack.c.l.b16 %v248
      %v545 = vunpack.c.l.b16 %v249
      %v546 = vunpack.c.l.b16 %v250
      %v547 = vunpack.c.l.b16 %v251
      %v548 = vunpack.c.l.b16 %v252
      %v549 = vunpack.c.l.b16 %v253
      %v550 = vunpack.c.l.b16 %v254
      %v551 = vunpack.c.l.b16 %v255
      %v552 = vunpack.c.l.b16 %v256
      %v553 = vunpack.c.l.b16 %v257
      %v554 = vunpack.c.l.b16 %v258
      %v555 = vunpack.c.l.b16 %v259
      %v556 = vunpack.c.l.b16 %v260
      %v557 = vunpack.c.l.b16 %v261
      %v558 = vunpack.c.l.b16 %v262
      %v559 = vunpack.c.l.b16 %v263
      %v560 = vunpack.c.l.b16 %v264
      %v561 = vunpack.c.l.b16 %v265
      %v562 = vunpack.c.l.b16 %v266
      %v563 = vunpack.c.l.b16 %v267
      %v564 = vunpack.c.l.b16 %v268
      %v565 = vunpack.c.l.b16 %v269
      %v566 = vunpack.c.l.b16 %v270
      %v567 = vunpack.c.l.b16 %v271
      %v568 = vunpack.c.l.b16 %v272
      %v569 = vunpack.c.l.b16 %v273
      %v570 = vunpack.c.l.b16 %v274
      %v571 = vunpack.c.l.b16 %v275
      %v572 = vunpack.c.l.b16 %v276
      %v573 = vunpack.c.l.b16 %v277
      %v574 = vunpack.c.l.b16 %v278
      %v575 = vunpack.c.l.b16 %v279
      %v576 = vunpack.c.l.b16 %v280
      %v577 = vunpack.c.l.b16 %v281
      %v578 = vunpack.c.l.b16 %v282
      %v579 = vunpack.c.l.b16 %v283
      %v580 = vunpack.c.l.b16 %v284
      %v581 = vunpack.c.l.b16 %v285
      %v582 = vunpack.c.l.b16 %v286
      %v583 = vunpack.c.l.b16 %v287
      %v584 = vunpack.c.l.b16 %v288
      %v585 = vunpack.c.l.b16 %v289
      %v586 = vunpack.c.l.b16 %v290
      %v587 = vunpack.c.l.b16 %v291
      %v588 = vunpack.c.l.b16 %v292
      %v589 = vunpack.c.l.b16 %v293
      %v590 = vunpack.c.l.b16 %v294
      %v591 = vunpack.c.l.b16 %v295
      %v592 = vunpack.c.l.b16 %v296
      %v593 = vunpack.c.l.b16 %v297
      %v594 = vunpack.c.l.b16 %v298
      %v595 = vunpack.c.l.b16 %v299
      %v596 = vunpack.c.l.b16 %v300
      %v597 = vunpack.c.l.b16 %v301
      %v598 = vunpack.c.l.b16 %v302
      %v599 = vunpack.c.l.b16 %v303
      %v600 = vunpack.c.l.b16 %v304
      %v601 = vunpack.c.l.b16 %v305
      %v602 = vunpack.c.l.b16 %v306
      %v603 = vunpack.c.l.b16 %v307
      %v604 = vunpack.c.l.b16 %v308
      %v605 = vunpack.c.l.b16 %v309
      %v606 = vunpack.c.l.b16 %v310
      %v607 = vunpack.c.l.b16 %v311
      %v608 = vunpack.c.l.b16 %v312
      %v609 = vunpack.c.l.b16 %v313
      %v610 = vunpack.c.l.b16 %v314
      %v611 = vunpack.c.l.b16 %v315
      %v612 = vunpack.c.l.b16 %v316
      %v613 = vunpack.c.l.b16 %v317
      %v614 = vunpack.c.l.b16 %v318
      %v615 = vunpack.c.l.b16 %v319
      %v616 = vunpack.c.l.b16 %v320
      %v617 = vunpack.c.l.b16 %v321
      %v618 = vunpack.c.l.b16 %v322
      %v619 = vunpack.c.l.b16 %v323
      %v620 = vunpack.c.l.b16 %v324
      %v621 = vpack.c.b16 %v494, %v493
      %v622 = vpack.c.b16 %v496, %v495
      %v623 = vpack.c.b16 %v498, %v497
      %v624 = vpack.c.b16 %v500, %v499
      %v625 = vpack.c.b16 %v502, %v501
      %v626 = vpack.c.b16 %v504, %v503
      %v627 = vpack.c.b16 %v506, %v505
      %v628 = vpack.c.b16 %v508, %v507
      %v629 = vpack.c.b16 %v510, %v509
      %v630 = vpack.c.b16 %v512, %v511
      %v631 = vpack.c.b16 %v514, %v513
      %v632 = vpack.c.b16 %v516, %v515
      %v633 = vpack.c.b16 %v518, %v517
      %v634 = vpack.c.b16 %v520, %v519
      %v635 = vpack.c.b16 %v522, %v521
      %v636 = vpack.c.b16 %v524, %v523
      %v637 = vpack.c.b16 %v526, %v525
      %v638 = vpack.c.b16 %v528, %v527
      %v639 = vpack.c.b16 %v530, %v529
      %v640 = vpack.c.b16 %v532, %v531
      %v641 = vpack.c.b16 %v534, %v533
      %v642 = vpack.c.b16 %v536, %v535
      %v643 = vpack.c.b16 %v538, %v537
      %v644 = vpack.c.b16 %v540, %v539
      %v645 = vpack.c.b16 %v542, %v541
      %v646 = vpack.c.b16 %v544, %v543
      %v647 = vpack.c.b16 %v546, %v545
      %v648 = vpack.c.b16 %v548, %v547
      %v649 = vpack.c.b16 %v550, %v549
      %v650 = vpack.c.b16 %v552, %v551
      %v651 = vpack.c.b16 %v554, %v553
      %v652 = vpack.c.b16 %v556, %v555
      %v653 = vpack.c.b16 %v558, %v557
      %v654 = vpack.c.b16 %v560, %v559
      %v655 = vpack.c.b16 %v562, %v561
      %v656 = vpack.c.b16 %v564, %v563
      %v657 = vpack.c.b16 %v566, %v565
      %v658 = vpack.c.b16 %v568, %v567
      %v659 = vpack.c.b16 %v570, %v569
      %v660 = vpack.c.b16 %v572, %v571
      %v661 = vpack.c.b16 %v574, %v573
      %v662 = vpack.c.b16 %v576, %v575
      %v663 = vpack.c.b16 %v578, %v577
      %v664 = vpack.c.b16 %v580, %v579
      %v665 = vpack.c.b16 %v582, %v581
      %v666 = vpack.c.b16 %v584, %v583
      %v667 = vpack.c.b16 %v586, %v585
      %v668 = vpack.c.b16 %v588, %v587
      %v669 = vpack.c.b16 %v590, %v589
      %v670 = vpack.c.b16 %v592, %v591
      %v671 = vpack.c.b16 %v594, %v593
      %v672 = vpack.c.b16 %v596, %v595
      %v673 = vpack.c.b16 %v598, %v597
      %v674 = vpack.c.b16 %v600, %v599
      %v675 = vpack.c.b16 %v602, %v601
      %v676 = vpack.c.b16 %v604, %v603
      %v677 = vpack.c.b16 %v606, %v605
      %v678 = vpack.c.b16 %v608, %v607
      %v679 = vpack.c.b16 %v610, %v609
      %v680 = vpack.c.b16 %v612, %v611
      %v681 = vpack.c.b16 %v614, %v613
      %v682 = vpack.c.b16 %v616, %v615
      %v683 = vpack.c.b16 %v618, %v617
      %v684 = vpack.c.b16 %v620, %v619
      %749 = vmatprep.subr.bf16.mxu0 0
      %750 = vmatpush1.bf16.msra.mxu0 %v621
      %751 = vmatprep.subr.bf16.mxu0 0
      %752 = vmatpush1.bf16.msra.mxu0 %v622
      %753 = vmatprep.subr.bf16.mxu0 0
      %754 = vmatpush1.bf16.msra.mxu0 %v623
      %755 = vmatprep.subr.bf16.mxu0 0
      %756 = vmatpush1.bf16.msra.mxu0 %v624
      %757 = vmatprep.subr.bf16.mxu0 0
      %758 = vmatpush1.bf16.msra.mxu0 %v625
      %759 = vmatprep.subr.bf16.mxu0 0
      %760 = vmatpush1.bf16.msra.mxu0 %v626
      %761 = vmatprep.subr.bf16.mxu0 0
      %762 = vmatpush1.bf16.msra.mxu0 %v627
      %763 = vmatprep.subr.bf16.mxu0 0
      %764 = vmatpush1.bf16.msra.mxu0 %v628
      %765 = vmatprep.subr.bf16.mxu0 0
      %766 = vmatpush1.bf16.msra.mxu0 %v629
      %767 = vmatprep.subr.bf16.mxu0 0
      %768 = vmatpush1.bf16.msra.mxu0 %v630
      %769 = vmatprep.subr.bf16.mxu0 0
      %770 = vmatpush1.bf16.msra.mxu0 %v631
      %771 = vmatprep.subr.bf16.mxu0 0
      %772 = vmatpush1.bf16.msra.mxu0 %v632
      %773 = vmatprep.subr.bf16.mxu0 0
      %774 = vmatpush1.bf16.msra.mxu0 %v633
      %775 = vmatprep.subr.bf16.mxu0 0
      %776 = vmatpush1.bf16.msra.mxu0 %v634
      %777 = vmatprep.subr.bf16.mxu0 0
      %778 = vmatpush1.bf16.msra.mxu0 %v635
      %779 = vmatprep.subr.bf16.mxu0 0
      %780 = vmatpush1.bf16.msra.mxu0 %v636
      %781 = vmatprep.mubr.bf16.mxu0 %v350
      %782 = vmatmul.mubr.bf16.gmra.mrb[0].mxu0 %v349
      %v783 = vpop.f32.mrb[0].mxu0
      %v784 = vadd.f32 0.0, %v783
      %v785 = vpop.f32.mrb[0].mxu0
      %v786 = vpop.f32.mrb[0].mxu0
      %v787 = vadd.f32 0.0, %v786
      %v788 = vpop.f32.mrb[0].mxu0
      %789 = vdwg.mxu0
      %790 = vmatprep.subr.bf16.mxu0 0
      %791 = vmatpush1.bf16.msra.mxu0 %v637
      %792 = vmatprep.subr.bf16.mxu0 0
      %793 = vmatpush1.bf16.msra.mxu0 %v638
      %794 = vmatprep.subr.bf16.mxu0 0
      %795 = vmatpush1.bf16.msra.mxu0 %v639
      %796 = vmatprep.subr.bf16.mxu0 0
      %797 = vmatpush1.bf16.msra.mxu0 %v640
      %798 = vmatprep.subr.bf16.mxu0 0
      %799 = vmatpush1.bf16.msra.mxu0 %v641
      %800 = vmatprep.subr.bf16.mxu0 0
      %801 = vmatpush1.bf16.msra.mxu0 %v642
      %802 = vmatprep.subr.bf16.mxu0 0
      %803 = vmatpush1.bf16.msra.mxu0 %v643
      %804 = vmatprep.subr.bf16.mxu0 0
      %805 = vmatpush1.bf16.msra.mxu0 %v644
      %806 = vmatprep.subr.bf16.mxu0 0
      %807 = vmatpush1.bf16.msra.mxu0 %v645
      %808 = vmatprep.subr.bf16.mxu0 0
      %809 = vmatpush1.bf16.msra.mxu0 %v646
      %810 = vmatprep.subr.bf16.mxu0 0
      %811 = vmatpush1.bf16.msra.mxu0 %v647
      %812 = vmatprep.subr.bf16.mxu0 0
      %813 = vmatpush1.bf16.msra.mxu0 %v648
      %814 = vmatprep.subr.bf16.mxu0 0
      %815 = vmatpush1.bf16.msra.mxu0 %v649
      %816 = vmatprep.subr.bf16.mxu0 0
      %817 = vmatpush1.bf16.msra.mxu0 %v650
      %818 = vmatprep.subr.bf16.mxu0 0
      %819 = vmatpush1.bf16.msra.mxu0 %v651
      %820 = vmatprep.subr.bf16.mxu0 0
      %821 = vmatpush1.bf16.msra.mxu0 %v652
      %822 = vmatprep.mubr.bf16.mxu0 %v352
      %823 = vmatmul.mubr.bf16.gmra.mrb[0].mxu0 %v351
      %v824 = vpop.f32.mrb[0].mxu0
      %v825 = vadd.f32 %v784, %v824
      %v826 = vpop.f32.mrb[0].mxu0
      %v827 = vpop.f32.mrb[0].mxu0
      %v828 = vadd.f32 %v787, %v827
      %v829 = vpop.f32.mrb[0].mxu0
      %830 = vdwg.mxu0
      %831 = vmatprep.subr.bf16.mxu0 0
      %832 = vmatpush1.bf16.msra.mxu0 %v653
      %833 = vmatprep.subr.bf16.mxu0 0
      %834 = vmatpush1.bf16.msra.mxu0 %v654
      %835 = vmatprep.subr.bf16.mxu0 0
      %836 = vmatpush1.bf16.msra.mxu0 %v655
      %837 = vmatprep.subr.bf16.mxu0 0
      %838 = vmatpush1.bf16.msra.mxu0 %v656
      %839 = vmatprep.subr.bf16.mxu0 0
      %840 = vmatpush1.bf16.msra.mxu0 %v657
      %841 = vmatprep.subr.bf16.mxu0 0
      %842 = vmatpush1.bf16.msra.mxu0 %v658
      %843 = vmatprep.subr.bf16.mxu0 0
      %844 = vmatpush1.bf16.msra.mxu0 %v659
      %845 = vmatprep.subr.bf16.mxu0 0
      %846 = vmatpush1.bf16.msra.mxu0 %v660
      %847 = vmatprep.subr.bf16.mxu0 0
      %848 = vmatpush1.bf16.msra.mxu0 %v661
      %849 = vmatprep.subr.bf16.mxu0 0
      %850 = vmatpush1.bf16.msra.mxu0 %v662
      %851 = vmatprep.subr.bf16.mxu0 0
      %852 = vmatpush1.bf16.msra.mxu0 %v663
      %853 = vmatprep.subr.bf16.mxu0 0
      %854 = vmatpush1.bf16.msra.mxu0 %v664
      %855 = vmatprep.subr.bf16.mxu0 0
      %856 = vmatpush1.bf16.msra.mxu0 %v665
      %857 = vmatprep.subr.bf16.mxu0 0
      %858 = vmatpush1.bf16.msra.mxu0 %v666
      %859 = vmatprep.subr.bf16.mxu0 0
      %860 = vmatpush1.bf16.msra.mxu0 %v667
      %861 = vmatprep.subr.bf16.mxu0 0
      %862 = vmatpush1.bf16.msra.mxu0 %v668
      %863 = vmatprep.mubr.bf16.mxu0 %v354
      %864 = vmatmul.mubr.bf16.gmra.mrb[0].mxu0 %v353
      %v865 = vpop.f32.mrb[0].mxu0
      %v866 = vadd.f32 %v825, %v865
      %v867 = vpop.f32.mrb[0].mxu0
      %v868 = vpop.f32.mrb[0].mxu0
      %v869 = vadd.f32 %v828, %v868
      %v870 = vpop.f32.mrb[0].mxu0
      %871 = vdwg.mxu0
      %872 = vmatprep.subr.bf16.mxu0 0
      %873 = vmatpush1.bf16.msra.mxu0 %v669
      %874 = vmatprep.subr.bf16.mxu0 0
      %875 = vmatpush1.bf16.msra.mxu0 %v670
      %876 = vmatprep.subr.bf16.mxu0 0
      %877 = vmatpush1.bf16.msra.mxu0 %v671
      %878 = vmatprep.subr.bf16.mxu0 0
      %879 = vmatpush1.bf16.msra.mxu0 %v672
      %880 = vmatprep.subr.bf16.mxu0 0
      %881 = vmatpush1.bf16.msra.mxu0 %v673
      %882 = vmatprep.subr.bf16.mxu0 0
      %883 = vmatpush1.bf16.msra.mxu0 %v674
      %884 = vmatprep.subr.bf16.mxu0 0
      %885 = vmatpush1.bf16.msra.mxu0 %v675
      %886 = vmatprep.subr.bf16.mxu0 0
      %887 = vmatpush1.bf16.msra.mxu0 %v676
      %888 = vmatprep.subr.bf16.mxu0 0
      %889 = vmatpush1.bf16.msra.mxu0 %v677
      %890 = vmatprep.subr.bf16.mxu0 0
      %891 = vmatpush1.bf16.msra.mxu0 %v678
      %892 = vmatprep.subr.bf16.mxu0 0
      %893 = vmatpush1.bf16.msra.mxu0 %v679
      %894 = vmatprep.subr.bf16.mxu0 0
      %895 = vmatpush1.bf16.msra.mxu0 %v680
      %896 = vmatprep.subr.bf16.mxu0 0
      %897 = vmatpush1.bf16.msra.mxu0 %v681
      %898 = vmatprep.subr.bf16.mxu0 0
      %899 = vmatpush1.bf16.msra.mxu0 %v682
      %900 = vmatprep.subr.bf16.mxu0 0
      %901 = vmatpush1.bf16.msra.mxu0 %v683
      %902 = vmatprep.subr.bf16.mxu0 0
      %903 = vmatpush1.bf16.msra.mxu0 %v684
      %904 = vmatprep.mubr.bf16.mxu0 %v356
      %905 = vmatmul.mubr.bf16.gmra.mrb[0].mxu0 %v355
      %v906 = vpop.f32.mrb[0].mxu0
      %v907 = vadd.f32 %v866, %v906
      %v908 = vpop.f32.mrb[0].mxu0
      %v909 = vpop.f32.mrb[0].mxu0
      %v910 = vadd.f32 %v869, %v909
      %v911 = vpop.f32.mrb[0].mxu0
      %912 = vdwg.mxu0
      %v913 = vpack.c.bf16 %v910, %v907
      %v915 = vunpack.c.l.b16 %v913
      %v916 = vunpack.c.h.b16 %v913
      %v917 = vpack.c.b16 %v915, %v915
      %v918 = vpack.c.b16 %v916, %v916
      %921 = vst [vmem:[%s182] sm:$0xf] %v917
      %922 = vst [vmem:[%s182 + $0x4] sm:$0xf] %v918
      %v923 = vadd.f32 %v907, %v910
      %v924 = vrot.slane %v923, 4
      %v925 = vadd.f32 %v923, %v924
      %v926 = vrot.slane %v925, 2
      %v927 = vadd.f32 %v925, %v926
      %v928 = vrot.slane %v927, 1
      %v929 = vadd.f32 %v927, %v928
      %v930 = vmul.f32 %v907, %v907
      %v931 = vmul.f32 %v910, %v910
      %v932 = vadd.f32 %v930, %v931
      %v933 = vrot.slane %v932, 4
      %v934 = vadd.f32 %v932, %v933
      %v935 = vrot.slane %v934, 2
      %v936 = vadd.f32 %v934, %v935
      %v937 = vrot.slane %v936, 1
      %v938 = vadd.f32 %v936, %v937
      %vm939 = vcmask 1040384
      %v940 = vsel %vm939, %v929, %v938
      %941 = vst [vmem:[%s187] sm:$0x3] %v940
      %s942 = smul.u32 2, %s15
      %p943 = scmp.lt.s32.totalorder %s942, 3
      %s944 = scalar_select %p943, %s942, 3
      %s945 = smul.addr %s944, 4
      %s946 = scalar_lea.vmem %s2, %s945
      %p947 = scmp.lt.s32.totalorder %s15, 1
      %s948 = scalar_select %p947, %s15, 1
      %s949 = smul.addr %s948, 2
      %s950 = scalar_lea.vmem %s3, %s949
      // Predicated region
      $region29: #{_lambda_.7} parent=27 // pred_check
        %p951 = pneg %p80
      $region30: #{_lambda_.7} parent=27 // pred_check_branch
        %953 = sbr.rel (%p951) target = $region32
      $region31: #{_lambda_.7} parent=27 // pred_region
        %s954 = smul.u32 2, %s15
      $region32: #{_lambda_.7} parent=27 // pred_fallthru
        _
      // Predicated region
      $region33: #{_lambda_.7} parent=27 // pred_check
        %p955 = pneg %p106
      $region34: #{_lambda_.7} parent=27 // pred_check_branch
        %957 = sbr.rel (%p955) target = $region36
      $region35: #{_lambda_.7} parent=27 // pred_region
        _
      $region36: #{_lambda_.7} parent=27 // pred_fallthru
        _
    $region28: #{_lambda_.7} parent=5 // pred_fallthru
      _
    %p958 = scmp.le.s32.totalorder 2, %s10
    // Predicated region
    $region37: #{_lambda_.7} parent=5 // pred_check
      %p959 = pneg %p958
    $region38: #{_lambda_.7} parent=5 // pred_check_branch
      %961 = sbr.rel (%p959) target = $region40
    $region39: #{_lambda_.7} parent=5 // pred_region
      %s962 = ssub.s32 %s10, 2
      // Predicated region
      $region41: #{_lambda_.7} parent=39 // pred_check
        %p963 = pneg %p86
      $region42: #{_lambda_.7} parent=39 // pred_check_branch
        %965 = sbr.rel (%p963) target = $region44
      $region43: #{_lambda_.7} parent=39 // pred_region
        %s966 = smul.u32 2, %s16
        %p967 = scmp.lt.s32.totalorder %s966, 3
        %s968 = scalar_select %p967, %s966, 3
        %s969 = smul.addr %s968, 4
        %s970 = scalar_lea.vmem %s2, %s969
      $region44: #{_lambda_.7} parent=39 // pred_fallthru
        _
      // Predicated region
      $region45: #{_lambda_.7} parent=39 // pred_check
        %p971 = pneg %p112
      $region46: #{_lambda_.7} parent=39 // pred_check_branch
        %973 = sbr.rel (%p971) target = $region48
      $region47: #{_lambda_.7} parent=39 // pred_region
        %p974 = scmp.lt.s32.totalorder %s16, 1
        %s975 = scalar_select %p974, %s16, 1
        %s976 = smul.addr %s975, 2
        %s977 = scalar_lea.vmem %s3, %s976
      $region48: #{_lambda_.7} parent=39 // pred_fallthru
        _
    $region40: #{_lambda_.7} parent=5 // pred_fallthru
      _
  $region6: #{_lambda_.7} parent=0 // loop_footer
    %s14 = sadd.s32 1, %s10
  $region7: #{_lambda_.7} parent=0 // loop_footer_branch
    %9 = sbr.rel target = $region3
  $region8: #{_lambda_.7} parent=0 // loop_exit
    _

// kernel: _lambda_.8
$region0: #{_lambda_.8}
  #allocation0 [shape = 'u32[]', space=smem, size = 0x4, offset = 0x4, fixed_abs, tag = 'smem constant byte address 0x4 - core index']
  #allocation1 [shape = 'u32[144,128]{1,0:T(1,128)}', space=vmem, size = 0x12000, scoped, tag = 'internal scratch']
  %s0 = inlined_call_operand.vmem [shape: bf16[16,1024], index: 0, kind: input, shape index: {}]
  %s1 = inlined_call_operand.vmem [shape: bf16[1024,128], index: 1, kind: input, shape index: {}]
  %s2 = inlined_call_operand.vmem [shape: bf16[16,128], index: 2, kind: output, shape index: {0}]
  %s3 = inlined_call_operand.vmem [shape: f32[1,2,128], index: 3, kind: output, shape index: {1}]
  %4 = xla_tuple %s2, %s3
  %s5 = sld [smem:[#allocation0]]
  $region26: #{_lambda_.8} parent=0
    _
  %s7 = ssub.s32 1, %s5
  %s8 = scalar_select 0, %s7, %s5
  // Predicated region
  $region2: #{_lambda_.8} parent=0 // pred_check
    _
  $region3: #{_lambda_.8} parent=0 // pred_check_branch
    %10 = sbr.rel (0) target = $region5
  $region4: #{_lambda_.8} parent=0 // pred_region
    _
  $region5: #{_lambda_.8} parent=0 // pred_fallthru
    _
  // Predicated region
  $region6: #{_lambda_.8} parent=0 // pred_check
    _
  $region7: #{_lambda_.8} parent=0 // pred_check_branch
    %12 = sbr.rel (0) target = $region9
  $region8: #{_lambda_.8} parent=0 // pred_region
    _
  $region9: #{_lambda_.8} parent=0 // pred_fallthru
    _
  %v14 = vld [vmem:[%s0] sm:$0xff]
  %v15 = vld [vmem:[%s0 + $0x8] sm:$0xff]
  %v16 = vld [vmem:[%s0 + $0x10] sm:$0xff]
  %v17 = vld [vmem:[%s0 + $0x18] sm:$0xff]
  %v18 = vld [vmem:[%s0 + $0x20] sm:$0xff]
  %v19 = vld [vmem:[%s0 + $0x28] sm:$0xff]
  %v20 = vld [vmem:[%s0 + $0x30] sm:$0xff]
  %v21 = vld [vmem:[%s0 + $0x38] sm:$0xff]
  %v22 = vld [vmem:[%s1] sm:$0xf]
  %v23 = vld [vmem:[%s1 + $0x4] sm:$0xf]
  %v24 = vld [vmem:[%s1 + $0x8] sm:$0xf]
  %v25 = vld [vmem:[%s1 + $0xc] sm:$0xf]
  %v26 = vld [vmem:[%s1 + $0x10] sm:$0xf]
  %v27 = vld [vmem:[%s1 + $0x14] sm:$0xf]
  %v28 = vld [vmem:[%s1 + $0x18] sm:$0xf]
  %v29 = vld [vmem:[%s1 + $0x1c] sm:$0xf]
  %v30 = vld [vmem:[%s1 + $0x20] sm:$0xf]
  %v31 = vld [vmem:[%s1 + $0x24] sm:$0xf]
  %v32 = vld [vmem:[%s1 + $0x28] sm:$0xf]
  %v33 = vld [vmem:[%s1 + $0x2c] sm:$0xf]
  %v34 = vld [vmem:[%s1 + $0x30] sm:$0xf]
  %v35 = vld [vmem:[%s1 + $0x34] sm:$0xf]
  %v36 = vld [vmem:[%s1 + $0x38] sm:$0xf]
  %v37 = vld [vmem:[%s1 + $0x3c] sm:$0xf]
  %v38 = vld [vmem:[%s1 + $0x40] sm:$0xf]
  %v39 = vld [vmem:[%s1 + $0x44] sm:$0xf]
  %v40 = vld [vmem:[%s1 + $0x48] sm:$0xf]
  %v41 = vld [vmem:[%s1 + $0x4c] sm:$0xf]
  %v42 = vld [vmem:[%s1 + $0x50] sm:$0xf]
  %v43 = vld [vmem:[%s1 + $0x54] sm:$0xf]
  %v44 = vld [vmem:[%s1 + $0x58] sm:$0xf]
  %v45 = vld [vmem:[%s1 + $0x5c] sm:$0xf]
  %v46 = vld [vmem:[%s1 + $0x60] sm:$0xf]
  %v47 = vld [vmem:[%s1 + $0x64] sm:$0xf]
  %v48 = vld [vmem:[%s1 + $0x68] sm:$0xf]
  %v49 = vld [vmem:[%s1 + $0x6c] sm:$0xf]
  %v50 = vld [vmem:[%s1 + $0x70] sm:$0xf]
  %v51 = vld [vmem:[%s1 + $0x74] sm:$0xf]
  %v52 = vld [vmem:[%s1 + $0x78] sm:$0xf]
  %v53 = vld [vmem:[%s1 + $0x7c] sm:$0xf]
  %v54 = vld [vmem:[%s1 + $0x80] sm:$0xf]
  %v55 = vld [vmem:[%s1 + $0x84] sm:$0xf]
  %v56 = vld [vmem:[%s1 + $0x88] sm:$0xf]
  %v57 = vld [vmem:[%s1 + $0x8c] sm:$0xf]
  %v58 = vld [vmem:[%s1 + $0x90] sm:$0xf]
  %v59 = vld [vmem:[%s1 + $0x94] sm:$0xf]
  %v60 = vld [vmem:[%s1 + $0x98] sm:$0xf]
  %v61 = vld [vmem:[%s1 + $0x9c] sm:$0xf]
  %v62 = vld [vmem:[%s1 + $0xa0] sm:$0xf]
  %v63 = vld [vmem:[%s1 + $0xa4] sm:$0xf]
  %v64 = vld [vmem:[%s1 + $0xa8] sm:$0xf]
  %v65 = vld [vmem:[%s1 + $0xac] sm:$0xf]
  %v66 = vld [vmem:[%s1 + $0xb0] sm:$0xf]
  %v67 = vld [vmem:[%s1 + $0xb4] sm:$0xf]
  %v68 = vld [vmem:[%s1 + $0xb8] sm:$0xf]
  %v69 = vld [vmem:[%s1 + $0xbc] sm:$0xf]
  %v70 = vld [vmem:[%s1 + $0xc0] sm:$0xf]
  %v71 = vld [vmem:[%s1 + $0xc4] sm:$0xf]
  %v72 = vld [vmem:[%s1 + $0xc8] sm:$0xf]
  %v73 = vld [vmem:[%s1 + $0xcc] sm:$0xf]
  %v74 = vld [vmem:[%s1 + $0xd0] sm:$0xf]
  %v75 = vld [vmem:[%s1 + $0xd4] sm:$0xf]
  %v76 = vld [vmem:[%s1 + $0xd8] sm:$0xf]
  %v77 = vld [vmem:[%s1 + $0xdc] sm:$0xf]
  %v78 = vld [vmem:[%s1 + $0xe0] sm:$0xf]
  %v79 = vld [vmem:[%s1 + $0xe4] sm:$0xf]
  %v80 = vld [vmem:[%s1 + $0xe8] sm:$0xf]
  %v81 = vld [vmem:[%s1 + $0xec] sm:$0xf]
  %v82 = vld [vmem:[%s1 + $0xf0] sm:$0xf]
  %v83 = vld [vmem:[%s1 + $0xf4] sm:$0xf]
  %v84 = vld [vmem:[%s1 + $0xf8] sm:$0xf]
  %v85 = vld [vmem:[%s1 + $0xfc] sm:$0xf]
  %v86 = vld [vmem:[%s1 + $0x100] sm:$0xf]
  %v87 = vld [vmem:[%s1 + $0x104] sm:$0xf]
  %v88 = vld [vmem:[%s1 + $0x108] sm:$0xf]
  %v89 = vld [vmem:[%s1 + $0x10c] sm:$0xf]
  %v90 = vld [vmem:[%s1 + $0x110] sm:$0xf]
  %v91 = vld [vmem:[%s1 + $0x114] sm:$0xf]
  %v92 = vld [vmem:[%s1 + $0x118] sm:$0xf]
  %v93 = vld [vmem:[%s1 + $0x11c] sm:$0xf]
  %v94 = vld [vmem:[%s1 + $0x120] sm:$0xf]
  %v95 = vld [vmem:[%s1 + $0x124] sm:$0xf]
  %v96 = vld [vmem:[%s1 + $0x128] sm:$0xf]
  %v97 = vld [vmem:[%s1 + $0x12c] sm:$0xf]
  %v98 = vld [vmem:[%s1 + $0x130] sm:$0xf]
  %v99 = vld [vmem:[%s1 + $0x134] sm:$0xf]
  %v100 = vld [vmem:[%s1 + $0x138] sm:$0xf]
  %v101 = vld [vmem:[%s1 + $0x13c] sm:$0xf]
  %v102 = vld [vmem:[%s1 + $0x140] sm:$0xf]
  %v103 = vld [vmem:[%s1 + $0x144] sm:$0xf]
  %v104 = vld [vmem:[%s1 + $0x148] sm:$0xf]
  %v105 = vld [vmem:[%s1 + $0x14c] sm:$0xf]
  %v106 = vld [vmem:[%s1 + $0x150] sm:$0xf]
  %v107 = vld [vmem:[%s1 + $0x154] sm:$0xf]
  %v108 = vld [vmem:[%s1 + $0x158] sm:$0xf]
  %v109 = vld [vmem:[%s1 + $0x15c] sm:$0xf]
  %v110 = vld [vmem:[%s1 + $0x160] sm:$0xf]
  %v111 = vld [vmem:[%s1 + $0x164] sm:$0xf]
  %v112 = vld [vmem:[%s1 + $0x168] sm:$0xf]
  %v113 = vld [vmem:[%s1 + $0x16c] sm:$0xf]
  %v114 = vld [vmem:[%s1 + $0x170] sm:$0xf]
  %v115 = vld [vmem:[%s1 + $0x174] sm:$0xf]
  %v116 = vld [vmem:[%s1 + $0x178] sm:$0xf]
  %v117 = vld [vmem:[%s1 + $0x17c] sm:$0xf]
  %v118 = vld [vmem:[%s1 + $0x180] sm:$0xf]
  %v119 = vld [vmem:[%s1 + $0x184] sm:$0xf]
  %v120 = vld [vmem:[%s1 + $0x188] sm:$0xf]
  %v121 = vld [vmem:[%s1 + $0x18c] sm:$0xf]
  %v122 = vld [vmem:[%s1 + $0x190] sm:$0xf]
  %v123 = vld [vmem:[%s1 + $0x194] sm:$0xf]
  %v124 = vld [vmem:[%s1 + $0x198] sm:$0xf]
  %v125 = vld [vmem:[%s1 + $0x19c] sm:$0xf]
  %v126 = vld [vmem:[%s1 + $0x1a0] sm:$0xf]
  %v127 = vld [vmem:[%s1 + $0x1a4] sm:$0xf]
  %v128 = vld [vmem:[%s1 + $0x1a8] sm:$0xf]
  %v129 = vld [vmem:[%s1 + $0x1ac] sm:$0xf]
  %v130 = vld [vmem:[%s1 + $0x1b0] sm:$0xf]
  %v131 = vld [vmem:[%s1 + $0x1b4] sm:$0xf]
  %v132 = vld [vmem:[%s1 + $0x1b8] sm:$0xf]
  %v133 = vld [vmem:[%s1 + $0x1bc] sm:$0xf]
  %v134 = vld [vmem:[%s1 + $0x1c0] sm:$0xf]
  %v135 = vld [vmem:[%s1 + $0x1c4] sm:$0xf]
  %v136 = vld [vmem:[%s1 + $0x1c8] sm:$0xf]
  %v137 = vld [vmem:[%s1 + $0x1cc] sm:$0xf]
  %v138 = vld [vmem:[%s1 + $0x1d0] sm:$0xf]
  %v139 = vld [vmem:[%s1 + $0x1d4] sm:$0xf]
  %v140 = vld [vmem:[%s1 + $0x1d8] sm:$0xf]
  %v141 = vld [vmem:[%s1 + $0x1dc] sm:$0xf]
  %v142 = vld [vmem:[%s1 + $0x1e0] sm:$0xf]
  %v143 = vld [vmem:[%s1 + $0x1e4] sm:$0xf]
  %v144 = vld [vmem:[%s1 + $0x1e8] sm:$0xf]
  %v145 = vld [vmem:[%s1 + $0x1ec] sm:$0xf]
  %v146 = vld [vmem:[%s1 + $0x1f0] sm:$0xf]
  %v147 = vld [vmem:[%s1 + $0x1f4] sm:$0xf]
  %v148 = vld [vmem:[%s1 + $0x1f8] sm:$0xf]
  %v149 = vld [vmem:[%s1 + $0x1fc] sm:$0xf]
  %v158 = vunpack.c.l.b16 %v14
  %v159 = vunpack.c.h.b16 %v14
  %v160 = vunpack.c.l.b16 %v15
  %v161 = vunpack.c.h.b16 %v15
  %v162 = vunpack.c.l.b16 %v16
  %v163 = vunpack.c.h.b16 %v16
  %v164 = vunpack.c.l.b16 %v17
  %v165 = vunpack.c.h.b16 %v17
  %v166 = vunpack.c.l.b16 %v18
  %v167 = vunpack.c.h.b16 %v18
  %v168 = vunpack.c.l.b16 %v19
  %v169 = vunpack.c.h.b16 %v19
  %v170 = vunpack.c.l.b16 %v20
  %v171 = vunpack.c.h.b16 %v20
  %v172 = vunpack.c.l.b16 %v21
  %v173 = vunpack.c.h.b16 %v21
  %v174 = vpack.c.b16 %v166, %v158
  %v175 = vpack.c.b16 %v167, %v159
  %v176 = vpack.c.b16 %v168, %v160
  %v177 = vpack.c.b16 %v169, %v161
  %v178 = vpack.c.b16 %v170, %v162
  %v179 = vpack.c.b16 %v171, %v163
  %v180 = vpack.c.b16 %v172, %v164
  %v181 = vpack.c.b16 %v173, %v165
  %v318 = vunpack.c.l.b16 %v22
  %v319 = vunpack.c.l.b16 %v23
  %v320 = vunpack.c.l.b16 %v24
  %v321 = vunpack.c.l.b16 %v25
  %v322 = vunpack.c.l.b16 %v26
  %v323 = vunpack.c.l.b16 %v27
  %v324 = vunpack.c.l.b16 %v28
  %v325 = vunpack.c.l.b16 %v29
  %v326 = vunpack.c.l.b16 %v30
  %v327 = vunpack.c.l.b16 %v31
  %v328 = vunpack.c.l.b16 %v32
  %v329 = vunpack.c.l.b16 %v33
  %v330 = vunpack.c.l.b16 %v34
  %v331 = vunpack.c.l.b16 %v35
  %v332 = vunpack.c.l.b16 %v36
  %v333 = vunpack.c.l.b16 %v37
  %v334 = vunpack.c.l.b16 %v38
  %v335 = vunpack.c.l.b16 %v39
  %v336 = vunpack.c.l.b16 %v40
  %v337 = vunpack.c.l.b16 %v41
  %v338 = vunpack.c.l.b16 %v42
  %v339 = vunpack.c.l.b16 %v43
  %v340 = vunpack.c.l.b16 %v44
  %v341 = vunpack.c.l.b16 %v45
  %v342 = vunpack.c.l.b16 %v46
  %v343 = vunpack.c.l.b16 %v47
  %v344 = vunpack.c.l.b16 %v48
  %v345 = vunpack.c.l.b16 %v49
  %v346 = vunpack.c.l.b16 %v50
  %v347 = vunpack.c.l.b16 %v51
  %v348 = vunpack.c.l.b16 %v52
  %v349 = vunpack.c.l.b16 %v53
  %v350 = vunpack.c.l.b16 %v54
  %v351 = vunpack.c.l.b16 %v55
  %v352 = vunpack.c.l.b16 %v56
  %v353 = vunpack.c.l.b16 %v57
  %v354 = vunpack.c.l.b16 %v58
  %v355 = vunpack.c.l.b16 %v59
  %v356 = vunpack.c.l.b16 %v60
  %v357 = vunpack.c.l.b16 %v61
  %v358 = vunpack.c.l.b16 %v62
  %v359 = vunpack.c.l.b16 %v63
  %v360 = vunpack.c.l.b16 %v64
  %v361 = vunpack.c.l.b16 %v65
  %v362 = vunpack.c.l.b16 %v66
  %v363 = vunpack.c.l.b16 %v67
  %v364 = vunpack.c.l.b16 %v68
  %v365 = vunpack.c.l.b16 %v69
  %v366 = vunpack.c.l.b16 %v70
  %v367 = vunpack.c.l.b16 %v71
  %v368 = vunpack.c.l.b16 %v72
  %v369 = vunpack.c.l.b16 %v73
  %v370 = vunpack.c.l.b16 %v74
  %v371 = vunpack.c.l.b16 %v75
  %v372 = vunpack.c.l.b16 %v76
  %v373 = vunpack.c.l.b16 %v77
  %v374 = vunpack.c.l.b16 %v78
  %v375 = vunpack.c.l.b16 %v79
  %v376 = vunpack.c.l.b16 %v80
  %v377 = vunpack.c.l.b16 %v81
  %v378 = vunpack.c.l.b16 %v82
  %v379 = vunpack.c.l.b16 %v83
  %v380 = vunpack.c.l.b16 %v84
  %v381 = vunpack.c.l.b16 %v85
  %v382 = vunpack.c.l.b16 %v86
  %v383 = vunpack.c.l.b16 %v87
  %v384 = vunpack.c.l.b16 %v88
  %v385 = vunpack.c.l.b16 %v89
  %v386 = vunpack.c.l.b16 %v90
  %v387 = vunpack.c.l.b16 %v91
  %v388 = vunpack.c.l.b16 %v92
  %v389 = vunpack.c.l.b16 %v93
  %v390 = vunpack.c.l.b16 %v94
  %v391 = vunpack.c.l.b16 %v95
  %v392 = vunpack.c.l.b16 %v96
  %v393 = vunpack.c.l.b16 %v97
  %v394 = vunpack.c.l.b16 %v98
  %v395 = vunpack.c.l.b16 %v99
  %v396 = vunpack.c.l.b16 %v100
  %v397 = vunpack.c.l.b16 %v101
  %v398 = vunpack.c.l.b16 %v102
  %v399 = vunpack.c.l.b16 %v103
  %v400 = vunpack.c.l.b16 %v104
  %v401 = vunpack.c.l.b16 %v105
  %v402 = vunpack.c.l.b16 %v106
  %v403 = vunpack.c.l.b16 %v107
  %v404 = vunpack.c.l.b16 %v108
  %v405 = vunpack.c.l.b16 %v109
  %v406 = vunpack.c.l.b16 %v110
  %v407 = vunpack.c.l.b16 %v111
  %v408 = vunpack.c.l.b16 %v112
  %v409 = vunpack.c.l.b16 %v113
  %v410 = vunpack.c.l.b16 %v114
  %v411 = vunpack.c.l.b16 %v115
  %v412 = vunpack.c.l.b16 %v116
  %v413 = vunpack.c.l.b16 %v117
  %v414 = vunpack.c.l.b16 %v118
  %v415 = vunpack.c.l.b16 %v119
  %v416 = vunpack.c.l.b16 %v120
  %v417 = vunpack.c.l.b16 %v121
  %v418 = vunpack.c.l.b16 %v122
  %v419 = vunpack.c.l.b16 %v123
  %v420 = vunpack.c.l.b16 %v124
  %v421 = vunpack.c.l.b16 %v125
  %v422 = vunpack.c.l.b16 %v126
  %v423 = vunpack.c.l.b16 %v127
  %v424 = vunpack.c.l.b16 %v128
  %v425 = vunpack.c.l.b16 %v129
  %v426 = vunpack.c.l.b16 %v130
  %v427 = vunpack.c.l.b16 %v131
  %v428 = vunpack.c.l.b16 %v132
  %v429 = vunpack.c.l.b16 %v133
  %v430 = vunpack.c.l.b16 %v134
  %v431 = vunpack.c.l.b16 %v135
  %v432 = vunpack.c.l.b16 %v136
  %v433 = vunpack.c.l.b16 %v137
  %v434 = vunpack.c.l.b16 %v138
  %v435 = vunpack.c.l.b16 %v139
  %v436 = vunpack.c.l.b16 %v140
  %v437 = vunpack.c.l.b16 %v141
  %v438 = vunpack.c.l.b16 %v142
  %v439 = vunpack.c.l.b16 %v143
  %v440 = vunpack.c.l.b16 %v144
  %v441 = vunpack.c.l.b16 %v145
  %v442 = vunpack.c.l.b16 %v146
  %v443 = vunpack.c.l.b16 %v147
  %v444 = vunpack.c.l.b16 %v148
  %v445 = vunpack.c.l.b16 %v149
  %v446 = vpack.c.b16 %v319, %v318
  %v447 = vpack.c.b16 %v321, %v320
  %v448 = vpack.c.b16 %v323, %v322
  %v449 = vpack.c.b16 %v325, %v324
  %v450 = vpack.c.b16 %v327, %v326
  %v451 = vpack.c.b16 %v329, %v328
  %v452 = vpack.c.b16 %v331, %v330
  %v453 = vpack.c.b16 %v333, %v332
  %v454 = vpack.c.b16 %v335, %v334
  %v455 = vpack.c.b16 %v337, %v336
  %v456 = vpack.c.b16 %v339, %v338
  %v457 = vpack.c.b16 %v341, %v340
  %v458 = vpack.c.b16 %v343, %v342
  %v459 = vpack.c.b16 %v345, %v344
  %v460 = vpack.c.b16 %v347, %v346
  %v461 = vpack.c.b16 %v349, %v348
  %v462 = vpack.c.b16 %v351, %v350
  %v463 = vpack.c.b16 %v353, %v352
  %v464 = vpack.c.b16 %v355, %v354
  %v465 = vpack.c.b16 %v357, %v356
  %v466 = vpack.c.b16 %v359, %v358
  %v467 = vpack.c.b16 %v361, %v360
  %v468 = vpack.c.b16 %v363, %v362
  %v469 = vpack.c.b16 %v365, %v364
  %v470 = vpack.c.b16 %v367, %v366
  %v471 = vpack.c.b16 %v369, %v368
  %v472 = vpack.c.b16 %v371, %v370
  %v473 = vpack.c.b16 %v373, %v372
  %v474 = vpack.c.b16 %v375, %v374
  %v475 = vpack.c.b16 %v377, %v376
  %v476 = vpack.c.b16 %v379, %v378
  %v477 = vpack.c.b16 %v381, %v380
  %v478 = vpack.c.b16 %v383, %v382
  %v479 = vpack.c.b16 %v385, %v384
  %v480 = vpack.c.b16 %v387, %v386
  %v481 = vpack.c.b16 %v389, %v388
  %v482 = vpack.c.b16 %v391, %v390
  %v483 = vpack.c.b16 %v393, %v392
  %v484 = vpack.c.b16 %v395, %v394
  %v485 = vpack.c.b16 %v397, %v396
  %v486 = vpack.c.b16 %v399, %v398
  %v487 = vpack.c.b16 %v401, %v400
  %v488 = vpack.c.b16 %v403, %v402
  %v489 = vpack.c.b16 %v405, %v404
  %v490 = vpack.c.b16 %v407, %v406
  %v491 = vpack.c.b16 %v409, %v408
  %v492 = vpack.c.b16 %v411, %v410
  %v493 = vpack.c.b16 %v413, %v412
  %v494 = vpack.c.b16 %v415, %v414
  %v495 = vpack.c.b16 %v417, %v416
  %v496 = vpack.c.b16 %v419, %v418
  %v497 = vpack.c.b16 %v421, %v420
  %v498 = vpack.c.b16 %v423, %v422
  %v499 = vpack.c.b16 %v425, %v424
  %v500 = vpack.c.b16 %v427, %v426
  %v501 = vpack.c.b16 %v429, %v428
  %v502 = vpack.c.b16 %v431, %v430
  %v503 = vpack.c.b16 %v433, %v432
  %v504 = vpack.c.b16 %v435, %v434
  %v505 = vpack.c.b16 %v437, %v436
  %v506 = vpack.c.b16 %v439, %v438
  %v507 = vpack.c.b16 %v441, %v440
  %v508 = vpack.c.b16 %v443, %v442
  %v509 = vpack.c.b16 %v445, %v444
  %574 = vmatprep.subr.bf16.mxu0 0
  %575 = vmatpush1.bf16.msra.mxu0 %v446
  %576 = vmatprep.subr.bf16.mxu0 0
  %577 = vmatpush1.bf16.msra.mxu0 %v447
  %578 = vmatprep.subr.bf16.mxu0 0
  %579 = vmatpush1.bf16.msra.mxu0 %v448
  %580 = vmatprep.subr.bf16.mxu0 0
  %581 = vmatpush1.bf16.msra.mxu0 %v449
  %582 = vmatprep.subr.bf16.mxu0 0
  %583 = vmatpush1.bf16.msra.mxu0 %v450
  %584 = vmatprep.subr.bf16.mxu0 0
  %585 = vmatpush1.bf16.msra.mxu0 %v451
  %586 = vmatprep.subr.bf16.mxu0 0
  %587 = vmatpush1.bf16.msra.mxu0 %v452
  %588 = vmatprep.subr.bf16.mxu0 0
  %589 = vmatpush1.bf16.msra.mxu0 %v453
  %590 = vmatprep.subr.bf16.mxu0 0
  %591 = vmatpush1.bf16.msra.mxu0 %v454
  %592 = vmatprep.subr.bf16.mxu0 0
  %593 = vmatpush1.bf16.msra.mxu0 %v455
  %594 = vmatprep.subr.bf16.mxu0 0
  %595 = vmatpush1.bf16.msra.mxu0 %v456
  %596 = vmatprep.subr.bf16.mxu0 0
  %597 = vmatpush1.bf16.msra.mxu0 %v457
  %598 = vmatprep.subr.bf16.mxu0 0
  %599 = vmatpush1.bf16.msra.mxu0 %v458
  %600 = vmatprep.subr.bf16.mxu0 0
  %601 = vmatpush1.bf16.msra.mxu0 %v459
  %602 = vmatprep.subr.bf16.mxu0 0
  %603 = vmatpush1.bf16.msra.mxu0 %v460
  %604 = vmatprep.subr.bf16.mxu0 0
  %605 = vmatpush1.bf16.msra.mxu0 %v461
  %606 = vmatprep.mubr.bf16.mxu0 %v175
  %607 = vmatmul.mubr.bf16.gmra.mrb[0].mxu0 %v174
  %v608 = vpop.f32.mrb[0].mxu0
  %v609 = vadd.f32 0.0, %v608
  %v610 = vpop.f32.mrb[0].mxu0
  %v611 = vpop.f32.mrb[0].mxu0
  %v612 = vadd.f32 0.0, %v611
  %v613 = vpop.f32.mrb[0].mxu0
  %614 = vdwg.mxu0
  %615 = vmatprep.subr.bf16.mxu0 0
  %616 = vmatpush1.bf16.msra.mxu0 %v462
  %617 = vmatprep.subr.bf16.mxu0 0
  %618 = vmatpush1.bf16.msra.mxu0 %v463
  %619 = vmatprep.subr.bf16.mxu0 0
  %620 = vmatpush1.bf16.msra.mxu0 %v464
  %621 = vmatprep.subr.bf16.mxu0 0
  %622 = vmatpush1.bf16.msra.mxu0 %v465
  %623 = vmatprep.subr.bf16.mxu0 0
  %624 = vmatpush1.bf16.msra.mxu0 %v466
  %625 = vmatprep.subr.bf16.mxu0 0
  %626 = vmatpush1.bf16.msra.mxu0 %v467
  %627 = vmatprep.subr.bf16.mxu0 0
  %628 = vmatpush1.bf16.msra.mxu0 %v468
  %629 = vmatprep.subr.bf16.mxu0 0
  %630 = vmatpush1.bf16.msra.mxu0 %v469
  %631 = vmatprep.subr.bf16.mxu0 0
  %632 = vmatpush1.bf16.msra.mxu0 %v470
  %633 = vmatprep.subr.bf16.mxu0 0
  %634 = vmatpush1.bf16.msra.mxu0 %v471
  %635 = vmatprep.subr.bf16.mxu0 0
  %636 = vmatpush1.bf16.msra.mxu0 %v472
  %637 = vmatprep.subr.bf16.mxu0 0
  %638 = vmatpush1.bf16.msra.mxu0 %v473
  %639 = vmatprep.subr.bf16.mxu0 0
  %640 = vmatpush1.bf16.msra.mxu0 %v474
  %641 = vmatprep.subr.bf16.mxu0 0
  %642 = vmatpush1.bf16.msra.mxu0 %v475
  %643 = vmatprep.subr.bf16.mxu0 0
  %644 = vmatpush1.bf16.msra.mxu0 %v476
  %645 = vmatprep.subr.bf16.mxu0 0
  %646 = vmatpush1.bf16.msra.mxu0 %v477
  %647 = vmatprep.mubr.bf16.mxu0 %v177
  %648 = vmatmul.mubr.bf16.gmra.mrb[0].mxu0 %v176
  %v649 = vpop.f32.mrb[0].mxu0
  %v650 = vadd.f32 %v609, %v649
  %v651 = vpop.f32.mrb[0].mxu0
  %v652 = vpop.f32.mrb[0].mxu0
  %v653 = vadd.f32 %v612, %v652
  %v654 = vpop.f32.mrb[0].mxu0
  %655 = vdwg.mxu0
  %656 = vmatprep.subr.bf16.mxu0 0
  %657 = vmatpush1.bf16.msra.mxu0 %v478
  %658 = vmatprep.subr.bf16.mxu0 0
  %659 = vmatpush1.bf16.msra.mxu0 %v479
  %660 = vmatprep.subr.bf16.mxu0 0
  %661 = vmatpush1.bf16.msra.mxu0 %v480
  %662 = vmatprep.subr.bf16.mxu0 0
  %663 = vmatpush1.bf16.msra.mxu0 %v481
  %664 = vmatprep.subr.bf16.mxu0 0
  %665 = vmatpush1.bf16.msra.mxu0 %v482
  %666 = vmatprep.subr.bf16.mxu0 0
  %667 = vmatpush1.bf16.msra.mxu0 %v483
  %668 = vmatprep.subr.bf16.mxu0 0
  %669 = vmatpush1.bf16.msra.mxu0 %v484
  %670 = vmatprep.subr.bf16.mxu0 0
  %671 = vmatpush1.bf16.msra.mxu0 %v485
  %672 = vmatprep.subr.bf16.mxu0 0
  %673 = vmatpush1.bf16.msra.mxu0 %v486
  %674 = vmatprep.subr.bf16.mxu0 0
  %675 = vmatpush1.bf16.msra.mxu0 %v487
  %676 = vmatprep.subr.bf16.mxu0 0
  %677 = vmatpush1.bf16.msra.mxu0 %v488
  %678 = vmatprep.subr.bf16.mxu0 0
  %679 = vmatpush1.bf16.msra.mxu0 %v489
  %680 = vmatprep.subr.bf16.mxu0 0
  %681 = vmatpush1.bf16.msra.mxu0 %v490
  %682 = vmatprep.subr.bf16.mxu0 0
  %683 = vmatpush1.bf16.msra.mxu0 %v491
  %684 = vmatprep.subr.bf16.mxu0 0
  %685 = vmatpush1.bf16.msra.mxu0 %v492
  %686 = vmatprep.subr.bf16.mxu0 0
  %687 = vmatpush1.bf16.msra.mxu0 %v493
  %688 = vmatprep.mubr.bf16.mxu0 %v179
  %689 = vmatmul.mubr.bf16.gmra.mrb[0].mxu0 %v178
  %v690 = vpop.f32.mrb[0].mxu0
  %v691 = vadd.f32 %v650, %v690
  %v692 = vpop.f32.mrb[0].mxu0
  %v693 = vpop.f32.mrb[0].mxu0
  %v694 = vadd.f32 %v653, %v693
  %v695 = vpop.f32.mrb[0].mxu0
  %696 = vdwg.mxu0
  %697 = vmatprep.subr.bf16.mxu0 0
  %698 = vmatpush1.bf16.msra.mxu0 %v494
  %699 = vmatprep.subr.bf16.mxu0 0
  %700 = vmatpush1.bf16.msra.mxu0 %v495
  %701 = vmatprep.subr.bf16.mxu0 0
  %702 = vmatpush1.bf16.msra.mxu0 %v496
  %703 = vmatprep.subr.bf16.mxu0 0
  %704 = vmatpush1.bf16.msra.mxu0 %v497
  %705 = vmatprep.subr.bf16.mxu0 0
  %706 = vmatpush1.bf16.msra.mxu0 %v498
  %707 = vmatprep.subr.bf16.mxu0 0
  %708 = vmatpush1.bf16.msra.mxu0 %v499
  %709 = vmatprep.subr.bf16.mxu0 0
  %710 = vmatpush1.bf16.msra.mxu0 %v500
  %711 = vmatprep.subr.bf16.mxu0 0
  %712 = vmatpush1.bf16.msra.mxu0 %v501
  %713 = vmatprep.subr.bf16.mxu0 0
  %714 = vmatpush1.bf16.msra.mxu0 %v502
  %715 = vmatprep.subr.bf16.mxu0 0
  %716 = vmatpush1.bf16.msra.mxu0 %v503
  %717 = vmatprep.subr.bf16.mxu0 0
  %718 = vmatpush1.bf16.msra.mxu0 %v504
  %719 = vmatprep.subr.bf16.mxu0 0
  %720 = vmatpush1.bf16.msra.mxu0 %v505
  %721 = vmatprep.subr.bf16.mxu0 0
  %722 = vmatpush1.bf16.msra.mxu0 %v506
  %723 = vmatprep.subr.bf16.mxu0 0
  %724 = vmatpush1.bf16.msra.mxu0 %v507
  %725 = vmatprep.subr.bf16.mxu0 0
  %726 = vmatpush1.bf16.msra.mxu0 %v508
  %727 = vmatprep.subr.bf16.mxu0 0
  %728 = vmatpush1.bf16.msra.mxu0 %v509
  %729 = vmatprep.mubr.bf16.mxu0 %v181
  %730 = vmatmul.mubr.bf16.gmra.mrb[0].mxu0 %v180
  %v731 = vpop.f32.mrb[0].mxu0
  %v732 = vadd.f32 %v691, %v731
  %v733 = vpop.f32.mrb[0].mxu0
  %v734 = vpop.f32.mrb[0].mxu0
  %v735 = vadd.f32 %v694, %v734
  %v736 = vpop.f32.mrb[0].mxu0
  %737 = vdwg.mxu0
  %v738 = vpack.c.bf16 %v735, %v732
  %v740 = vunpack.c.l.b16 %v738
  %v741 = vunpack.c.h.b16 %v738
  %v742 = vpack.c.b16 %v740, %v740
  %v743 = vpack.c.b16 %v741, %v741
  %746 = vst [vmem:[%s2] sm:$0xf] %v742
  %747 = vst [vmem:[%s2 + $0x4] sm:$0xf] %v743
  %v748 = vadd.f32 %v732, %v735
  %v749 = vrot.slane %v748, 4
  %v750 = vadd.f32 %v748, %v749
  %v751 = vrot.slane %v750, 2
  %v752 = vadd.f32 %v750, %v751
  %v753 = vrot.slane %v752, 1
  %v754 = vadd.f32 %v752, %v753
  %v755 = vmul.f32 %v732, %v732
  %v756 = vmul.f32 %v735, %v735
  %v757 = vadd.f32 %v755, %v756
  %v758 = vrot.slane %v757, 4
  %v759 = vadd.f32 %v757, %v758
  %v760 = vrot.slane %v759, 2
  %v761 = vadd.f32 %v759, %v760
  %v762 = vrot.slane %v761, 1
  %v763 = vadd.f32 %v761, %v762
  %vm764 = vcmask 1040384
  %v765 = vsel %vm764, %v754, %v763
  %766 = vst [vmem:[%s3] sm:$0x3] %v765
  // Predicated region
  $region10: #{_lambda_.8} parent=0 // pred_check
    _
  $region11: #{_lambda_.8} parent=0 // pred_check_branch
    %768 = sbr.rel (0) target = $region13
  $region12: #{_lambda_.8} parent=0 // pred_region
    _
  $region13: #{_lambda_.8} parent=0 // pred_fallthru
    _
  // Predicated region
  $region14: #{_lambda_.8} parent=0 // pred_check
    _
  $region15: #{_lambda_.8} parent=0 // pred_check_branch
    %770 = sbr.rel (0) target = $region17
  $region16: #{_lambda_.8} parent=0 // pred_region
    _
  $region17: #{_lambda_.8} parent=0 // pred_fallthru
    _
  // Predicated region
  $region18: #{_lambda_.8} parent=0 // pred_check
    _
  $region19: #{_lambda_.8} parent=0 // pred_check_branch
    %772 = sbr.rel (0) target = $region21
  $region20: #{_lambda_.8} parent=0 // pred_region
    _
  $region21: #{_lambda_.8} parent=0 // pred_fallthru
    _
  // Predicated region
  $region22: #{_lambda_.8} parent=0 // pred_check
    _
  $region23: #{_lambda_.8} parent=0 // pred_check_branch
    %774 = sbr.rel (0) target = $region25
  $region24: #{_lambda_.8} parent=0 // pred_region
    _
  $region25: #{_lambda_.8} parent=0 // pred_fallthru
    _

// kernel: _lambda_.9
$region0: #{_lambda_.9}
  #allocation0 [shape = 'u32[]', space=smem, size = 0x4, offset = 0x4, fixed_abs, tag = 'smem constant byte address 0x4 - core index']
  #allocation1 [shape = 'u32[144,128]{1,0:T(1,128)}', space=vmem, size = 0x12000, scoped, tag = 'internal scratch']
  %s0 = inlined_call_operand.vmem [shape: bf16[16,1024], index: 0, kind: input, shape index: {}]
  %s1 = inlined_call_operand.vmem [shape: bf16[1024,128], index: 1, kind: input, shape index: {}]
  %s2 = inlined_call_operand.vmem [shape: f32[1,128], index: 2, kind: input, shape index: {}]
  %s3 = inlined_call_operand.vmem [shape: bf16[16,128], index: 3, kind: output, shape index: {}]
  %s4 = sld [smem:[#allocation0]]
  $region22: #{_lambda_.9} parent=0
    _
  %s6 = ssub.s32 1, %s4
  %s7 = scalar_select 0, %s6, %s4
  // Predicated region
  $region2: #{_lambda_.9} parent=0 // pred_check
    _
  $region3: #{_lambda_.9} parent=0 // pred_check_branch
    %9 = sbr.rel (0) target = $region5
  $region4: #{_lambda_.9} parent=0 // pred_region
    _
  $region5: #{_lambda_.9} parent=0 // pred_fallthru
    _
  // Predicated region
  $region6: #{_lambda_.9} parent=0 // pred_check
    _
  $region7: #{_lambda_.9} parent=0 // pred_check_branch
    %11 = sbr.rel (0) target = $region9
  $region8: #{_lambda_.9} parent=0 // pred_region
    _
  $region9: #{_lambda_.9} parent=0 // pred_fallthru
    _
  // Predicated region
  $region10: #{_lambda_.9} parent=0 // pred_check
    _
  $region11: #{_lambda_.9} parent=0 // pred_check_branch
    %13 = sbr.rel (0) target = $region13
  $region12: #{_lambda_.9} parent=0 // pred_region
    _
  $region13: #{_lambda_.9} parent=0 // pred_fallthru
    _
  %v15 = vld [vmem:[%s0] sm:$0xff]
  %v16 = vld [vmem:[%s0 + $0x8] sm:$0xff]
  %v17 = vld [vmem:[%s0 + $0x10] sm:$0xff]
  %v18 = vld [vmem:[%s0 + $0x18] sm:$0xff]
  %v19 = vld [vmem:[%s0 + $0x20] sm:$0xff]
  %v20 = vld [vmem:[%s0 + $0x28] sm:$0xff]
  %v21 = vld [vmem:[%s0 + $0x30] sm:$0xff]
  %v22 = vld [vmem:[%s0 + $0x38] sm:$0xff]
  %v23 = vld [vmem:[%s1] sm:$0xf]
  %v24 = vld [vmem:[%s1 + $0x4] sm:$0xf]
  %v25 = vld [vmem:[%s1 + $0x8] sm:$0xf]
  %v26 = vld [vmem:[%s1 + $0xc] sm:$0xf]
  %v27 = vld [vmem:[%s1 + $0x10] sm:$0xf]
  %v28 = vld [vmem:[%s1 + $0x14] sm:$0xf]
  %v29 = vld [vmem:[%s1 + $0x18] sm:$0xf]
  %v30 = vld [vmem:[%s1 + $0x1c] sm:$0xf]
  %v31 = vld [vmem:[%s1 + $0x20] sm:$0xf]
  %v32 = vld [vmem:[%s1 + $0x24] sm:$0xf]
  %v33 = vld [vmem:[%s1 + $0x28] sm:$0xf]
  %v34 = vld [vmem:[%s1 + $0x2c] sm:$0xf]
  %v35 = vld [vmem:[%s1 + $0x30] sm:$0xf]
  %v36 = vld [vmem:[%s1 + $0x34] sm:$0xf]
  %v37 = vld [vmem:[%s1 + $0x38] sm:$0xf]
  %v38 = vld [vmem:[%s1 + $0x3c] sm:$0xf]
  %v39 = vld [vmem:[%s1 + $0x40] sm:$0xf]
  %v40 = vld [vmem:[%s1 + $0x44] sm:$0xf]
  %v41 = vld [vmem:[%s1 + $0x48] sm:$0xf]
  %v42 = vld [vmem:[%s1 + $0x4c] sm:$0xf]
  %v43 = vld [vmem:[%s1 + $0x50] sm:$0xf]
  %v44 = vld [vmem:[%s1 + $0x54] sm:$0xf]
  %v45 = vld [vmem:[%s1 + $0x58] sm:$0xf]
  %v46 = vld [vmem:[%s1 + $0x5c] sm:$0xf]
  %v47 = vld [vmem:[%s1 + $0x60] sm:$0xf]
  %v48 = vld [vmem:[%s1 + $0x64] sm:$0xf]
  %v49 = vld [vmem:[%s1 + $0x68] sm:$0xf]
  %v50 = vld [vmem:[%s1 + $0x6c] sm:$0xf]
  %v51 = vld [vmem:[%s1 + $0x70] sm:$0xf]
  %v52 = vld [vmem:[%s1 + $0x74] sm:$0xf]
  %v53 = vld [vmem:[%s1 + $0x78] sm:$0xf]
  %v54 = vld [vmem:[%s1 + $0x7c] sm:$0xf]
  %v55 = vld [vmem:[%s1 + $0x80] sm:$0xf]
  %v56 = vld [vmem:[%s1 + $0x84] sm:$0xf]
  %v57 = vld [vmem:[%s1 + $0x88] sm:$0xf]
  %v58 = vld [vmem:[%s1 + $0x8c] sm:$0xf]
  %v59 = vld [vmem:[%s1 + $0x90] sm:$0xf]
  %v60 = vld [vmem:[%s1 + $0x94] sm:$0xf]
  %v61 = vld [vmem:[%s1 + $0x98] sm:$0xf]
  %v62 = vld [vmem:[%s1 + $0x9c] sm:$0xf]
  %v63 = vld [vmem:[%s1 + $0xa0] sm:$0xf]
  %v64 = vld [vmem:[%s1 + $0xa4] sm:$0xf]
  %v65 = vld [vmem:[%s1 + $0xa8] sm:$0xf]
  %v66 = vld [vmem:[%s1 + $0xac] sm:$0xf]
  %v67 = vld [vmem:[%s1 + $0xb0] sm:$0xf]
  %v68 = vld [vmem:[%s1 + $0xb4] sm:$0xf]
  %v69 = vld [vmem:[%s1 + $0xb8] sm:$0xf]
  %v70 = vld [vmem:[%s1 + $0xbc] sm:$0xf]
  %v71 = vld [vmem:[%s1 + $0xc0] sm:$0xf]
  %v72 = vld [vmem:[%s1 + $0xc4] sm:$0xf]
  %v73 = vld [vmem:[%s1 + $0xc8] sm:$0xf]
  %v74 = vld [vmem:[%s1 + $0xcc] sm:$0xf]
  %v75 = vld [vmem:[%s1 + $0xd0] sm:$0xf]
  %v76 = vld [vmem:[%s1 + $0xd4] sm:$0xf]
  %v77 = vld [vmem:[%s1 + $0xd8] sm:$0xf]
  %v78 = vld [vmem:[%s1 + $0xdc] sm:$0xf]
  %v79 = vld [vmem:[%s1 + $0xe0] sm:$0xf]
  %v80 = vld [vmem:[%s1 + $0xe4] sm:$0xf]
  %v81 = vld [vmem:[%s1 + $0xe8] sm:$0xf]
  %v82 = vld [vmem:[%s1 + $0xec] sm:$0xf]
  %v83 = vld [vmem:[%s1 + $0xf0] sm:$0xf]
  %v84 = vld [vmem:[%s1 + $0xf4] sm:$0xf]
  %v85 = vld [vmem:[%s1 + $0xf8] sm:$0xf]
  %v86 = vld [vmem:[%s1 + $0xfc] sm:$0xf]
  %v87 = vld [vmem:[%s1 + $0x100] sm:$0xf]
  %v88 = vld [vmem:[%s1 + $0x104] sm:$0xf]
  %v89 = vld [vmem:[%s1 + $0x108] sm:$0xf]
  %v90 = vld [vmem:[%s1 + $0x10c] sm:$0xf]
  %v91 = vld [vmem:[%s1 + $0x110] sm:$0xf]
  %v92 = vld [vmem:[%s1 + $0x114] sm:$0xf]
  %v93 = vld [vmem:[%s1 + $0x118] sm:$0xf]
  %v94 = vld [vmem:[%s1 + $0x11c] sm:$0xf]
  %v95 = vld [vmem:[%s1 + $0x120] sm:$0xf]
  %v96 = vld [vmem:[%s1 + $0x124] sm:$0xf]
  %v97 = vld [vmem:[%s1 + $0x128] sm:$0xf]
  %v98 = vld [vmem:[%s1 + $0x12c] sm:$0xf]
  %v99 = vld [vmem:[%s1 + $0x130] sm:$0xf]
  %v100 = vld [vmem:[%s1 + $0x134] sm:$0xf]
  %v101 = vld [vmem:[%s1 + $0x138] sm:$0xf]
  %v102 = vld [vmem:[%s1 + $0x13c] sm:$0xf]
  %v103 = vld [vmem:[%s1 + $0x140] sm:$0xf]
  %v104 = vld [vmem:[%s1 + $0x144] sm:$0xf]
  %v105 = vld [vmem:[%s1 + $0x148] sm:$0xf]
  %v106 = vld [vmem:[%s1 + $0x14c] sm:$0xf]
  %v107 = vld [vmem:[%s1 + $0x150] sm:$0xf]
  %v108 = vld [vmem:[%s1 + $0x154] sm:$0xf]
  %v109 = vld [vmem:[%s1 + $0x158] sm:$0xf]
  %v110 = vld [vmem:[%s1 + $0x15c] sm:$0xf]
  %v111 = vld [vmem:[%s1 + $0x160] sm:$0xf]
  %v112 = vld [vmem:[%s1 + $0x164] sm:$0xf]
  %v113 = vld [vmem:[%s1 + $0x168] sm:$0xf]
  %v114 = vld [vmem:[%s1 + $0x16c] sm:$0xf]
  %v115 = vld [vmem:[%s1 + $0x170] sm:$0xf]
  %v116 = vld [vmem:[%s1 + $0x174] sm:$0xf]
  %v117 = vld [vmem:[%s1 + $0x178] sm:$0xf]
  %v118 = vld [vmem:[%s1 + $0x17c] sm:$0xf]
  %v119 = vld [vmem:[%s1 + $0x180] sm:$0xf]
  %v120 = vld [vmem:[%s1 + $0x184] sm:$0xf]
  %v121 = vld [vmem:[%s1 + $0x188] sm:$0xf]
  %v122 = vld [vmem:[%s1 + $0x18c] sm:$0xf]
  %v123 = vld [vmem:[%s1 + $0x190] sm:$0xf]
  %v124 = vld [vmem:[%s1 + $0x194] sm:$0xf]
  %v125 = vld [vmem:[%s1 + $0x198] sm:$0xf]
  %v126 = vld [vmem:[%s1 + $0x19c] sm:$0xf]
  %v127 = vld [vmem:[%s1 + $0x1a0] sm:$0xf]
  %v128 = vld [vmem:[%s1 + $0x1a4] sm:$0xf]
  %v129 = vld [vmem:[%s1 + $0x1a8] sm:$0xf]
  %v130 = vld [vmem:[%s1 + $0x1ac] sm:$0xf]
  %v131 = vld [vmem:[%s1 + $0x1b0] sm:$0xf]
  %v132 = vld [vmem:[%s1 + $0x1b4] sm:$0xf]
  %v133 = vld [vmem:[%s1 + $0x1b8] sm:$0xf]
  %v134 = vld [vmem:[%s1 + $0x1bc] sm:$0xf]
  %v135 = vld [vmem:[%s1 + $0x1c0] sm:$0xf]
  %v136 = vld [vmem:[%s1 + $0x1c4] sm:$0xf]
  %v137 = vld [vmem:[%s1 + $0x1c8] sm:$0xf]
  %v138 = vld [vmem:[%s1 + $0x1cc] sm:$0xf]
  %v139 = vld [vmem:[%s1 + $0x1d0] sm:$0xf]
  %v140 = vld [vmem:[%s1 + $0x1d4] sm:$0xf]
  %v141 = vld [vmem:[%s1 + $0x1d8] sm:$0xf]
  %v142 = vld [vmem:[%s1 + $0x1dc] sm:$0xf]
  %v143 = vld [vmem:[%s1 + $0x1e0] sm:$0xf]
  %v144 = vld [vmem:[%s1 + $0x1e4] sm:$0xf]
  %v145 = vld [vmem:[%s1 + $0x1e8] sm:$0xf]
  %v146 = vld [vmem:[%s1 + $0x1ec] sm:$0xf]
  %v147 = vld [vmem:[%s1 + $0x1f0] sm:$0xf]
  %v148 = vld [vmem:[%s1 + $0x1f4] sm:$0xf]
  %v149 = vld [vmem:[%s1 + $0x1f8] sm:$0xf]
  %v150 = vld [vmem:[%s1 + $0x1fc] sm:$0xf]
  %v151 = vld [vmem:[%s2] sm:$0x1]
  %v153 = vlaneseq
  %v154 = vshrl.u32 %v153, 7
  %v155 = vsub.s32 0, %v154
  %v156 = vrot.slane %v151, %v155
  %v166 = vunpack.c.l.b16 %v15
  %v167 = vunpack.c.h.b16 %v15
  %v168 = vunpack.c.l.b16 %v16
  %v169 = vunpack.c.h.b16 %v16
  %v170 = vunpack.c.l.b16 %v17
  %v171 = vunpack.c.h.b16 %v17
  %v172 = vunpack.c.l.b16 %v18
  %v173 = vunpack.c.h.b16 %v18
  %v174 = vunpack.c.l.b16 %v19
  %v175 = vunpack.c.h.b16 %v19
  %v176 = vunpack.c.l.b16 %v20
  %v177 = vunpack.c.h.b16 %v20
  %v178 = vunpack.c.l.b16 %v21
  %v179 = vunpack.c.h.b16 %v21
  %v180 = vunpack.c.l.b16 %v22
  %v181 = vunpack.c.h.b16 %v22
  %v182 = vpack.c.b16 %v174, %v166
  %v183 = vpack.c.b16 %v175, %v167
  %v184 = vpack.c.b16 %v176, %v168
  %v185 = vpack.c.b16 %v177, %v169
  %v186 = vpack.c.b16 %v178, %v170
  %v187 = vpack.c.b16 %v179, %v171
  %v188 = vpack.c.b16 %v180, %v172
  %v189 = vpack.c.b16 %v181, %v173
  %v326 = vunpack.c.l.b16 %v23
  %v327 = vunpack.c.l.b16 %v24
  %v328 = vunpack.c.l.b16 %v25
  %v329 = vunpack.c.l.b16 %v26
  %v330 = vunpack.c.l.b16 %v27
  %v331 = vunpack.c.l.b16 %v28
  %v332 = vunpack.c.l.b16 %v29
  %v333 = vunpack.c.l.b16 %v30
  %v334 = vunpack.c.l.b16 %v31
  %v335 = vunpack.c.l.b16 %v32
  %v336 = vunpack.c.l.b16 %v33
  %v337 = vunpack.c.l.b16 %v34
  %v338 = vunpack.c.l.b16 %v35
  %v339 = vunpack.c.l.b16 %v36
  %v340 = vunpack.c.l.b16 %v37
  %v341 = vunpack.c.l.b16 %v38
  %v342 = vunpack.c.l.b16 %v39
  %v343 = vunpack.c.l.b16 %v40
  %v344 = vunpack.c.l.b16 %v41
  %v345 = vunpack.c.l.b16 %v42
  %v346 = vunpack.c.l.b16 %v43
  %v347 = vunpack.c.l.b16 %v44
  %v348 = vunpack.c.l.b16 %v45
  %v349 = vunpack.c.l.b16 %v46
  %v350 = vunpack.c.l.b16 %v47
  %v351 = vunpack.c.l.b16 %v48
  %v352 = vunpack.c.l.b16 %v49
  %v353 = vunpack.c.l.b16 %v50
  %v354 = vunpack.c.l.b16 %v51
  %v355 = vunpack.c.l.b16 %v52
  %v356 = vunpack.c.l.b16 %v53
  %v357 = vunpack.c.l.b16 %v54
  %v358 = vunpack.c.l.b16 %v55
  %v359 = vunpack.c.l.b16 %v56
  %v360 = vunpack.c.l.b16 %v57
  %v361 = vunpack.c.l.b16 %v58
  %v362 = vunpack.c.l.b16 %v59
  %v363 = vunpack.c.l.b16 %v60
  %v364 = vunpack.c.l.b16 %v61
  %v365 = vunpack.c.l.b16 %v62
  %v366 = vunpack.c.l.b16 %v63
  %v367 = vunpack.c.l.b16 %v64
  %v368 = vunpack.c.l.b16 %v65
  %v369 = vunpack.c.l.b16 %v66
  %v370 = vunpack.c.l.b16 %v67
  %v371 = vunpack.c.l.b16 %v68
  %v372 = vunpack.c.l.b16 %v69
  %v373 = vunpack.c.l.b16 %v70
  %v374 = vunpack.c.l.b16 %v71
  %v375 = vunpack.c.l.b16 %v72
  %v376 = vunpack.c.l.b16 %v73
  %v377 = vunpack.c.l.b16 %v74
  %v378 = vunpack.c.l.b16 %v75
  %v379 = vunpack.c.l.b16 %v76
  %v380 = vunpack.c.l.b16 %v77
  %v381 = vunpack.c.l.b16 %v78
  %v382 = vunpack.c.l.b16 %v79
  %v383 = vunpack.c.l.b16 %v80
  %v384 = vunpack.c.l.b16 %v81
  %v385 = vunpack.c.l.b16 %v82
  %v386 = vunpack.c.l.b16 %v83
  %v387 = vunpack.c.l.b16 %v84
  %v388 = vunpack.c.l.b16 %v85
  %v389 = vunpack.c.l.b16 %v86
  %v390 = vunpack.c.l.b16 %v87
  %v391 = vunpack.c.l.b16 %v88
  %v392 = vunpack.c.l.b16 %v89
  %v393 = vunpack.c.l.b16 %v90
  %v394 = vunpack.c.l.b16 %v91
  %v395 = vunpack.c.l.b16 %v92
  %v396 = vunpack.c.l.b16 %v93
  %v397 = vunpack.c.l.b16 %v94
  %v398 = vunpack.c.l.b16 %v95
  %v399 = vunpack.c.l.b16 %v96
  %v400 = vunpack.c.l.b16 %v97
  %v401 = vunpack.c.l.b16 %v98
  %v402 = vunpack.c.l.b16 %v99
  %v403 = vunpack.c.l.b16 %v100
  %v404 = vunpack.c.l.b16 %v101
  %v405 = vunpack.c.l.b16 %v102
  %v406 = vunpack.c.l.b16 %v103
  %v407 = vunpack.c.l.b16 %v104
  %v408 = vunpack.c.l.b16 %v105
  %v409 = vunpack.c.l.b16 %v106
  %v410 = vunpack.c.l.b16 %v107
  %v411 = vunpack.c.l.b16 %v108
  %v412 = vunpack.c.l.b16 %v109
  %v413 = vunpack.c.l.b16 %v110
  %v414 = vunpack.c.l.b16 %v111
  %v415 = vunpack.c.l.b16 %v112
  %v416 = vunpack.c.l.b16 %v113
  %v417 = vunpack.c.l.b16 %v114
  %v418 = vunpack.c.l.b16 %v115
  %v419 = vunpack.c.l.b16 %v116
  %v420 = vunpack.c.l.b16 %v117
  %v421 = vunpack.c.l.b16 %v118
  %v422 = vunpack.c.l.b16 %v119
  %v423 = vunpack.c.l.b16 %v120
  %v424 = vunpack.c.l.b16 %v121
  %v425 = vunpack.c.l.b16 %v122
  %v426 = vunpack.c.l.b16 %v123
  %v427 = vunpack.c.l.b16 %v124
  %v428 = vunpack.c.l.b16 %v125
  %v429 = vunpack.c.l.b16 %v126
  %v430 = vunpack.c.l.b16 %v127
  %v431 = vunpack.c.l.b16 %v128
  %v432 = vunpack.c.l.b16 %v129
  %v433 = vunpack.c.l.b16 %v130
  %v434 = vunpack.c.l.b16 %v131
  %v435 = vunpack.c.l.b16 %v132
  %v436 = vunpack.c.l.b16 %v133
  %v437 = vunpack.c.l.b16 %v134
  %v438 = vunpack.c.l.b16 %v135
  %v439 = vunpack.c.l.b16 %v136
  %v440 = vunpack.c.l.b16 %v137
  %v441 = vunpack.c.l.b16 %v138
  %v442 = vunpack.c.l.b16 %v139
  %v443 = vunpack.c.l.b16 %v140
  %v444 = vunpack.c.l.b16 %v141
  %v445 = vunpack.c.l.b16 %v142
  %v446 = vunpack.c.l.b16 %v143
  %v447 = vunpack.c.l.b16 %v144
  %v448 = vunpack.c.l.b16 %v145
  %v449 = vunpack.c.l.b16 %v146
  %v450 = vunpack.c.l.b16 %v147
  %v451 = vunpack.c.l.b16 %v148
  %v452 = vunpack.c.l.b16 %v149
  %v453 = vunpack.c.l.b16 %v150
  %v454 = vpack.c.b16 %v327, %v326
  %v455 = vpack.c.b16 %v329, %v328
  %v456 = vpack.c.b16 %v331, %v330
  %v457 = vpack.c.b16 %v333, %v332
  %v458 = vpack.c.b16 %v335, %v334
  %v459 = vpack.c.b16 %v337, %v336
  %v460 = vpack.c.b16 %v339, %v338
  %v461 = vpack.c.b16 %v341, %v340
  %v462 = vpack.c.b16 %v343, %v342
  %v463 = vpack.c.b16 %v345, %v344
  %v464 = vpack.c.b16 %v347, %v346
  %v465 = vpack.c.b16 %v349, %v348
  %v466 = vpack.c.b16 %v351, %v350
  %v467 = vpack.c.b16 %v353, %v352
  %v468 = vpack.c.b16 %v355, %v354
  %v469 = vpack.c.b16 %v357, %v356
  %v470 = vpack.c.b16 %v359, %v358
  %v471 = vpack.c.b16 %v361, %v360
  %v472 = vpack.c.b16 %v363, %v362
  %v473 = vpack.c.b16 %v365, %v364
  %v474 = vpack.c.b16 %v367, %v366
  %v475 = vpack.c.b16 %v369, %v368
  %v476 = vpack.c.b16 %v371, %v370
  %v477 = vpack.c.b16 %v373, %v372
  %v478 = vpack.c.b16 %v375, %v374
  %v479 = vpack.c.b16 %v377, %v376
  %v480 = vpack.c.b16 %v379, %v378
  %v481 = vpack.c.b16 %v381, %v380
  %v482 = vpack.c.b16 %v383, %v382
  %v483 = vpack.c.b16 %v385, %v384
  %v484 = vpack.c.b16 %v387, %v386
  %v485 = vpack.c.b16 %v389, %v388
  %v486 = vpack.c.b16 %v391, %v390
  %v487 = vpack.c.b16 %v393, %v392
  %v488 = vpack.c.b16 %v395, %v394
  %v489 = vpack.c.b16 %v397, %v396
  %v490 = vpack.c.b16 %v399, %v398
  %v491 = vpack.c.b16 %v401, %v400
  %v492 = vpack.c.b16 %v403, %v402
  %v493 = vpack.c.b16 %v405, %v404
  %v494 = vpack.c.b16 %v407, %v406
  %v495 = vpack.c.b16 %v409, %v408
  %v496 = vpack.c.b16 %v411, %v410
  %v497 = vpack.c.b16 %v413, %v412
  %v498 = vpack.c.b16 %v415, %v414
  %v499 = vpack.c.b16 %v417, %v416
  %v500 = vpack.c.b16 %v419, %v418
  %v501 = vpack.c.b16 %v421, %v420
  %v502 = vpack.c.b16 %v423, %v422
  %v503 = vpack.c.b16 %v425, %v424
  %v504 = vpack.c.b16 %v427, %v426
  %v505 = vpack.c.b16 %v429, %v428
  %v506 = vpack.c.b16 %v431, %v430
  %v507 = vpack.c.b16 %v433, %v432
  %v508 = vpack.c.b16 %v435, %v434
  %v509 = vpack.c.b16 %v437, %v436
  %v510 = vpack.c.b16 %v439, %v438
  %v511 = vpack.c.b16 %v441, %v440
  %v512 = vpack.c.b16 %v443, %v442
  %v513 = vpack.c.b16 %v445, %v444
  %v514 = vpack.c.b16 %v447, %v446
  %v515 = vpack.c.b16 %v449, %v448
  %v516 = vpack.c.b16 %v451, %v450
  %v517 = vpack.c.b16 %v453, %v452
  %582 = vmatprep.subr.bf16.mxu0 0
  %583 = vmatpush1.bf16.msra.mxu0 %v454
  %584 = vmatprep.subr.bf16.mxu0 0
  %585 = vmatpush1.bf16.msra.mxu0 %v455
  %586 = vmatprep.subr.bf16.mxu0 0
  %587 = vmatpush1.bf16.msra.mxu0 %v456
  %588 = vmatprep.subr.bf16.mxu0 0
  %589 = vmatpush1.bf16.msra.mxu0 %v457
  %590 = vmatprep.subr.bf16.mxu0 0
  %591 = vmatpush1.bf16.msra.mxu0 %v458
  %592 = vmatprep.subr.bf16.mxu0 0
  %593 = vmatpush1.bf16.msra.mxu0 %v459
  %594 = vmatprep.subr.bf16.mxu0 0
  %595 = vmatpush1.bf16.msra.mxu0 %v460
  %596 = vmatprep.subr.bf16.mxu0 0
  %597 = vmatpush1.bf16.msra.mxu0 %v461
  %598 = vmatprep.subr.bf16.mxu0 0
  %599 = vmatpush1.bf16.msra.mxu0 %v462
  %600 = vmatprep.subr.bf16.mxu0 0
  %601 = vmatpush1.bf16.msra.mxu0 %v463
  %602 = vmatprep.subr.bf16.mxu0 0
  %603 = vmatpush1.bf16.msra.mxu0 %v464
  %604 = vmatprep.subr.bf16.mxu0 0
  %605 = vmatpush1.bf16.msra.mxu0 %v465
  %606 = vmatprep.subr.bf16.mxu0 0
  %607 = vmatpush1.bf16.msra.mxu0 %v466
  %608 = vmatprep.subr.bf16.mxu0 0
  %609 = vmatpush1.bf16.msra.mxu0 %v467
  %610 = vmatprep.subr.bf16.mxu0 0
  %611 = vmatpush1.bf16.msra.mxu0 %v468
  %612 = vmatprep.subr.bf16.mxu0 0
  %613 = vmatpush1.bf16.msra.mxu0 %v469
  %614 = vmatprep.mubr.bf16.mxu0 %v183
  %615 = vmatmul.mubr.bf16.gmra.mrb[0].mxu0 %v182
  %v616 = vpop.f32.mrb[0].mxu0
  %v617 = vadd.f32 %v156, %v616
  %v618 = vpop.f32.mrb[0].mxu0
  %v619 = vpop.f32.mrb[0].mxu0
  %v620 = vadd.f32 %v156, %v619
  %v621 = vpop.f32.mrb[0].mxu0
  %622 = vdwg.mxu0
  %623 = vmatprep.subr.bf16.mxu0 0
  %624 = vmatpush1.bf16.msra.mxu0 %v470
  %625 = vmatprep.subr.bf16.mxu0 0
  %626 = vmatpush1.bf16.msra.mxu0 %v471
  %627 = vmatprep.subr.bf16.mxu0 0
  %628 = vmatpush1.bf16.msra.mxu0 %v472
  %629 = vmatprep.subr.bf16.mxu0 0
  %630 = vmatpush1.bf16.msra.mxu0 %v473
  %631 = vmatprep.subr.bf16.mxu0 0
  %632 = vmatpush1.bf16.msra.mxu0 %v474
  %633 = vmatprep.subr.bf16.mxu0 0
  %634 = vmatpush1.bf16.msra.mxu0 %v475
  %635 = vmatprep.subr.bf16.mxu0 0
  %636 = vmatpush1.bf16.msra.mxu0 %v476
  %637 = vmatprep.subr.bf16.mxu0 0
  %638 = vmatpush1.bf16.msra.mxu0 %v477
  %639 = vmatprep.subr.bf16.mxu0 0
  %640 = vmatpush1.bf16.msra.mxu0 %v478
  %641 = vmatprep.subr.bf16.mxu0 0
  %642 = vmatpush1.bf16.msra.mxu0 %v479
  %643 = vmatprep.subr.bf16.mxu0 0
  %644 = vmatpush1.bf16.msra.mxu0 %v480
  %645 = vmatprep.subr.bf16.mxu0 0
  %646 = vmatpush1.bf16.msra.mxu0 %v481
  %647 = vmatprep.subr.bf16.mxu0 0
  %648 = vmatpush1.bf16.msra.mxu0 %v482
  %649 = vmatprep.subr.bf16.mxu0 0
  %650 = vmatpush1.bf16.msra.mxu0 %v483
  %651 = vmatprep.subr.bf16.mxu0 0
  %652 = vmatpush1.bf16.msra.mxu0 %v484
  %653 = vmatprep.subr.bf16.mxu0 0
  %654 = vmatpush1.bf16.msra.mxu0 %v485
  %655 = vmatprep.mubr.bf16.mxu0 %v185
  %656 = vmatmul.mubr.bf16.gmra.mrb[0].mxu0 %v184
  %v657 = vpop.f32.mrb[0].mxu0
  %v658 = vadd.f32 %v617, %v657
  %v659 = vpop.f32.mrb[0].mxu0
  %v660 = vpop.f32.mrb[0].mxu0
  %v661 = vadd.f32 %v620, %v660
  %v662 = vpop.f32.mrb[0].mxu0
  %663 = vdwg.mxu0
  %664 = vmatprep.subr.bf16.mxu0 0
  %665 = vmatpush1.bf16.msra.mxu0 %v486
  %666 = vmatprep.subr.bf16.mxu0 0
  %667 = vmatpush1.bf16.msra.mxu0 %v487
  %668 = vmatprep.subr.bf16.mxu0 0
  %669 = vmatpush1.bf16.msra.mxu0 %v488
  %670 = vmatprep.subr.bf16.mxu0 0
  %671 = vmatpush1.bf16.msra.mxu0 %v489
  %672 = vmatprep.subr.bf16.mxu0 0
  %673 = vmatpush1.bf16.msra.mxu0 %v490
  %674 = vmatprep.subr.bf16.mxu0 0
  %675 = vmatpush1.bf16.msra.mxu0 %v491
  %676 = vmatprep.subr.bf16.mxu0 0
  %677 = vmatpush1.bf16.msra.mxu0 %v492
  %678 = vmatprep.subr.bf16.mxu0 0
  %679 = vmatpush1.bf16.msra.mxu0 %v493
  %680 = vmatprep.subr.bf16.mxu0 0
  %681 = vmatpush1.bf16.msra.mxu0 %v494
  %682 = vmatprep.subr.bf16.mxu0 0
  %683 = vmatpush1.bf16.msra.mxu0 %v495
  %684 = vmatprep.subr.bf16.mxu0 0
  %685 = vmatpush1.bf16.msra.mxu0 %v496
  %686 = vmatprep.subr.bf16.mxu0 0
  %687 = vmatpush1.bf16.msra.mxu0 %v497
  %688 = vmatprep.subr.bf16.mxu0 0
  %689 = vmatpush1.bf16.msra.mxu0 %v498
  %690 = vmatprep.subr.bf16.mxu0 0
  %691 = vmatpush1.bf16.msra.mxu0 %v499
  %692 = vmatprep.subr.bf16.mxu0 0
  %693 = vmatpush1.bf16.msra.mxu0 %v500
  %694 = vmatprep.subr.bf16.mxu0 0
  %695 = vmatpush1.bf16.msra.mxu0 %v501
  %696 = vmatprep.mubr.bf16.mxu0 %v187
  %697 = vmatmul.mubr.bf16.gmra.mrb[0].mxu0 %v186
  %v698 = vpop.f32.mrb[0].mxu0
  %v699 = vadd.f32 %v658, %v698
  %v700 = vpop.f32.mrb[0].mxu0
  %v701 = vpop.f32.mrb[0].mxu0
  %v702 = vadd.f32 %v661, %v701
  %v703 = vpop.f32.mrb[0].mxu0
  %704 = vdwg.mxu0
  %705 = vmatprep.subr.bf16.mxu0 0
  %706 = vmatpush1.bf16.msra.mxu0 %v502
  %707 = vmatprep.subr.bf16.mxu0 0
  %708 = vmatpush1.bf16.msra.mxu0 %v503
  %709 = vmatprep.subr.bf16.mxu0 0
  %710 = vmatpush1.bf16.msra.mxu0 %v504
  %711 = vmatprep.subr.bf16.mxu0 0
  %712 = vmatpush1.bf16.msra.mxu0 %v505
  %713 = vmatprep.subr.bf16.mxu0 0
  %714 = vmatpush1.bf16.msra.mxu0 %v506
  %715 = vmatprep.subr.bf16.mxu0 0
  %716 = vmatpush1.bf16.msra.mxu0 %v507
  %717 = vmatprep.subr.bf16.mxu0 0
  %718 = vmatpush1.bf16.msra.mxu0 %v508
  %719 = vmatprep.subr.bf16.mxu0 0
  %720 = vmatpush1.bf16.msra.mxu0 %v509
  %721 = vmatprep.subr.bf16.mxu0 0
  %722 = vmatpush1.bf16.msra.mxu0 %v510
  %723 = vmatprep.subr.bf16.mxu0 0
  %724 = vmatpush1.bf16.msra.mxu0 %v511
  %725 = vmatprep.subr.bf16.mxu0 0
  %726 = vmatpush1.bf16.msra.mxu0 %v512
  %727 = vmatprep.subr.bf16.mxu0 0
  %728 = vmatpush1.bf16.msra.mxu0 %v513
  %729 = vmatprep.subr.bf16.mxu0 0
  %730 = vmatpush1.bf16.msra.mxu0 %v514
  %731 = vmatprep.subr.bf16.mxu0 0
  %732 = vmatpush1.bf16.msra.mxu0 %v515
  %733 = vmatprep.subr.bf16.mxu0 0
  %734 = vmatpush1.bf16.msra.mxu0 %v516
  %735 = vmatprep.subr.bf16.mxu0 0
  %736 = vmatpush1.bf16.msra.mxu0 %v517
  %737 = vmatprep.mubr.bf16.mxu0 %v189
  %738 = vmatmul.mubr.bf16.gmra.mrb[0].mxu0 %v188
  %v739 = vpop.f32.mrb[0].mxu0
  %v740 = vadd.f32 %v699, %v739
  %v741 = vpop.f32.mrb[0].mxu0
  %v742 = vpop.f32.mrb[0].mxu0
  %v743 = vadd.f32 %v702, %v742
  %v744 = vpop.f32.mrb[0].mxu0
  %745 = vdwg.mxu0
  %v746 = vxor.u32 %v740, 2147483648
  %v747 = vxor.u32 %v743, 2147483648
  %v748 = vmul.f32 %v746, 1.442695
  %v749 = vpow.pop %v748
  %v750 = vmul.f32 %v747, 1.442695
  %v751 = vpow.pop %v750
  %v752 = vadd.f32 %v749, 1.0
  %v753 = vadd.f32 %v751, 1.0
  %v754 = vrcp.pop %v752
  %v755 = vmul.f32 1.0, %v754
  %v756 = vrcp.pop %v753
  %v757 = vmul.f32 1.0, %v756
  %v758 = vpack.c.bf16 %v757, %v755
  %v760 = vunpack.c.l.b16 %v758
  %v761 = vunpack.c.h.b16 %v758
  %v762 = vpack.c.b16 %v760, %v760
  %v763 = vpack.c.b16 %v761, %v761
  %766 = vst [vmem:[%s3] sm:$0xf] %v762
  %767 = vst [vmem:[%s3 + $0x4] sm:$0xf] %v763
  // Predicated region
  $region14: #{_lambda_.9} parent=0 // pred_check
    _
  $region15: #{_lambda_.9} parent=0 // pred_check_branch
    %769 = sbr.rel (0) target = $region17
  $region16: #{_lambda_.9} parent=0 // pred_region
    _
  $region17: #{_lambda_.9} parent=0 // pred_fallthru
    _
  // Predicated region
  $region18: #{_lambda_.9} parent=0 // pred_check
    _
  $region19: #{_lambda_.9} parent=0 // pred_check_branch
    %771 = sbr.rel (0) target = $region21
  $region20: #{_lambda_.9} parent=0 // pred_region
    _
  $region21: #{_lambda_.9} parent=0 // pred_fallthru
    _

</llo_original>
